<compile_context>
chip_gen: v7x
topology: tpu7x:2x2x1
jax: 0.10.0
libtpu: 0.0.40
codegen_flags: <defaults>
</compile_context>

<pallas_src>
import functools

import jax
import jax.numpy as jnp
import numpy as np
from jax.experimental import pallas as pl
from jax.experimental.pallas import tpu as pltpu

IN_PLANES = 2048
NUM_CLASS = 2
NUM_CLASS3 = 3
PROJ_HID = 512
PROJ_OUT = 128
BN_EPS = 1e-5

# fused [projector-L1 | classifier | classifier_3] width: 512 + 2 + 3 = 517,
# lane-padded to 640 so the fused matmul output stays 128-lane aligned.
FUSED_W = 640
SCORES_W = 8          # small fused output: [score(2) | score_0(3) | pad(3)]


def _bn1d_train(h, gamma, beta):
    # PyTorch BatchNorm1d, training mode: biased batch variance over the batch axis.
    mu = jnp.mean(h, axis=0, keepdims=True)
    var = jnp.mean((h - mu) ** 2, axis=0, keepdims=True)
    return (h - mu) * jax.lax.rsqrt(var + BN_EPS) * gamma + beta


def ssl_ccl_head_kernel(
    x_ref,                       # (B, S_t, C)  one S-tile of one view's feature map
    wf_ref, bf_ref,              # fused [wp1 | wc | wc3]: (C, 640), (1, 640)
    gp_ref, btp_ref,             # projector BN: (1, 512), (1, 512)
    wp2_ref, bp2_ref,            # projector L2: (512, 128), (1, 128)
    wq1_ref, bq1_ref,            # predictor L1: (128, 512), (1, 512)
    gq_ref, btq_ref,             # predictor BN: (1, 512), (1, 512)
    wq2_ref, bq2_ref,            # predictor L2: (512, 128), (1, 128)
    scores_ref,                  # out (B, 8)   [score | score_0 | pad]
    pred_ref,                    # out (B, 128) feat_pred
    acc_ref,                     # scratch VMEM (B, C) f32 GAP accumulator
    *, inv_s,
):
    s = pl.program_id(1)
    n_s = pl.num_programs(1)
    B, S_t, C = x_ref.shape

    @pl.when(s == 0)
    def _():
        acc_ref[...] = jnp.zeros_like(acc_ref)

    # --- GAP partial sums, accumulated in f32. Chunk over sublane-aligned S
    #     slices when the tile is big so live vregs stay small (cast each chunk
    #     to f32 before reducing; v5e has no bf16 VPU).
    if S_t % 8 == 0 and S_t > 8:
        def body(i, acc):
            off = pl.multiple_of(i * 8, 8)
            blk = x_ref[:, pl.ds(off, 8), :].astype(jnp.float32)
            return acc + jnp.sum(blk, axis=1)
        acc_ref[...] += jax.lax.fori_loop(
            0, S_t // 8, body, jnp.zeros((B, C), jnp.float32))
    else:
        acc_ref[...] += jnp.sum(x_ref[...].astype(jnp.float32), axis=1)

    # --- heads: only on the last S-tile of this view ---
    @pl.when(s == n_s - 1)
    def _():
        feat = acc_ref[...] * inv_s                                   # (B, C) f32

        # one MXU pass for projector-L1 + classifier + classifier_3
        h_all = (jnp.dot(feat, wf_ref[...], preferred_element_type=jnp.float32)
                 + bf_ref[...])                                       # (B, 640)
        scores_ref[...] = h_all[:, PROJ_HID:PROJ_HID + SCORES_W]
        h = h_all[:, :PROJ_HID]

        # projector: BN1d(train, full per-view batch) -> ReLU -> Linear
        h = _bn1d_train(h, gp_ref[...], btp_ref[...])
        h = jnp.maximum(h, 0.0)
        z = jnp.dot(h, wp2_ref[...], preferred_element_type=jnp.float32) + bp2_ref[...]

        # predictor: Linear -> BN1d(train) -> ReLU -> Linear
        g = jnp.dot(z, wq1_ref[...], preferred_element_type=jnp.float32) + bq1_ref[...]
        g = _bn1d_train(g, gq_ref[...], btq_ref[...])
        g = jnp.maximum(g, 0.0)
        pred_ref[...] = (jnp.dot(g, wq2_ref[...], preferred_element_type=jnp.float32)
                         + bq2_ref[...])


def make_params(key):
    """Parameters matching the nn.Module shapes.  PyTorch Linear weights are
    (out, in); here they are stored pre-transposed as (in, out) so the kernel
    computes y = x @ W + b.  Biases / BN params are (1, out)."""
    ks = jax.random.split(key, 6)

    def lin(k, fan_in, fan_out):
        w = jax.random.normal(k, (fan_in, fan_out), jnp.float32) * (1.0 / np.sqrt(fan_in))
        b = jnp.full((1, fan_out), 0.01, jnp.float32)
        return w, b

    wc, bc = lin(ks[0], IN_PLANES, NUM_CLASS)
    wc3, bc3 = lin(ks[1], IN_PLANES, NUM_CLASS3)
    wp1, bp1 = lin(ks[2], IN_PLANES, PROJ_HID)
    wp2, bp2 = lin(ks[3], PROJ_HID, PROJ_OUT)
    wq1, bq1 = lin(ks[4], PROJ_OUT, PROJ_HID)
    wq2, bq2 = lin(ks[5], PROJ_HID, PROJ_OUT)
    gp = jnp.ones((1, PROJ_HID), jnp.float32)
    btp = jnp.zeros((1, PROJ_HID), jnp.float32)
    gq = jnp.ones((1, PROJ_HID), jnp.float32)
    btq = jnp.zeros((1, PROJ_HID), jnp.float32)
    return dict(wc=wc, bc=bc, wc3=wc3, bc3=bc3,
                wp1=wp1, bp1=bp1, gp=gp, btp=btp, wp2=wp2, bp2=bp2,
                wq1=wq1, bq1=bq1, gq=gq, btq=btq, wq2=wq2, bq2=bq2)


def fuse_params(p):
    """One-time packing of [wp1 | classifier | classifier_3] into a lane-padded weight."""
    wf = jnp.zeros((IN_PLANES, FUSED_W), jnp.float32)
    wf = wf.at[:, :PROJ_HID].set(p["wp1"])
    wf = wf.at[:, PROJ_HID:PROJ_HID + NUM_CLASS].set(p["wc"])
    wf = wf.at[:, PROJ_HID + NUM_CLASS:PROJ_HID + NUM_CLASS + NUM_CLASS3].set(p["wc3"])
    bf = jnp.zeros((1, FUSED_W), jnp.float32)
    bf = bf.at[:, :PROJ_HID].set(p["bp1"])
    bf = bf.at[:, PROJ_HID:PROJ_HID + NUM_CLASS].set(p["bc"])
    bf = bf.at[:, PROJ_HID + NUM_CLASS:PROJ_HID + NUM_CLASS + NUM_CLASS3].set(p["bc3"])
    return dict(w_fused=wf, b_fused=bf,
                gp=p["gp"], btp=p["btp"], wp2=p["wp2"], bp2=p["bp2"],
                wq1=p["wq1"], bq1=p["bq1"], gq=p["gq"], btq=p["btq"],
                wq2=p["wq2"], bq2=p["bq2"])


def _pick_s_tile(S, cap=128):
    if S <= cap:
        return S
    best = None
    for t in range(8, cap + 1, 8):
        if S % t == 0:
            best = t
    return best if best is not None else S


def ssl_ccl_forward(x_views, fused, *, s_tile=None):
    """Training-mode SSL_CCL.forward(x1, x2, return_fmap=False, flag=False) head pass.

    x_views: (2, B, S=H*W, C=2048) channels-last backbone feature maps for the
             two views, stacked on the leading axis (bf16 or f32).
    Returns (score_x1, score_0_x1, feat_pred_x1, score_x2, score_0_x2, feat_pred_x2).
    """
    V, B, S, C = x_views.shape
    assert V == 2 and C == IN_PLANES
    if s_tile is None:
        s_tile = _pick_s_tile(S)
    assert S % s_tile == 0, "s_tile must divide H*W"
    n_s = S // s_tile

    kernel = functools.partial(ssl_ccl_head_kernel, inv_s=1.0 / S)

    # x stream: tiled over (view, S); channels stay lane-dense.
    x_spec = pl.BlockSpec((None, B, s_tile, C), lambda v, s: (v, 0, s, 0))

    def w_spec(arr):
        # full-array block + constant index map -> DMAed once, resident for the grid.
        nd = arr.ndim

        def imap(v, s):
            return (0,) * nd

        return pl.BlockSpec(arr.shape, imap)

    weights = (fused["w_fused"], fused["b_fused"],
               fused["gp"], fused["btp"], fused["wp2"], fused["bp2"],
               fused["wq1"], fused["bq1"], fused["gq"], fused["btq"],
               fused["wq2"], fused["bq2"])

    grid_spec = pltpu.PrefetchScalarGridSpec(
        num_scalar_prefetch=0,
        grid=(V, n_s),
        in_specs=[x_spec] + [w_spec(w) for w in weights],
        out_specs=[
            pl.BlockSpec((None, B, SCORES_W), lambda v, s: (v, 0, 0)),
            pl.BlockSpec((None, B, PROJ_OUT), lambda v, s: (v, 0, 0)),
        ],
        scratch_shapes=[pltpu.VMEM((B, IN_PLANES), jnp.float32)],
    )

    scores, pred = pl.pallas_call(
        kernel,
        out_shape=(
            jax.ShapeDtypeStruct((V, B, SCORES_W), jnp.float32),
            jax.ShapeDtypeStruct((V, B, PROJ_OUT), jnp.float32),
        ),
        grid_spec=grid_spec,
        compiler_params=pltpu.CompilerParams(
            # view axis can shard across the two TCs on v7x; S axis is a reduction.
            dimension_semantics=("parallel", "arbitrary"),
            vmem_limit_bytes=48 * 1024 * 1024,   # fits v7x's 64 MiB physical VMEM
        ),
    )(x_views, *weights)

    score = scores[:, :, :NUM_CLASS]
    score3 = scores[:, :, NUM_CLASS:NUM_CLASS + NUM_CLASS3]
    return (score[0], score3[0], pred[0], score[1], score3[1], pred[1])


# ---------------- pure-JAX reference (correctness sanity check) ----------------
def _ref_forward(x_views, p):
    xs = x_views.astype(jnp.float32)
    feat = jnp.mean(xs, axis=2)          # (2, B, C)

    def heads(f):
        score = f @ p["wc"] + p["bc"]
        score3 = f @ p["wc3"] + p["bc3"]
        h = f @ p["wp1"] + p["bp1"]
        h = _bn1d_train(h, p["gp"], p["btp"])
        h = jnp.maximum(h, 0.0)
        z = h @ p["wp2"] + p["bp2"]
        g = z @ p["wq1"] + p["bq1"]
        g = _bn1d_train(g, p["gq"], p["btq"])
        g = jnp.maximum(g, 0.0)
        pred = g @ p["wq2"] + p["bq2"]
        return score, score3, pred

    s0, s03, p0 = heads(feat[0])
    s1, s13, p1 = heads(feat[1])
    return s0, s03, p0, s1, s13, p1


if __name__ == "__main__":
    key = jax.random.PRNGKey(0)
    kp, kx = jax.random.split(key)
    params = make_params(kp)
    fused = fuse_params(params)

    # Small synthetic backbone feature maps for the two views, already stacked and
    # channels-last: (V=2, B, S=Hf*Wf, C=2048), in bf16 (halves the dominant HBM stream).
    B, Hf, Wf = 2, 4, 4
    x_views = jax.random.normal(kx, (2, B, Hf * Wf, IN_PLANES), jnp.float32)
    x_views = x_views.astype(jnp.bfloat16)

    # s_tile=8 exercises the multi-step S grid + GAP accumulator (S=16 -> 2 steps).
    outs = ssl_ccl_forward(x_views, fused, s_tile=8)
    outs = jax.block_until_ready(outs)

    ref = _ref_forward(x_views, params)
    for got, want in zip(outs, ref):
        np.testing.assert_allclose(np.asarray(got), np.asarray(want),
                                   rtol=1e-3, atol=1e-3)

    print("KERNEL_OK")
</pallas_src>

<mosaic_0001>
module attributes {stable_mosaic.version = 11 : i64} {
  func.func @ssl_ccl_head_kernel(%arg0: i32, %arg1: i32, %arg2: memref<1x2x8x2048xbf16, #tpu.memory_space<vmem>>, %arg3: memref<2048x640xf32, #tpu.memory_space<vmem>>, %arg4: memref<1x640xf32, #tpu.memory_space<vmem>>, %arg5: memref<1x512xf32, #tpu.memory_space<vmem>>, %arg6: memref<1x512xf32, #tpu.memory_space<vmem>>, %arg7: memref<512x128xf32, #tpu.memory_space<vmem>>, %arg8: memref<1x128xf32, #tpu.memory_space<vmem>>, %arg9: memref<128x512xf32, #tpu.memory_space<vmem>>, %arg10: memref<1x512xf32, #tpu.memory_space<vmem>>, %arg11: memref<1x512xf32, #tpu.memory_space<vmem>>, %arg12: memref<1x512xf32, #tpu.memory_space<vmem>>, %arg13: memref<512x128xf32, #tpu.memory_space<vmem>>, %arg14: memref<1x128xf32, #tpu.memory_space<vmem>>, %arg15: memref<1x2x8xf32, #tpu.memory_space<vmem>>, %arg16: memref<1x2x128xf32, #tpu.memory_space<vmem>>, %arg17: memref<2x2048xf32, #tpu.memory_space<vmem>>) attributes {dimension_semantics = [#tpu.dimension_semantics<parallel>, #tpu.dimension_semantics<arbitrary>], iteration_bounds = array<i64: 2, 2>, scalar_prefetch = 0 : i64, scratch_operands = 1 : i64, tpu.core_type = #tpu.core_type<tc>, window_params = [{transform_indices = @transform_0, window_bounds = array<i64: 1, 2, 8, 2048>}, {pipeline_mode = #tpu.pipeline_mode<synchronous>, transform_indices = @transform_1, window_bounds = array<i64: 2048, 640>}, {pipeline_mode = #tpu.pipeline_mode<synchronous>, transform_indices = @transform_2, window_bounds = array<i64: 1, 640>}, {pipeline_mode = #tpu.pipeline_mode<synchronous>, transform_indices = @transform_3, window_bounds = array<i64: 1, 512>}, {pipeline_mode = #tpu.pipeline_mode<synchronous>, transform_indices = @transform_4, window_bounds = array<i64: 1, 512>}, {pipeline_mode = #tpu.pipeline_mode<synchronous>, transform_indices = @transform_5, window_bounds = array<i64: 512, 128>}, {pipeline_mode = #tpu.pipeline_mode<synchronous>, transform_indices = @transform_6, window_bounds = array<i64: 1, 128>}, {pipeline_mode = #tpu.pipeline_mode<synchronous>, transform_indices = @transform_7, window_bounds = array<i64: 128, 512>}, {pipeline_mode = #tpu.pipeline_mode<synchronous>, transform_indices = @transform_8, window_bounds = array<i64: 1, 512>}, {pipeline_mode = #tpu.pipeline_mode<synchronous>, transform_indices = @transform_9, window_bounds = array<i64: 1, 512>}, {pipeline_mode = #tpu.pipeline_mode<synchronous>, transform_indices = @transform_10, window_bounds = array<i64: 1, 512>}, {pipeline_mode = #tpu.pipeline_mode<synchronous>, transform_indices = @transform_11, window_bounds = array<i64: 512, 128>}, {pipeline_mode = #tpu.pipeline_mode<synchronous>, transform_indices = @transform_12, window_bounds = array<i64: 1, 128>}, {transform_indices = @transform_13, window_bounds = array<i64: 1, 2, 8>}, {transform_indices = @transform_14, window_bounds = array<i64: 1, 2, 128>}]} {
    %c0_i32 = arith.constant 0 : i32
    %0 = arith.cmpi eq, %arg1, %c0_i32 : i32
    %1 = arith.extui %0 : i1 to i32
    %c0_i32_0 = arith.constant 0 : i32
    %2 = arith.cmpi ne, %1, %c0_i32_0 : i32
    scf.if %2 {
      %cst_9 = arith.constant 0.000000e+00 : f32
      %13 = vector.broadcast %cst_9 : f32 to vector<2x2048xf32>
      %c0_10 = arith.constant 0 : index
      %c0_11 = arith.constant 0 : index
      %14 = vector.load %arg17[%c0_10, %c0_11] : memref<2x2048xf32, #tpu.memory_space<vmem>>, vector<2x2048xf32>
      tpu.vector_store %arg17[%c0_10, %c0_11], %13 {strides = array<i32>} : memref<2x2048xf32, #tpu.memory_space<vmem>>, vector<2x2048xf32>,
    } else {
    }
    %c0 = arith.constant 0 : index
    %c0_1 = arith.constant 0 : index
    %3 = vector.load %arg17[%c0, %c0_1] : memref<2x2048xf32, #tpu.memory_space<vmem>>, vector<2x2048xf32>
    %c0_2 = arith.constant 0 : index
    %c0_3 = arith.constant 0 : index
    %c0_4 = arith.constant 0 : index
    %c0_5 = arith.constant 0 : index
    %4 = vector.load %arg2[%c0_2, %c0_3, %c0_4, %c0_5] : memref<1x2x8x2048xbf16, #tpu.memory_space<vmem>>, vector<1x2x8x2048xbf16>
    %5 = vector.shape_cast %4 : vector<1x2x8x2048xbf16> to vector<2x8x2048xbf16>
    %6 = arith.extf %5 : vector<2x8x2048xbf16> to vector<2x8x2048xf32>
    %cst = arith.constant dense<0.000000e+00> : vector<2x2048xf32>
    %7 = vector.multi_reduction <add>, %6, %cst [1] : vector<2x8x2048xf32> to vector<2x2048xf32>
    %8 = arith.addf %3, %7 : vector<2x2048xf32>
    %c0_6 = arith.constant 0 : index
    %c0_7 = arith.constant 0 : index
    %9 = vector.load %arg17[%c0_6, %c0_7] : memref<2x2048xf32, #tpu.memory_space<vmem>>, vector<2x2048xf32>
    tpu.vector_store %arg17[%c0_6, %c0_7], %8 {strides = array<i32>} : memref<2x2048xf32, #tpu.memory_space<vmem>>, vector<2x2048xf32>,
    %c1_i32 = arith.constant 1 : i32
    %10 = arith.cmpi eq, %arg1, %c1_i32 : i32
    %11 = arith.extui %10 : i1 to i32
    %c0_i32_8 = arith.constant 0 : i32
    %12 = arith.cmpi ne, %11, %c0_i32_8 : i32
    scf.if %12 {
      %c0_9 = arith.constant 0 : index
      %c0_10 = arith.constant 0 : index
      %13 = vector.load %arg17[%c0_9, %c0_10] : memref<2x2048xf32, #tpu.memory_space<vmem>>, vector<2x2048xf32>
      %cst_11 = arith.constant 6.250000e-02 : f32
      %14 = vector.broadcast %cst_11 : f32 to vector<2x2048xf32>
      %15 = arith.mulf %13, %14 : vector<2x2048xf32>
      %c0_12 = arith.constant 0 : index
      %c0_13 = arith.constant 0 : index
      %16 = vector.load %arg3[%c0_12, %c0_13] : memref<2048x640xf32, #tpu.memory_space<vmem>>, vector<2048x640xf32>
      %cst_14 = arith.constant dense<0.000000e+00> : vector<2x640xf32>
      %17 = tpu.matmul %15, %16, %cst_14 {dimension_numbers = #tpu.dot_dimension_numbers<[1], [0], [0], [1], [0, 0, 1, 1], [], []>} : vector<2x2048xf32>, vector<2048x640xf32>, vector<2x640xf32> -> vector<2x640xf32>
      %c0_15 = arith.constant 0 : index
      %c0_16 = arith.constant 0 : index
      %18 = vector.load %arg4[%c0_15, %c0_16] : memref<1x640xf32, #tpu.memory_space<vmem>>, vector<1x640xf32>
      %19 = vector.broadcast %18 : vector<1x640xf32> to vector<2x640xf32>
      %20 = arith.addf %17, %19 : vector<2x640xf32>
      %21 = vector.extract_strided_slice %20 {offsets = [0, 512], sizes = [2, 8], strides = [1, 1]} : vector<2x640xf32> to vector<2x8xf32>
      %c0_17 = arith.constant 0 : index
      %c0_18 = arith.constant 0 : index
      %c0_19 = arith.constant 0 : index
      %22 = vector.load %arg15[%c0_17, %c0_18, %c0_19] : memref<1x2x8xf32, #tpu.memory_space<vmem>>, vector<1x2x8xf32>
      %23 = vector.shape_cast %22 : vector<1x2x8xf32> to vector<2x8xf32>
      %24 = vector.shape_cast %21 : vector<2x8xf32> to vector<1x2x8xf32>
      tpu.vector_store %arg15[%c0_17, %c0_18, %c0_19], %24 {strides = array<i32>} : memref<1x2x8xf32, #tpu.memory_space<vmem>>, vector<1x2x8xf32>,
      %25 = vector.extract_strided_slice %20 {offsets = [0, 0], sizes = [2, 512], strides = [1, 1]} : vector<2x640xf32> to vector<2x512xf32>
      %c0_20 = arith.constant 0 : index
      %c0_21 = arith.constant 0 : index
      %26 = vector.load %arg5[%c0_20, %c0_21] : memref<1x512xf32, #tpu.memory_space<vmem>>, vector<1x512xf32>
      %c0_22 = arith.constant 0 : index
      %c0_23 = arith.constant 0 : index
      %27 = vector.load %arg6[%c0_22, %c0_23] : memref<1x512xf32, #tpu.memory_space<vmem>>, vector<1x512xf32>
      %cst_24 = arith.constant dense<0.000000e+00> : vector<512xf32>
      %28 = vector.multi_reduction <add>, %25, %cst_24 [0] : vector<2x512xf32> to vector<512xf32>
      %29 = vector.shape_cast %28 : vector<512xf32> to vector<1x512xf32>
      %cst_25 = arith.constant 2.000000e+00 : f32
      %30 = vector.broadcast %cst_25 : f32 to vector<1x512xf32>
      %31 = arith.divf %29, %30 : vector<1x512xf32>
      %32 = vector.broadcast %31 : vector<1x512xf32> to vector<2x512xf32>
      %33 = arith.subf %25, %32 : vector<2x512xf32>
      %34 = arith.mulf %33, %33 : vector<2x512xf32>
      %cst_26 = arith.constant dense<0.000000e+00> : vector<512xf32>
      %35 = vector.multi_reduction <add>, %34, %cst_26 [0] : vector<2x512xf32> to vector<512xf32>
      %36 = vector.shape_cast %35 : vector<512xf32> to vector<1x512xf32>
      %cst_27 = arith.constant 2.000000e+00 : f32
      %37 = vector.broadcast %cst_27 : f32 to vector<1x512xf32>
      %38 = arith.divf %36, %37 : vector<1x512xf32>
      %39 = vector.broadcast %31 : vector<1x512xf32> to vector<2x512xf32>
      %40 = arith.subf %25, %39 : vector<2x512xf32>
      %cst_28 = arith.constant 9.99999974E-6 : f32
      %41 = vector.broadcast %cst_28 : f32 to vector<1x512xf32>
      %42 = arith.addf %38, %41 : vector<1x512xf32>
      %43 = math.rsqrt %42 : vector<1x512xf32>
      %44 = vector.broadcast %43 : vector<1x512xf32> to vector<2x512xf32>
      %45 = arith.mulf %40, %44 : vector<2x512xf32>
      %46 = vector.broadcast %26 : vector<1x512xf32> to vector<2x512xf32>
      %47 = arith.mulf %45, %46 : vector<2x512xf32>
      %48 = vector.broadcast %27 : vector<1x512xf32> to vector<2x512xf32>
      %49 = arith.addf %47, %48 : vector<2x512xf32>
      %cst_29 = arith.constant 0.000000e+00 : f32
      %50 = vector.broadcast %cst_29 : f32 to vector<2x512xf32>
      %51 = arith.maximumf %49, %50 : vector<2x512xf32>
      %c0_30 = arith.constant 0 : index
      %c0_31 = arith.constant 0 : index
      %52 = vector.load %arg7[%c0_30, %c0_31] : memref<512x128xf32, #tpu.memory_space<vmem>>, vector<512x128xf32>
      %cst_32 = arith.constant dense<0.000000e+00> : vector<2x128xf32>
      %53 = tpu.matmul %51, %52, %cst_32 {dimension_numbers = #tpu.dot_dimension_numbers<[1], [0], [0], [1], [0, 0, 1, 1], [], []>} : vector<2x512xf32>, vector<512x128xf32>, vector<2x128xf32> -> vector<2x128xf32>
      %c0_33 = arith.constant 0 : index
      %c0_34 = arith.constant 0 : index
      %54 = vector.load %arg8[%c0_33, %c0_34] : memref<1x128xf32, #tpu.memory_space<vmem>>, vector<1x128xf32>
      %55 = vector.broadcast %54 : vector<1x128xf32> to vector<2x128xf32>
      %56 = arith.addf %53, %55 : vector<2x128xf32>
      %c0_35 = arith.constant 0 : index
      %c0_36 = arith.constant 0 : index
      %57 = vector.load %arg9[%c0_35, %c0_36] : memref<128x512xf32, #tpu.memory_space<vmem>>, vector<128x512xf32>
      %cst_37 = arith.constant dense<0.000000e+00> : vector<2x512xf32>
      %58 = tpu.matmul %56, %57, %cst_37 {dimension_numbers = #tpu.dot_dimension_numbers<[1], [0], [0], [1], [0, 0, 1, 1], [], []>} : vector<2x128xf32>, vector<128x512xf32>, vector<2x512xf32> -> vector<2x512xf32>
      %c0_38 = arith.constant 0 : index
      %c0_39 = arith.constant 0 : index
      %59 = vector.load %arg10[%c0_38, %c0_39] : memref<1x512xf32, #tpu.memory_space<vmem>>, vector<1x512xf32>
      %60 = vector.broadcast %59 : vector<1x512xf32> to vector<2x512xf32>
      %61 = arith.addf %58, %60 : vector<2x512xf32>
      %c0_40 = arith.constant 0 : index
      %c0_41 = arith.constant 0 : index
      %62 = vector.load %arg11[%c0_40, %c0_41] : memref<1x512xf32, #tpu.memory_space<vmem>>, vector<1x512xf32>
      %c0_42 = arith.constant 0 : index
      %c0_43 = arith.constant 0 : index
      %63 = vector.load %arg12[%c0_42, %c0_43] : memref<1x512xf32, #tpu.memory_space<vmem>>, vector<1x512xf32>
      %cst_44 = arith.constant dense<0.000000e+00> : vector<512xf32>
      %64 = vector.multi_reduction <add>, %61, %cst_44 [0] : vector<2x512xf32> to vector<512xf32>
      %65 = vector.shape_cast %64 : vector<512xf32> to vector<1x512xf32>
      %cst_45 = arith.constant 2.000000e+00 : f32
      %66 = vector.broadcast %cst_45 : f32 to vector<1x512xf32>
      %67 = arith.divf %65, %66 : vector<1x512xf32>
      %68 = vector.broadcast %67 : vector<1x512xf32> to vector<2x512xf32>
      %69 = arith.subf %61, %68 : vector<2x512xf32>
      %70 = arith.mulf %69, %69 : vector<2x512xf32>
      %cst_46 = arith.constant dense<0.000000e+00> : vector<512xf32>
      %71 = vector.multi_reduction <add>, %70, %cst_46 [0] : vector<2x512xf32> to vector<512xf32>
      %72 = vector.shape_cast %71 : vector<512xf32> to vector<1x512xf32>
      %cst_47 = arith.constant 2.000000e+00 : f32
      %73 = vector.broadcast %cst_47 : f32 to vector<1x512xf32>
      %74 = arith.divf %72, %73 : vector<1x512xf32>
      %75 = vector.broadcast %67 : vector<1x512xf32> to vector<2x512xf32>
      %76 = arith.subf %61, %75 : vector<2x512xf32>
      %cst_48 = arith.constant 9.99999974E-6 : f32
      %77 = vector.broadcast %cst_48 : f32 to vector<1x512xf32>
      %78 = arith.addf %74, %77 : vector<1x512xf32>
      %79 = math.rsqrt %78 : vector<1x512xf32>
      %80 = vector.broadcast %79 : vector<1x512xf32> to vector<2x512xf32>
      %81 = arith.mulf %76, %80 : vector<2x512xf32>
      %82 = vector.broadcast %62 : vector<1x512xf32> to vector<2x512xf32>
      %83 = arith.mulf %81, %82 : vector<2x512xf32>
      %84 = vector.broadcast %63 : vector<1x512xf32> to vector<2x512xf32>
      %85 = arith.addf %83, %84 : vector<2x512xf32>
      %cst_49 = arith.constant 0.000000e+00 : f32
      %86 = vector.broadcast %cst_49 : f32 to vector<2x512xf32>
      %87 = arith.maximumf %85, %86 : vector<2x512xf32>
      %c0_50 = arith.constant 0 : index
      %c0_51 = arith.constant 0 : index
      %88 = vector.load %arg13[%c0_50, %c0_51] : memref<512x128xf32, #tpu.memory_space<vmem>>, vector<512x128xf32>
      %cst_52 = arith.constant dense<0.000000e+00> : vector<2x128xf32>
      %89 = tpu.matmul %87, %88, %cst_52 {dimension_numbers = #tpu.dot_dimension_numbers<[1], [0], [0], [1], [0, 0, 1, 1], [], []>} : vector<2x512xf32>, vector<512x128xf32>, vector<2x128xf32> -> vector<2x128xf32>
      %c0_53 = arith.constant 0 : index
      %c0_54 = arith.constant 0 : index
      %90 = vector.load %arg14[%c0_53, %c0_54] : memref<1x128xf32, #tpu.memory_space<vmem>>, vector<1x128xf32>
      %91 = vector.broadcast %90 : vector<1x128xf32> to vector<2x128xf32>
      %92 = arith.addf %89, %91 : vector<2x128xf32>
      %c0_55 = arith.constant 0 : index
      %c0_56 = arith.constant 0 : index
      %c0_57 = arith.constant 0 : index
      %93 = vector.load %arg16[%c0_55, %c0_56, %c0_57] : memref<1x2x128xf32, #tpu.memory_space<vmem>>, vector<1x2x128xf32>
      %94 = vector.shape_cast %93 : vector<1x2x128xf32> to vector<2x128xf32>
      %95 = vector.shape_cast %92 : vector<2x128xf32> to vector<1x2x128xf32>
      tpu.vector_store %arg16[%c0_55, %c0_56, %c0_57], %95 {strides = array<i32>} : memref<1x2x128xf32, #tpu.memory_space<vmem>>, vector<1x2x128xf32>,
    } else {
    }
    return
  }
  func.func @transform_0(%arg0: i32, %arg1: i32) -> (i32, i32, i32, i32) {
    %c0_i32 = arith.constant 0 : i32
    %c0_i32_0 = arith.constant 0 : i32
    %c0_i32_1 = arith.constant 0 : i32
    return %arg0, %c0_i32, %arg1, %c0_i32_0 : i32, i32, i32, i32
  }
  func.func @transform_1(%arg0: i32, %arg1: i32) -> (i32, i32) {
    %c0_i32 = arith.constant 0 : i32
    %c0_i32_0 = arith.constant 0 : i32
    %c0_i32_1 = arith.constant 0 : i32
    return %c0_i32, %c0_i32_0 : i32, i32
  }
  func.func @transform_2(%arg0: i32, %arg1: i32) -> (i32, i32) {
    %c0_i32 = arith.constant 0 : i32
    %c0_i32_0 = arith.constant 0 : i32
    %c0_i32_1 = arith.constant 0 : i32
    return %c0_i32, %c0_i32_0 : i32, i32
  }
  func.func @transform_3(%arg0: i32, %arg1: i32) -> (i32, i32) {
    %c0_i32 = arith.constant 0 : i32
    %c0_i32_0 = arith.constant 0 : i32
    %c0_i32_1 = arith.constant 0 : i32
    return %c0_i32, %c0_i32_0 : i32, i32
  }
  func.func @transform_4(%arg0: i32, %arg1: i32) -> (i32, i32) {
    %c0_i32 = arith.constant 0 : i32
    %c0_i32_0 = arith.constant 0 : i32
    %c0_i32_1 = arith.constant 0 : i32
    return %c0_i32, %c0_i32_0 : i32, i32
  }
  func.func @transform_5(%arg0: i32, %arg1: i32) -> (i32, i32) {
    %c0_i32 = arith.constant 0 : i32
    %c0_i32_0 = arith.constant 0 : i32
    %c0_i32_1 = arith.constant 0 : i32
    return %c0_i32, %c0_i32_0 : i32, i32
  }
  func.func @transform_6(%arg0: i32, %arg1: i32) -> (i32, i32) {
    %c0_i32 = arith.constant 0 : i32
    %c0_i32_0 = arith.constant 0 : i32
    %c0_i32_1 = arith.constant 0 : i32
    return %c0_i32, %c0_i32_0 : i32, i32
  }
  func.func @transform_7(%arg0: i32, %arg1: i32) -> (i32, i32) {
    %c0_i32 = arith.constant 0 : i32
    %c0_i32_0 = arith.constant 0 : i32
    %c0_i32_1 = arith.constant 0 : i32
    return %c0_i32, %c0_i32_0 : i32, i32
  }
  func.func @transform_8(%arg0: i32, %arg1: i32) -> (i32, i32) {
    %c0_i32 = arith.constant 0 : i32
    %c0_i32_0 = arith.constant 0 : i32
    %c0_i32_1 = arith.constant 0 : i32
    return %c0_i32, %c0_i32_0 : i32, i32
  }
  func.func @transform_9(%arg0: i32, %arg1: i32) -> (i32, i32) {
    %c0_i32 = arith.constant 0 : i32
    %c0_i32_0 = arith.constant 0 : i32
    %c0_i32_1 = arith.constant 0 : i32
    return %c0_i32, %c0_i32_0 : i32, i32
  }
  func.func @transform_10(%arg0: i32, %arg1: i32) -> (i32, i32) {
    %c0_i32 = arith.constant 0 : i32
    %c0_i32_0 = arith.constant 0 : i32
    %c0_i32_1 = arith.constant 0 : i32
    return %c0_i32, %c0_i32_0 : i32, i32
  }
  func.func @transform_11(%arg0: i32, %arg1: i32) -> (i32, i32) {
    %c0_i32 = arith.constant 0 : i32
    %c0_i32_0 = arith.constant 0 : i32
    %c0_i32_1 = arith.constant 0 : i32
    return %c0_i32, %c0_i32_0 : i32, i32
  }
  func.func @transform_12(%arg0: i32, %arg1: i32) -> (i32, i32) {
    %c0_i32 = arith.constant 0 : i32
    %c0_i32_0 = arith.constant 0 : i32
    %c0_i32_1 = arith.constant 0 : i32
    return %c0_i32, %c0_i32_0 : i32, i32
  }
  func.func @transform_13(%arg0: i32, %arg1: i32) -> (i32, i32, i32) {
    %c0_i32 = arith.constant 0 : i32
    %c0_i32_0 = arith.constant 0 : i32
    %c0_i32_1 = arith.constant 0 : i32
    return %arg0, %c0_i32, %c0_i32_0 : i32, i32, i32
  }
  func.func @transform_14(%arg0: i32, %arg1: i32) -> (i32, i32, i32) {
    %c0_i32 = arith.constant 0 : i32
    %c0_i32_0 = arith.constant 0 : i32
    %c0_i32_1 = arith.constant 0 : i32
    return %arg0, %c0_i32, %c0_i32_0 : i32, i32, i32
  }
}

</mosaic_0001>

<llo_original>
// kernel: tpu_custom_call.1
$region0: #{tpu_custom_call.1}
  #allocation0 [shape = 'u32[]', space=smem, size = 0x4, offset = 0x4, fixed_abs, tag = 'smem constant byte address 0x4 - core index']
  #allocation1 [shape = 'u32[144,128]{1,0:T(1,128)}', space=vmem, size = 0x12000, scoped, tag = 'internal scratch']
  #allocation2 [shape = 'f32[2,2048]{1,0:T(2,128)}', space=vmem, size = 0x4000, scoped, tag = 'scratch operand']
  %s0 = inlined_call_operand.hbm [shape: bf16[2,2,16,2048], index: 0, kind: input, shape index: {}]
  %s1 = inlined_call_operand.hbm [shape: f32[2048,640], index: 1, kind: input, shape index: {}]
  %s2 = inlined_call_operand.hbm [shape: f32[1,640], index: 2, kind: input, shape index: {}]
  %s3 = inlined_call_operand.hbm [shape: f32[1,512], index: 3, kind: input, shape index: {}]
  %s4 = inlined_call_operand.hbm [shape: f32[1,512], index: 4, kind: input, shape index: {}]
  %s5 = inlined_call_operand.hbm [shape: f32[512,128], index: 5, kind: input, shape index: {}]
  %s6 = inlined_call_operand.hbm [shape: f32[1,128], index: 6, kind: input, shape index: {}]
  %s7 = inlined_call_operand.hbm [shape: f32[128,512], index: 7, kind: input, shape index: {}]
  %s8 = inlined_call_operand.hbm [shape: f32[1,512], index: 8, kind: input, shape index: {}]
  %s9 = inlined_call_operand.hbm [shape: f32[1,512], index: 9, kind: input, shape index: {}]
  %s10 = inlined_call_operand.hbm [shape: f32[1,512], index: 10, kind: input, shape index: {}]
  %s11 = inlined_call_operand.hbm [shape: f32[512,128], index: 11, kind: input, shape index: {}]
  %s12 = inlined_call_operand.hbm [shape: f32[1,128], index: 12, kind: input, shape index: {}]
  %s13 = inlined_call_operand.hbm [shape: f32[2,2,8], index: 13, kind: output, shape index: {0}]
  %s14 = inlined_call_operand.hbm [shape: f32[2,2,128], index: 14, kind: output, shape index: {1}]
  %15 = xla_tuple %s13, %s14
  %s16 = sld [smem:[#allocation0]]
  $region153: #{tpu_custom_call.1} parent=0
    _
  %s18 = ssub.s32 1, %s16
  %s19 = scalar_select 0, %s18, %s16
  $region1: #{tpu_custom_call.1} parent=0
    #allocation3 [shape = 'u8[131072]{0}', space=vmem, size = 0x20000, scoped, tag = 'input window, operand 0']
    #allocation4 [shape = 's32[2]{0}', space=sflag, size = 0x8, scoped, tag = 'scoped memory for tpu_custom_call.1']
    #allocation5 [shape = 's32[2]{0}', space=sflag, size = 0x8, scoped, tag = 'scoped memory for tpu_custom_call.1']
    #allocation6 [shape = 'u8[5242880]{0}', space=vmem, size = 0x500000, scoped, tag = 'input window, operand 1, single buffered']
    #allocation7 [shape = 's32[1]{0}', space=sflag, size = 0x4, scoped, tag = 'scoped memory for tpu_custom_call.1']
    #allocation8 [shape = 'u8[2560]{0}', space=vmem, size = 0xc00, scoped, tag = 'input window, operand 2, single buffered']
    #allocation9 [shape = 'u8[2048]{0}', space=vmem, size = 0x800, scoped, tag = 'input window, operand 3, single buffered']
    #allocation10 [shape = 's32[1]{0}', space=sflag, size = 0x4, scoped, tag = 'scoped memory for tpu_custom_call.1']
    #allocation11 [shape = 'u8[2048]{0}', space=vmem, size = 0x800, scoped, tag = 'input window, operand 4, single buffered']
    #allocation12 [shape = 'u8[262144]{0}', space=vmem, size = 0x40000, scoped, tag = 'input window, operand 5, single buffered']
    #allocation13 [shape = 's32[1]{0}', space=sflag, size = 0x4, scoped, tag = 'scoped memory for tpu_custom_call.1']
    #allocation14 [shape = 'u8[512]{0}', space=vmem, size = 0x400, scoped, tag = 'input window, operand 6, single buffered']
    #allocation15 [shape = 'u8[262144]{0}', space=vmem, size = 0x40000, scoped, tag = 'input window, operand 7, single buffered']
    #allocation16 [shape = 's32[1]{0}', space=sflag, size = 0x4, scoped, tag = 'scoped memory for tpu_custom_call.1']
    #allocation17 [shape = 'u8[2048]{0}', space=vmem, size = 0x800, scoped, tag = 'input window, operand 8, single buffered']
    #allocation18 [shape = 'u8[2048]{0}', space=vmem, size = 0x800, scoped, tag = 'input window, operand 9, single buffered']
    #allocation19 [shape = 's32[1]{0}', space=sflag, size = 0x4, scoped, tag = 'scoped memory for tpu_custom_call.1']
    #allocation20 [shape = 'u8[2048]{0}', space=vmem, size = 0x800, scoped, tag = 'input window, operand 10, single buffered']
    #allocation21 [shape = 'u8[262144]{0}', space=vmem, size = 0x40000, scoped, tag = 'input window, operand 11, single buffered']
    #allocation22 [shape = 's32[1]{0}', space=sflag, size = 0x4, scoped, tag = 'scoped memory for tpu_custom_call.1']
    #allocation23 [shape = 'u8[512]{0}', space=vmem, size = 0x400, scoped, tag = 'input window, operand 12, single buffered']
    #allocation24 [shape = 'u8[2048]{0}', space=vmem, size = 0x800, scoped, tag = 'output window, operand 0']
    #allocation25 [shape = 'u8[2048]{0}', space=vmem, size = 0x800, scoped, tag = 'output window, operand 1']
    #allocation26 [shape = 's32[2]{0}', space=sflag, size = 0x8, scoped, tag = 'scoped memory for tpu_custom_call.1']
    %20 = vsyncpa [#allocation4], 0
    %s21 = scalar_lea.sflag [#allocation4], 1
    %22 = vsyncpa %s21, 0
    %23 = vsyncpa [#allocation7], 0
    %24 = vsyncpa [#allocation10], 0
    %25 = vsyncpa [#allocation13], 0
    %26 = vsyncpa [#allocation16], 0
    %27 = vsyncpa [#allocation19], 0
    %28 = vsyncpa [#allocation22], 0
    %29 = vsyncpa [#allocation5], 0
    %s30 = scalar_lea.sflag [#allocation5], 1
    %31 = vsyncpa %s30, 0
    %32 = vsyncpa [#allocation26], 0
    %s33 = scalar_lea.sflag [#allocation26], 1
    %34 = vsyncpa %s33, 0
    loop: start=0, step=1, limit=6
    $region2: #{tpu_custom_call.1} parent=1 // loop_pre_header
      _
    $region3: #{tpu_custom_call.1} parent=1 // loop_header
      %s36 = sphi 0, %s40
      %p37 = scmp.ge.s32.totalorder %s36, 6
      %s43 = sphi 0, %s55
      %s44 = sphi 0, %s51
      %s45 = sphi 0, %s43
      %s46 = sphi 0, %s44
      %s47 = sphi 0, %s45
      %s48 = sphi 0, %s46
      %s60 = sphi 0, %s62
      %s63 = sphi 0, %s60
      %s64 = sphi 0, %s63
      %s80 = sphi 0, %s64
      %s84 = sphi 0, %s84
      %s86 = sphi 0, %s84
      %s87 = sphi 0, %s86
      %s101 = sphi 0, %s87
      %s105 = sphi 0, %s105
      %s107 = sphi 0, %s105
      %s108 = sphi 0, %s107
      %s122 = sphi 0, %s108
      %s126 = sphi 0, %s126
      %s128 = sphi 0, %s126
      %s129 = sphi 0, %s128
      %s143 = sphi 0, %s129
      %s147 = sphi 0, %s147
      %s149 = sphi 0, %s147
      %s150 = sphi 0, %s149
      %s164 = sphi 0, %s150
      %s168 = sphi 0, %s168
      %s170 = sphi 0, %s168
      %s171 = sphi 0, %s170
      %s185 = sphi 0, %s171
      %s189 = sphi 0, %s189
      %s191 = sphi 0, %s189
      %s192 = sphi 0, %s191
      %s206 = sphi 0, %s192
      %s210 = sphi 0, %s210
      %s212 = sphi 0, %s210
      %s213 = sphi 0, %s212
      %s227 = sphi 0, %s213
      %s231 = sphi 0, %s231
      %s233 = sphi 0, %s231
      %s234 = sphi 0, %s233
      %s248 = sphi 0, %s234
      %s252 = sphi 0, %s252
      %s254 = sphi 0, %s252
      %s255 = sphi 0, %s254
      %s269 = sphi 0, %s255
      %s273 = sphi 0, %s273
      %s275 = sphi 0, %s273
      %s276 = sphi 0, %s275
      %s290 = sphi 0, %s276
      %s294 = sphi 0, %s294
      %s296 = sphi 0, %s294
      %s297 = sphi 0, %s296
      %s311 = sphi 0, %s297
      %s315 = sphi 0, %s315
      %s317 = sphi 0, %s315
      %s318 = sphi 0, %s317
      %s332 = sphi 0, %s318
      %s338 = sphi 0, %s340
      %s341 = sphi 0, %s338
      %s342 = sphi 0, %s341
      %s358 = sphi 0, %s342
      %s364 = sphi 0, %s366
      %s367 = sphi 0, %s364
      %s368 = sphi 0, %s367
      %s384 = sphi 0, %s368
    $region4: #{tpu_custom_call.1} parent=1 // loop_header_branch
      %39 = sbr.rel (%p37) target = $region8
    $region5: #{tpu_custom_call.1} parent=1 // loop_body
      %s41 = ssub.s32 %s36, 1
      %s42 = ssub.s32 %s36, 2
      %s49 = sadd.s32 1, %s44
      %p50 = scmp.ge.s32.totalorder %s49, 2
      %s51 = scalar_select %p50, 0, %s49
      %s52 = sadd.s32 1, %s43
      %s53 = scalar_select %p50, %s52, %s43
      %p54 = scmp.ge.s32.totalorder %s53, 2
      %s55 = scalar_select %p54, 0, %s53
      %s56 = ssub.s32 %s43, %s55
      %s57 = ssub.s32 %s44, %s51
      %s58 = sor.u32 %s56, %s57
      %p59 = scmp.eq.s32.totalorder %s58, 0
      %s61 = sadd.s32 %s60, 1
      %s62 = scalar_select %p59, %s60, %s61
      %p65 = pneg %p59
      %p66 = scmp.eq.s32.totalorder %s36, 3
      %p67 = por %p65, %p66
      %p68 = scmp.ne.s32.totalorder %s60, %s63
      %p69 = scmp.eq.s32.totalorder %s36, 0
      %p70 = por %p68, %p69
      %p71 = scmp.ne.s32.totalorder %s60, %s63
      %p72 = scmp.eq.s32.totalorder %s41, 3
      %p73 = por %p71, %p72
      %p74 = scmp.ne.s32.totalorder %s63, %s64
      %p75 = scmp.eq.s32.totalorder %s41, 0
      %p76 = por %p74, %p75
      %p77 = scmp.ne.s32.totalorder %s63, %s64
      %p78 = scmp.eq.s32.totalorder %s42, 3
      %p79 = por %p77, %p78
      %p81 = scmp.ne.s32.totalorder %s64, %s80
      %p82 = scmp.eq.s32.totalorder %s42, 0
      %p83 = por %p81, %p82
      %s85 = sadd.s32 %s84, 1
      %p88 = scmp.eq.s32.totalorder %s36, 3
      %p89 = scmp.ne.s32.totalorder %s84, %s86
      %p90 = scmp.eq.s32.totalorder %s36, 0
      %p91 = por %p89, %p90
      %p92 = scmp.ne.s32.totalorder %s84, %s86
      %p93 = scmp.eq.s32.totalorder %s41, 3
      %p94 = por %p92, %p93
      %p95 = scmp.ne.s32.totalorder %s86, %s87
      %p96 = scmp.eq.s32.totalorder %s41, 0
      %p97 = por %p95, %p96
      %p98 = scmp.ne.s32.totalorder %s86, %s87
      %p99 = scmp.eq.s32.totalorder %s42, 3
      %p100 = por %p98, %p99
      %p102 = scmp.ne.s32.totalorder %s87, %s101
      %p103 = scmp.eq.s32.totalorder %s42, 0
      %p104 = por %p102, %p103
      %s106 = sadd.s32 %s105, 1
      %p109 = scmp.eq.s32.totalorder %s36, 3
      %p110 = scmp.ne.s32.totalorder %s105, %s107
      %p111 = scmp.eq.s32.totalorder %s36, 0
      %p112 = por %p110, %p111
      %p113 = scmp.ne.s32.totalorder %s105, %s107
      %p114 = scmp.eq.s32.totalorder %s41, 3
      %p115 = por %p113, %p114
      %p116 = scmp.ne.s32.totalorder %s107, %s108
      %p117 = scmp.eq.s32.totalorder %s41, 0
      %p118 = por %p116, %p117
      %p119 = scmp.ne.s32.totalorder %s107, %s108
      %p120 = scmp.eq.s32.totalorder %s42, 3
      %p121 = por %p119, %p120
      %p123 = scmp.ne.s32.totalorder %s108, %s122
      %p124 = scmp.eq.s32.totalorder %s42, 0
      %p125 = por %p123, %p124
      %s127 = sadd.s32 %s126, 1
      %p130 = scmp.eq.s32.totalorder %s36, 3
      %p131 = scmp.ne.s32.totalorder %s126, %s128
      %p132 = scmp.eq.s32.totalorder %s36, 0
      %p133 = por %p131, %p132
      %p134 = scmp.ne.s32.totalorder %s126, %s128
      %p135 = scmp.eq.s32.totalorder %s41, 3
      %p136 = por %p134, %p135
      %p137 = scmp.ne.s32.totalorder %s128, %s129
      %p138 = scmp.eq.s32.totalorder %s41, 0
      %p139 = por %p137, %p138
      %p140 = scmp.ne.s32.totalorder %s128, %s129
      %p141 = scmp.eq.s32.totalorder %s42, 3
      %p142 = por %p140, %p141
      %p144 = scmp.ne.s32.totalorder %s129, %s143
      %p145 = scmp.eq.s32.totalorder %s42, 0
      %p146 = por %p144, %p145
      %s148 = sadd.s32 %s147, 1
      %p151 = scmp.eq.s32.totalorder %s36, 3
      %p152 = scmp.ne.s32.totalorder %s147, %s149
      %p153 = scmp.eq.s32.totalorder %s36, 0
      %p154 = por %p152, %p153
      %p155 = scmp.ne.s32.totalorder %s147, %s149
      %p156 = scmp.eq.s32.totalorder %s41, 3
      %p157 = por %p155, %p156
      %p158 = scmp.ne.s32.totalorder %s149, %s150
      %p159 = scmp.eq.s32.totalorder %s41, 0
      %p160 = por %p158, %p159
      %p161 = scmp.ne.s32.totalorder %s149, %s150
      %p162 = scmp.eq.s32.totalorder %s42, 3
      %p163 = por %p161, %p162
      %p165 = scmp.ne.s32.totalorder %s150, %s164
      %p166 = scmp.eq.s32.totalorder %s42, 0
      %p167 = por %p165, %p166
      %s169 = sadd.s32 %s168, 1
      %p172 = scmp.eq.s32.totalorder %s36, 3
      %p173 = scmp.ne.s32.totalorder %s168, %s170
      %p174 = scmp.eq.s32.totalorder %s36, 0
      %p175 = por %p173, %p174
      %p176 = scmp.ne.s32.totalorder %s168, %s170
      %p177 = scmp.eq.s32.totalorder %s41, 3
      %p178 = por %p176, %p177
      %p179 = scmp.ne.s32.totalorder %s170, %s171
      %p180 = scmp.eq.s32.totalorder %s41, 0
      %p181 = por %p179, %p180
      %p182 = scmp.ne.s32.totalorder %s170, %s171
      %p183 = scmp.eq.s32.totalorder %s42, 3
      %p184 = por %p182, %p183
      %p186 = scmp.ne.s32.totalorder %s171, %s185
      %p187 = scmp.eq.s32.totalorder %s42, 0
      %p188 = por %p186, %p187
      %s190 = sadd.s32 %s189, 1
      %p193 = scmp.eq.s32.totalorder %s36, 3
      %p194 = scmp.ne.s32.totalorder %s189, %s191
      %p195 = scmp.eq.s32.totalorder %s36, 0
      %p196 = por %p194, %p195
      %p197 = scmp.ne.s32.totalorder %s189, %s191
      %p198 = scmp.eq.s32.totalorder %s41, 3
      %p199 = por %p197, %p198
      %p200 = scmp.ne.s32.totalorder %s191, %s192
      %p201 = scmp.eq.s32.totalorder %s41, 0
      %p202 = por %p200, %p201
      %p203 = scmp.ne.s32.totalorder %s191, %s192
      %p204 = scmp.eq.s32.totalorder %s42, 3
      %p205 = por %p203, %p204
      %p207 = scmp.ne.s32.totalorder %s192, %s206
      %p208 = scmp.eq.s32.totalorder %s42, 0
      %p209 = por %p207, %p208
      %s211 = sadd.s32 %s210, 1
      %p214 = scmp.eq.s32.totalorder %s36, 3
      %p215 = scmp.ne.s32.totalorder %s210, %s212
      %p216 = scmp.eq.s32.totalorder %s36, 0
      %p217 = por %p215, %p216
      %p218 = scmp.ne.s32.totalorder %s210, %s212
      %p219 = scmp.eq.s32.totalorder %s41, 3
      %p220 = por %p218, %p219
      %p221 = scmp.ne.s32.totalorder %s212, %s213
      %p222 = scmp.eq.s32.totalorder %s41, 0
      %p223 = por %p221, %p222
      %p224 = scmp.ne.s32.totalorder %s212, %s213
      %p225 = scmp.eq.s32.totalorder %s42, 3
      %p226 = por %p224, %p225
      %p228 = scmp.ne.s32.totalorder %s213, %s227
      %p229 = scmp.eq.s32.totalorder %s42, 0
      %p230 = por %p228, %p229
      %s232 = sadd.s32 %s231, 1
      %p235 = scmp.eq.s32.totalorder %s36, 3
      %p236 = scmp.ne.s32.totalorder %s231, %s233
      %p237 = scmp.eq.s32.totalorder %s36, 0
      %p238 = por %p236, %p237
      %p239 = scmp.ne.s32.totalorder %s231, %s233
      %p240 = scmp.eq.s32.totalorder %s41, 3
      %p241 = por %p239, %p240
      %p242 = scmp.ne.s32.totalorder %s233, %s234
      %p243 = scmp.eq.s32.totalorder %s41, 0
      %p244 = por %p242, %p243
      %p245 = scmp.ne.s32.totalorder %s233, %s234
      %p246 = scmp.eq.s32.totalorder %s42, 3
      %p247 = por %p245, %p246
      %p249 = scmp.ne.s32.totalorder %s234, %s248
      %p250 = scmp.eq.s32.totalorder %s42, 0
      %p251 = por %p249, %p250
      %s253 = sadd.s32 %s252, 1
      %p256 = scmp.eq.s32.totalorder %s36, 3
      %p257 = scmp.ne.s32.totalorder %s252, %s254
      %p258 = scmp.eq.s32.totalorder %s36, 0
      %p259 = por %p257, %p258
      %p260 = scmp.ne.s32.totalorder %s252, %s254
      %p261 = scmp.eq.s32.totalorder %s41, 3
      %p262 = por %p260, %p261
      %p263 = scmp.ne.s32.totalorder %s254, %s255
      %p264 = scmp.eq.s32.totalorder %s41, 0
      %p265 = por %p263, %p264
      %p266 = scmp.ne.s32.totalorder %s254, %s255
      %p267 = scmp.eq.s32.totalorder %s42, 3
      %p268 = por %p266, %p267
      %p270 = scmp.ne.s32.totalorder %s255, %s269
      %p271 = scmp.eq.s32.totalorder %s42, 0
      %p272 = por %p270, %p271
      %s274 = sadd.s32 %s273, 1
      %p277 = scmp.eq.s32.totalorder %s36, 3
      %p278 = scmp.ne.s32.totalorder %s273, %s275
      %p279 = scmp.eq.s32.totalorder %s36, 0
      %p280 = por %p278, %p279
      %p281 = scmp.ne.s32.totalorder %s273, %s275
      %p282 = scmp.eq.s32.totalorder %s41, 3
      %p283 = por %p281, %p282
      %p284 = scmp.ne.s32.totalorder %s275, %s276
      %p285 = scmp.eq.s32.totalorder %s41, 0
      %p286 = por %p284, %p285
      %p287 = scmp.ne.s32.totalorder %s275, %s276
      %p288 = scmp.eq.s32.totalorder %s42, 3
      %p289 = por %p287, %p288
      %p291 = scmp.ne.s32.totalorder %s276, %s290
      %p292 = scmp.eq.s32.totalorder %s42, 0
      %p293 = por %p291, %p292
      %s295 = sadd.s32 %s294, 1
      %p298 = scmp.eq.s32.totalorder %s36, 3
      %p299 = scmp.ne.s32.totalorder %s294, %s296
      %p300 = scmp.eq.s32.totalorder %s36, 0
      %p301 = por %p299, %p300
      %p302 = scmp.ne.s32.totalorder %s294, %s296
      %p303 = scmp.eq.s32.totalorder %s41, 3
      %p304 = por %p302, %p303
      %p305 = scmp.ne.s32.totalorder %s296, %s297
      %p306 = scmp.eq.s32.totalorder %s41, 0
      %p307 = por %p305, %p306
      %p308 = scmp.ne.s32.totalorder %s296, %s297
      %p309 = scmp.eq.s32.totalorder %s42, 3
      %p310 = por %p308, %p309
      %p312 = scmp.ne.s32.totalorder %s297, %s311
      %p313 = scmp.eq.s32.totalorder %s42, 0
      %p314 = por %p312, %p313
      %s316 = sadd.s32 %s315, 1
      %p319 = scmp.eq.s32.totalorder %s36, 3
      %p320 = scmp.ne.s32.totalorder %s315, %s317
      %p321 = scmp.eq.s32.totalorder %s36, 0
      %p322 = por %p320, %p321
      %p323 = scmp.ne.s32.totalorder %s315, %s317
      %p324 = scmp.eq.s32.totalorder %s41, 3
      %p325 = por %p323, %p324
      %p326 = scmp.ne.s32.totalorder %s317, %s318
      %p327 = scmp.eq.s32.totalorder %s41, 0
      %p328 = por %p326, %p327
      %p329 = scmp.ne.s32.totalorder %s317, %s318
      %p330 = scmp.eq.s32.totalorder %s42, 3
      %p331 = por %p329, %p330
      %p333 = scmp.ne.s32.totalorder %s318, %s332
      %p334 = scmp.eq.s32.totalorder %s42, 0
      %p335 = por %p333, %p334
      %s336 = ssub.s32 %s43, %s55
      %p337 = scmp.eq.s32.totalorder %s336, 0
      %s339 = sadd.s32 %s338, 1
      %s340 = scalar_select %p337, %s338, %s339
      %p343 = pneg %p337
      %p344 = scmp.eq.s32.totalorder %s36, 3
      %p345 = por %p343, %p344
      %p346 = scmp.ne.s32.totalorder %s338, %s341
      %p347 = scmp.eq.s32.totalorder %s36, 0
      %p348 = por %p346, %p347
      %p349 = scmp.ne.s32.totalorder %s338, %s341
      %p350 = scmp.eq.s32.totalorder %s41, 3
      %p351 = por %p349, %p350
      %p352 = scmp.ne.s32.totalorder %s341, %s342
      %p353 = scmp.eq.s32.totalorder %s41, 0
      %p354 = por %p352, %p353
      %p355 = scmp.ne.s32.totalorder %s341, %s342
      %p356 = scmp.eq.s32.totalorder %s42, 3
      %p357 = por %p355, %p356
      %p359 = scmp.ne.s32.totalorder %s342, %s358
      %p360 = scmp.eq.s32.totalorder %s42, 0
      %p361 = por %p359, %p360
      %s362 = ssub.s32 %s43, %s55
      %p363 = scmp.eq.s32.totalorder %s362, 0
      %s365 = sadd.s32 %s364, 1
      %s366 = scalar_select %p363, %s364, %s365
      %p369 = pneg %p363
      %p370 = scmp.eq.s32.totalorder %s36, 3
      %p371 = por %p369, %p370
      %p372 = scmp.ne.s32.totalorder %s364, %s367
      %p373 = scmp.eq.s32.totalorder %s36, 0
      %p374 = por %p372, %p373
      %p375 = scmp.ne.s32.totalorder %s364, %s367
      %p376 = scmp.eq.s32.totalorder %s41, 3
      %p377 = por %p375, %p376
      %p378 = scmp.ne.s32.totalorder %s367, %s368
      %p379 = scmp.eq.s32.totalorder %s41, 0
      %p380 = por %p378, %p379
      %p381 = scmp.ne.s32.totalorder %s367, %s368
      %p382 = scmp.eq.s32.totalorder %s42, 3
      %p383 = por %p381, %p382
      %p385 = scmp.ne.s32.totalorder %s368, %s384
      %p386 = scmp.eq.s32.totalorder %s42, 0
      %p387 = por %p385, %p386
      %p388 = scmp.le.s32.totalorder 1, %s36
      %p389 = scmp.lt.s32.totalorder %s36, 5
      %p390 = pnand %p388, %p389
      %p391 = pneg %p390
      // Predicated region
      $region9: #{tpu_custom_call.1} parent=5 // pred_check
        _
      $region10: #{tpu_custom_call.1} parent=5 // pred_check_branch
        %393 = sbr.rel (%p390) target = $region12
      $region11: #{tpu_custom_call.1} parent=5 // pred_region
        %s394 = ssub.s32 %s36, 1
        // Predicated region
        $region13: #{tpu_custom_call.1} parent=11 // pred_check
          %p395 = pneg %p97
        $region14: #{tpu_custom_call.1} parent=11 // pred_check_branch
          %397 = sbr.rel (%p395) target = $region16
        $region15: #{tpu_custom_call.1} parent=11 // pred_region
          %s399 = ssub.s32 163840, 163840
          %400 = vsyncadd [#allocation7], %s399
          %s401 = sshll.u32 [#allocation6], 4
          %s402 = int_to_ptr.vmem [resolvable:$true] %s401
          %407 = dma.hbm_to_vmem [thread:$0]  %s1, 163840, %s402, [#allocation7], 640, 640, 40
        $region16: #{tpu_custom_call.1} parent=11 // pred_fallthru
          _
        // Predicated region
        $region17: #{tpu_custom_call.1} parent=11 // pred_check
          %p408 = pneg %p118
        $region18: #{tpu_custom_call.1} parent=11 // pred_check_branch
          %410 = sbr.rel (%p408) target = $region20
        $region19: #{tpu_custom_call.1} parent=11 // pred_region
          %s412 = ssub.s32 80, 80
          %413 = vsyncadd [#allocation7], %s412
          %s415 = sshll.u32 [#allocation8], 4
          %s416 = int_to_ptr.vmem [resolvable:$true] %s415
          %418 = dma.hbm_to_vmem [thread:$0]  %s2, 80, %s416, [#allocation7]
        $region20: #{tpu_custom_call.1} parent=11 // pred_fallthru
          _
        // Predicated region
        $region21: #{tpu_custom_call.1} parent=11 // pred_check
          %p419 = pneg %p139
        $region22: #{tpu_custom_call.1} parent=11 // pred_check_branch
          %421 = sbr.rel (%p419) target = $region24
        $region23: #{tpu_custom_call.1} parent=11 // pred_region
          %s423 = ssub.s32 64, 64
          %424 = vsyncadd [#allocation10], %s423
          %s426 = sshll.u32 [#allocation9], 4
          %s427 = int_to_ptr.vmem [resolvable:$true] %s426
          %429 = dma.hbm_to_vmem [thread:$0]  %s3, 64, %s427, [#allocation10]
        $region24: #{tpu_custom_call.1} parent=11 // pred_fallthru
          _
        // Predicated region
        $region25: #{tpu_custom_call.1} parent=11 // pred_check
          %p430 = pneg %p160
        $region26: #{tpu_custom_call.1} parent=11 // pred_check_branch
          %432 = sbr.rel (%p430) target = $region28
        $region27: #{tpu_custom_call.1} parent=11 // pred_region
          %s434 = ssub.s32 64, 64
          %435 = vsyncadd [#allocation10], %s434
          %s437 = sshll.u32 [#allocation11], 4
          %s438 = int_to_ptr.vmem [resolvable:$true] %s437
          %440 = dma.hbm_to_vmem [thread:$0]  %s4, 64, %s438, [#allocation10]
        $region28: #{tpu_custom_call.1} parent=11 // pred_fallthru
          _
        // Predicated region
        $region29: #{tpu_custom_call.1} parent=11 // pred_check
          %p441 = pneg %p181
        $region30: #{tpu_custom_call.1} parent=11 // pred_check_branch
          %443 = sbr.rel (%p441) target = $region32
        $region31: #{tpu_custom_call.1} parent=11 // pred_region
          %s445 = ssub.s32 8192, 8192
          %446 = vsyncadd [#allocation13], %s445
          %s447 = sshll.u32 [#allocation12], 4
          %s448 = int_to_ptr.vmem [resolvable:$true] %s447
          %453 = dma.hbm_to_vmem [thread:$0]  %s5, 8192, %s448, [#allocation13], 128, 128, 8
        $region32: #{tpu_custom_call.1} parent=11 // pred_fallthru
          _
        // Predicated region
        $region33: #{tpu_custom_call.1} parent=11 // pred_check
          %p454 = pneg %p202
        $region34: #{tpu_custom_call.1} parent=11 // pred_check_branch
          %456 = sbr.rel (%p454) target = $region36
        $region35: #{tpu_custom_call.1} parent=11 // pred_region
          %s458 = ssub.s32 16, 16
          %459 = vsyncadd [#allocation13], %s458
          %s461 = sshll.u32 [#allocation14], 4
          %s462 = int_to_ptr.vmem [resolvable:$true] %s461
          %464 = dma.hbm_to_vmem [thread:$0]  %s6, 16, %s462, [#allocation13]
        $region36: #{tpu_custom_call.1} parent=11 // pred_fallthru
          _
        // Predicated region
        $region37: #{tpu_custom_call.1} parent=11 // pred_check
          %p465 = pneg %p223
        $region38: #{tpu_custom_call.1} parent=11 // pred_check_branch
          %467 = sbr.rel (%p465) target = $region40
        $region39: #{tpu_custom_call.1} parent=11 // pred_region
          %s469 = ssub.s32 8192, 8192
          %470 = vsyncadd [#allocation16], %s469
          %s471 = sshll.u32 [#allocation15], 4
          %s472 = int_to_ptr.vmem [resolvable:$true] %s471
          %477 = dma.hbm_to_vmem [thread:$0]  %s7, 8192, %s472, [#allocation16], 512, 512, 32
        $region40: #{tpu_custom_call.1} parent=11 // pred_fallthru
          _
        // Predicated region
        $region41: #{tpu_custom_call.1} parent=11 // pred_check
          %p478 = pneg %p244
        $region42: #{tpu_custom_call.1} parent=11 // pred_check_branch
          %480 = sbr.rel (%p478) target = $region44
        $region43: #{tpu_custom_call.1} parent=11 // pred_region
          %s482 = ssub.s32 64, 64
          %483 = vsyncadd [#allocation16], %s482
          %s485 = sshll.u32 [#allocation17], 4
          %s486 = int_to_ptr.vmem [resolvable:$true] %s485
          %488 = dma.hbm_to_vmem [thread:$0]  %s8, 64, %s486, [#allocation16]
        $region44: #{tpu_custom_call.1} parent=11 // pred_fallthru
          _
        // Predicated region
        $region45: #{tpu_custom_call.1} parent=11 // pred_check
          %p489 = pneg %p265
        $region46: #{tpu_custom_call.1} parent=11 // pred_check_branch
          %491 = sbr.rel (%p489) target = $region48
        $region47: #{tpu_custom_call.1} parent=11 // pred_region
          %s493 = ssub.s32 64, 64
          %494 = vsyncadd [#allocation19], %s493
          %s496 = sshll.u32 [#allocation18], 4
          %s497 = int_to_ptr.vmem [resolvable:$true] %s496
          %499 = dma.hbm_to_vmem [thread:$0]  %s9, 64, %s497, [#allocation19]
        $region48: #{tpu_custom_call.1} parent=11 // pred_fallthru
          _
        // Predicated region
        $region49: #{tpu_custom_call.1} parent=11 // pred_check
          %p500 = pneg %p286
        $region50: #{tpu_custom_call.1} parent=11 // pred_check_branch
          %502 = sbr.rel (%p500) target = $region52
        $region51: #{tpu_custom_call.1} parent=11 // pred_region
          %s504 = ssub.s32 64, 64
          %505 = vsyncadd [#allocation19], %s504
          %s507 = sshll.u32 [#allocation20], 4
          %s508 = int_to_ptr.vmem [resolvable:$true] %s507
          %510 = dma.hbm_to_vmem [thread:$0]  %s10, 64, %s508, [#allocation19]
        $region52: #{tpu_custom_call.1} parent=11 // pred_fallthru
          _
        // Predicated region
        $region53: #{tpu_custom_call.1} parent=11 // pred_check
          %p511 = pneg %p307
        $region54: #{tpu_custom_call.1} parent=11 // pred_check_branch
          %513 = sbr.rel (%p511) target = $region56
        $region55: #{tpu_custom_call.1} parent=11 // pred_region
          %s515 = ssub.s32 8192, 8192
          %516 = vsyncadd [#allocation22], %s515
          %s517 = sshll.u32 [#allocation21], 4
          %s518 = int_to_ptr.vmem [resolvable:$true] %s517
          %523 = dma.hbm_to_vmem [thread:$0]  %s11, 8192, %s518, [#allocation22], 128, 128, 8
        $region56: #{tpu_custom_call.1} parent=11 // pred_fallthru
          _
        // Predicated region
        $region57: #{tpu_custom_call.1} parent=11 // pred_check
          %p524 = pneg %p328
        $region58: #{tpu_custom_call.1} parent=11 // pred_check_branch
          %526 = sbr.rel (%p524) target = $region60
        $region59: #{tpu_custom_call.1} parent=11 // pred_region
          %s528 = ssub.s32 16, 16
          %529 = vsyncadd [#allocation22], %s528
          %s531 = sshll.u32 [#allocation23], 4
          %s532 = int_to_ptr.vmem [resolvable:$true] %s531
          %534 = dma.hbm_to_vmem [thread:$0]  %s12, 16, %s532, [#allocation22]
        $region60: #{tpu_custom_call.1} parent=11 // pred_fallthru
          _
      $region12: #{tpu_custom_call.1} parent=5 // pred_fallthru
        _
      %p535 = scmp.lt.s32.totalorder %s36, 4
      // Predicated region
      $region61: #{tpu_custom_call.1} parent=5 // pred_check
        %p536 = pneg %p535
      $region62: #{tpu_custom_call.1} parent=5 // pred_check_branch
        %538 = sbr.rel (%p536) target = $region64
      $region63: #{tpu_custom_call.1} parent=5 // pred_region
        // Predicated region
        $region65: #{tpu_custom_call.1} parent=63 // pred_check
          %p539 = pneg %p70
        $region66: #{tpu_custom_call.1} parent=63 // pred_check_branch
          %541 = sbr.rel (%p539) target = $region68
        $region67: #{tpu_custom_call.1} parent=63 // pred_region
          %s542 = sand.u32 %s60, 1
          %s543 = scalar_lea.sflag [#allocation4], %s542
          %s544 = sand.u32 %s60, 1
          %s545 = smul.addr %s544, 128
          %s546 = scalar_lea.vmem [#allocation3], %s545
          %s548 = ssub.s32 2048, 2048
          %549 = vsyncadd %s543, %s548
          %s550 = smul.addr %s44, 16
          %s551 = smul.addr %s43, 64
          %s552 = sadd.s32 %s550, %s551
          %s553 = smul.addr %s552, 64
          %s554 = scalar_lea.hbm %s0, %s553
          %s555 = sshll.u32 %s546, 4
          %s556 = int_to_ptr.vmem [resolvable:$true] %s555
          %561 = dma.hbm_to_vmem [thread:$0]  %s554, 2048, %s556, %s543, 2048, 1024, 64
        $region68: #{tpu_custom_call.1} parent=63 // pred_fallthru
          _
      $region64: #{tpu_custom_call.1} parent=5 // pred_fallthru
        _
      %p562 = scmp.le.s32.totalorder 1, %s36
      %p563 = scmp.lt.s32.totalorder %s36, 5
      %p564 = pnand %p562, %p563
      %p565 = pneg %p564
      // Predicated region
      $region69: #{tpu_custom_call.1} parent=5 // pred_check
        _
      $region70: #{tpu_custom_call.1} parent=5 // pred_check_branch
        %567 = sbr.rel (%p564) target = $region72
      $region71: #{tpu_custom_call.1} parent=5 // pred_region
        %s568 = ssub.s32 %s36, 1
        %s569 = sand.u32 %s63, 1
        %s570 = scalar_lea.sflag [#allocation4], %s569
        %s571 = sand.u32 %s63, 1
        %s572 = smul.addr %s571, 128
        %s573 = scalar_lea.vmem [#allocation3], %s572
        // Predicated region
        $region73: #{tpu_custom_call.1} parent=71 // pred_check
          %p574 = pneg %p76
        $region74: #{tpu_custom_call.1} parent=71 // pred_check_branch
          %576 = sbr.rel (%p574) target = $region76
        $region75: #{tpu_custom_call.1} parent=71 // pred_region
          %577 = dma.done %s570, 2048
        $region76: #{tpu_custom_call.1} parent=71 // pred_fallthru
          _
        // Predicated region
        $region77: #{tpu_custom_call.1} parent=71 // pred_check
          %p578 = pneg %p97
        $region78: #{tpu_custom_call.1} parent=71 // pred_check_branch
          %580 = sbr.rel (%p578) target = $region80
        $region79: #{tpu_custom_call.1} parent=71 // pred_region
          %581 = dma.done [#allocation7], 163840
        $region80: #{tpu_custom_call.1} parent=71 // pred_fallthru
          _
        // Predicated region
        $region81: #{tpu_custom_call.1} parent=71 // pred_check
          %p582 = pneg %p118
        $region82: #{tpu_custom_call.1} parent=71 // pred_check_branch
          %584 = sbr.rel (%p582) target = $region84
        $region83: #{tpu_custom_call.1} parent=71 // pred_region
          %585 = dma.done [#allocation7], 80
        $region84: #{tpu_custom_call.1} parent=71 // pred_fallthru
          _
        // Predicated region
        $region85: #{tpu_custom_call.1} parent=71 // pred_check
          %p586 = pneg %p139
        $region86: #{tpu_custom_call.1} parent=71 // pred_check_branch
          %588 = sbr.rel (%p586) target = $region88
        $region87: #{tpu_custom_call.1} parent=71 // pred_region
          %589 = dma.done [#allocation10], 64
        $region88: #{tpu_custom_call.1} parent=71 // pred_fallthru
          _
        // Predicated region
        $region89: #{tpu_custom_call.1} parent=71 // pred_check
          %p590 = pneg %p160
        $region90: #{tpu_custom_call.1} parent=71 // pred_check_branch
          %592 = sbr.rel (%p590) target = $region92
        $region91: #{tpu_custom_call.1} parent=71 // pred_region
          %593 = dma.done [#allocation10], 64
        $region92: #{tpu_custom_call.1} parent=71 // pred_fallthru
          _
        // Predicated region
        $region93: #{tpu_custom_call.1} parent=71 // pred_check
          %p594 = pneg %p181
        $region94: #{tpu_custom_call.1} parent=71 // pred_check_branch
          %596 = sbr.rel (%p594) target = $region96
        $region95: #{tpu_custom_call.1} parent=71 // pred_region
          %597 = dma.done [#allocation13], 8192
        $region96: #{tpu_custom_call.1} parent=71 // pred_fallthru
          _
        // Predicated region
        $region97: #{tpu_custom_call.1} parent=71 // pred_check
          %p598 = pneg %p202
        $region98: #{tpu_custom_call.1} parent=71 // pred_check_branch
          %600 = sbr.rel (%p598) target = $region100
        $region99: #{tpu_custom_call.1} parent=71 // pred_region
          %601 = dma.done [#allocation13], 16
        $region100: #{tpu_custom_call.1} parent=71 // pred_fallthru
          _
        // Predicated region
        $region101: #{tpu_custom_call.1} parent=71 // pred_check
          %p602 = pneg %p223
        $region102: #{tpu_custom_call.1} parent=71 // pred_check_branch
          %604 = sbr.rel (%p602) target = $region104
        $region103: #{tpu_custom_call.1} parent=71 // pred_region
          %605 = dma.done [#allocation16], 8192
        $region104: #{tpu_custom_call.1} parent=71 // pred_fallthru
          _
        // Predicated region
        $region105: #{tpu_custom_call.1} parent=71 // pred_check
          %p606 = pneg %p244
        $region106: #{tpu_custom_call.1} parent=71 // pred_check_branch
          %608 = sbr.rel (%p606) target = $region108
        $region107: #{tpu_custom_call.1} parent=71 // pred_region
          %609 = dma.done [#allocation16], 64
        $region108: #{tpu_custom_call.1} parent=71 // pred_fallthru
          _
        // Predicated region
        $region109: #{tpu_custom_call.1} parent=71 // pred_check
          %p610 = pneg %p265
        $region110: #{tpu_custom_call.1} parent=71 // pred_check_branch
          %612 = sbr.rel (%p610) target = $region112
        $region111: #{tpu_custom_call.1} parent=71 // pred_region
          %613 = dma.done [#allocation19], 64
        $region112: #{tpu_custom_call.1} parent=71 // pred_fallthru
          _
        // Predicated region
        $region113: #{tpu_custom_call.1} parent=71 // pred_check
          %p614 = pneg %p286
        $region114: #{tpu_custom_call.1} parent=71 // pred_check_branch
          %616 = sbr.rel (%p614) target = $region116
        $region115: #{tpu_custom_call.1} parent=71 // pred_region
          %617 = dma.done [#allocation19], 64
        $region116: #{tpu_custom_call.1} parent=71 // pred_fallthru
          _
        // Predicated region
        $region117: #{tpu_custom_call.1} parent=71 // pred_check
          %p618 = pneg %p307
        $region118: #{tpu_custom_call.1} parent=71 // pred_check_branch
          %620 = sbr.rel (%p618) target = $region120
        $region119: #{tpu_custom_call.1} parent=71 // pred_region
          %621 = dma.done [#allocation22], 8192
        $region120: #{tpu_custom_call.1} parent=71 // pred_fallthru
          _
        // Predicated region
        $region121: #{tpu_custom_call.1} parent=71 // pred_check
          %p622 = pneg %p328
        $region122: #{tpu_custom_call.1} parent=71 // pred_check_branch
          %624 = sbr.rel (%p622) target = $region124
        $region123: #{tpu_custom_call.1} parent=71 // pred_region
          %625 = dma.done [#allocation22], 16
        $region124: #{tpu_custom_call.1} parent=71 // pred_fallthru
          _
        %s626 = sand.u32 %s63, 1
        %s627 = scalar_lea.sflag [#allocation4], %s626
        %s628 = sand.u32 %s63, 1
        %s629 = smul.addr %s628, 128
        %s630 = scalar_lea.vmem [#allocation3], %s629
        %p631 = pneg %p76
        %p632 = pneg %p73
        %p633 = pneg %p97
        %p634 = pneg %p94
        %p635 = pneg %p118
        %p636 = pneg %p115
        %p637 = pneg %p139
        %p638 = pneg %p136
        %p639 = pneg %p160
        %p640 = pneg %p157
        %p641 = pneg %p181
        %p642 = pneg %p178
        %p643 = pneg %p202
        %p644 = pneg %p199
        %p645 = pneg %p223
        %p646 = pneg %p220
        %p647 = pneg %p244
        %p648 = pneg %p241
        %p649 = pneg %p265
        %p650 = pneg %p262
        %p651 = pneg %p286
        %p652 = pneg %p283
        %p653 = pneg %p307
        %p654 = pneg %p304
        %p655 = pneg %p328
        %p656 = pneg %p325
        %p657 = pneg %p354
        %p658 = pneg %p351
        %s659 = sand.u32 %s341, 1
        %s660 = scalar_lea.sflag [#allocation5], %s659
        %s661 = sand.u32 %s341, 1
        %s662 = smul.addr %s661, 2
        %s663 = scalar_lea.vmem [#allocation24], %s662
        %p664 = pneg %p380
        %p665 = pneg %p377
        %s666 = sand.u32 %s367, 1
        %s667 = scalar_lea.sflag [#allocation26], %s666
        %s668 = sand.u32 %s367, 1
        %s669 = smul.addr %s668, 2
        %s670 = scalar_lea.vmem [#allocation25], %s669
        %p671 = scmp.eq.s32.totalorder %s46, 0
        // Predicated region
        $region125: #{tpu_custom_call.1} parent=71 // pred_check
          %p672 = pneg %p671
        $region126: #{tpu_custom_call.1} parent=71 // pred_check_branch
          %674 = sbr.rel (%p672) target = $region128
        $region127: #{tpu_custom_call.1} parent=71 // pred_region
          %675 = vst [vmem:[#allocation2] sm:$0xff] 0.0
          %676 = vst [vmem:[#allocation2 + $0x8] sm:$0xff] 0.0
          %677 = vst [vmem:[#allocation2 + $0x10] sm:$0xff] 0.0
          %678 = vst [vmem:[#allocation2 + $0x18] sm:$0xff] 0.0
        $region128: #{tpu_custom_call.1} parent=71 // pred_fallthru
          _
        %v679 = vld [vmem:[#allocation2] sm:$0xff]
        %v680 = vld [vmem:[#allocation2 + $0x8] sm:$0xff]
        %v681 = vld [vmem:[#allocation2 + $0x10] sm:$0xff]
        %v682 = vld [vmem:[#allocation2 + $0x18] sm:$0xff]
        %v683 = vld [vmem:[%s573] sm:$0xff]
        %v684 = vld [vmem:[%s573 + $0x8] sm:$0xff]
        %v685 = vld [vmem:[%s573 + $0x10] sm:$0xff]
        %v686 = vld [vmem:[%s573 + $0x18] sm:$0xff]
        %v687 = vld [vmem:[%s573 + $0x20] sm:$0xff]
        %v688 = vld [vmem:[%s573 + $0x28] sm:$0xff]
        %v689 = vld [vmem:[%s573 + $0x30] sm:$0xff]
        %v690 = vld [vmem:[%s573 + $0x38] sm:$0xff]
        %v691 = vld [vmem:[%s573 + $0x40] sm:$0xff]
        %v692 = vld [vmem:[%s573 + $0x48] sm:$0xff]
        %v693 = vld [vmem:[%s573 + $0x50] sm:$0xff]
        %v694 = vld [vmem:[%s573 + $0x58] sm:$0xff]
        %v695 = vld [vmem:[%s573 + $0x60] sm:$0xff]
        %v696 = vld [vmem:[%s573 + $0x68] sm:$0xff]
        %v697 = vld [vmem:[%s573 + $0x70] sm:$0xff]
        %v698 = vld [vmem:[%s573 + $0x78] sm:$0xff]
        %v699 = vunpack.c.l.bf16 %v683
        %v700 = vunpack.c.h.bf16 %v683
        %v701 = vunpack.c.l.bf16 %v684
        %v702 = vunpack.c.h.bf16 %v684
        %v703 = vunpack.c.l.bf16 %v685
        %v704 = vunpack.c.h.bf16 %v685
        %v705 = vunpack.c.l.bf16 %v686
        %v706 = vunpack.c.h.bf16 %v686
        %v707 = vunpack.c.l.bf16 %v687
        %v708 = vunpack.c.h.bf16 %v687
        %v709 = vunpack.c.l.bf16 %v688
        %v710 = vunpack.c.h.bf16 %v688
        %v711 = vunpack.c.l.bf16 %v689
        %v712 = vunpack.c.h.bf16 %v689
        %v713 = vunpack.c.l.bf16 %v690
        %v714 = vunpack.c.h.bf16 %v690
        %v715 = vunpack.c.l.bf16 %v691
        %v716 = vunpack.c.h.bf16 %v691
        %v717 = vunpack.c.l.bf16 %v692
        %v718 = vunpack.c.h.bf16 %v692
        %v719 = vunpack.c.l.bf16 %v693
        %v720 = vunpack.c.h.bf16 %v693
        %v721 = vunpack.c.l.bf16 %v694
        %v722 = vunpack.c.h.bf16 %v694
        %v723 = vunpack.c.l.bf16 %v695
        %v724 = vunpack.c.h.bf16 %v695
        %v725 = vunpack.c.l.bf16 %v696
        %v726 = vunpack.c.h.bf16 %v696
        %v727 = vunpack.c.l.bf16 %v697
        %v728 = vunpack.c.h.bf16 %v697
        %v729 = vunpack.c.l.bf16 %v698
        %v730 = vunpack.c.h.bf16 %v698
        %v731 = vrot.slane %v699, 4
        %v732 = vadd.f32 %v699, %v731
        %v733 = vrot.slane %v732, 2
        %v734 = vadd.f32 %v732, %v733
        %v735 = vrot.slane %v734, 1
        %v736 = vadd.f32 %v734, %v735
        %v737 = vrot.slane %v700, 4
        %v738 = vadd.f32 %v700, %v737
        %v739 = vrot.slane %v738, 2
        %v740 = vadd.f32 %v738, %v739
        %v741 = vrot.slane %v740, 1
        %v742 = vadd.f32 %v740, %v741
        %v743 = vrot.slane %v701, 4
        %v744 = vadd.f32 %v701, %v743
        %v745 = vrot.slane %v744, 2
        %v746 = vadd.f32 %v744, %v745
        %v747 = vrot.slane %v746, 1
        %v748 = vadd.f32 %v746, %v747
        %v749 = vrot.slane %v702, 4
        %v750 = vadd.f32 %v702, %v749
        %v751 = vrot.slane %v750, 2
        %v752 = vadd.f32 %v750, %v751
        %v753 = vrot.slane %v752, 1
        %v754 = vadd.f32 %v752, %v753
        %v755 = vrot.slane %v703, 4
        %v756 = vadd.f32 %v703, %v755
        %v757 = vrot.slane %v756, 2
        %v758 = vadd.f32 %v756, %v757
        %v759 = vrot.slane %v758, 1
        %v760 = vadd.f32 %v758, %v759
        %v761 = vrot.slane %v704, 4
        %v762 = vadd.f32 %v704, %v761
        %v763 = vrot.slane %v762, 2
        %v764 = vadd.f32 %v762, %v763
        %v765 = vrot.slane %v764, 1
        %v766 = vadd.f32 %v764, %v765
        %v767 = vrot.slane %v705, 4
        %v768 = vadd.f32 %v705, %v767
        %v769 = vrot.slane %v768, 2
        %v770 = vadd.f32 %v768, %v769
        %v771 = vrot.slane %v770, 1
        %v772 = vadd.f32 %v770, %v771
        %v773 = vrot.slane %v706, 4
        %v774 = vadd.f32 %v706, %v773
        %v775 = vrot.slane %v774, 2
        %v776 = vadd.f32 %v774, %v775
        %v777 = vrot.slane %v776, 1
        %v778 = vadd.f32 %v776, %v777
        %v779 = vrot.slane %v707, 4
        %v780 = vadd.f32 %v707, %v779
        %v781 = vrot.slane %v780, 2
        %v782 = vadd.f32 %v780, %v781
        %v783 = vrot.slane %v782, 1
        %v784 = vadd.f32 %v782, %v783
        %v785 = vrot.slane %v708, 4
        %v786 = vadd.f32 %v708, %v785
        %v787 = vrot.slane %v786, 2
        %v788 = vadd.f32 %v786, %v787
        %v789 = vrot.slane %v788, 1
        %v790 = vadd.f32 %v788, %v789
        %v791 = vrot.slane %v709, 4
        %v792 = vadd.f32 %v709, %v791
        %v793 = vrot.slane %v792, 2
        %v794 = vadd.f32 %v792, %v793
        %v795 = vrot.slane %v794, 1
        %v796 = vadd.f32 %v794, %v795
        %v797 = vrot.slane %v710, 4
        %v798 = vadd.f32 %v710, %v797
        %v799 = vrot.slane %v798, 2
        %v800 = vadd.f32 %v798, %v799
        %v801 = vrot.slane %v800, 1
        %v802 = vadd.f32 %v800, %v801
        %v803 = vrot.slane %v711, 4
        %v804 = vadd.f32 %v711, %v803
        %v805 = vrot.slane %v804, 2
        %v806 = vadd.f32 %v804, %v805
        %v807 = vrot.slane %v806, 1
        %v808 = vadd.f32 %v806, %v807
        %v809 = vrot.slane %v712, 4
        %v810 = vadd.f32 %v712, %v809
        %v811 = vrot.slane %v810, 2
        %v812 = vadd.f32 %v810, %v811
        %v813 = vrot.slane %v812, 1
        %v814 = vadd.f32 %v812, %v813
        %v815 = vrot.slane %v713, 4
        %v816 = vadd.f32 %v713, %v815
        %v817 = vrot.slane %v816, 2
        %v818 = vadd.f32 %v816, %v817
        %v819 = vrot.slane %v818, 1
        %v820 = vadd.f32 %v818, %v819
        %v821 = vrot.slane %v714, 4
        %v822 = vadd.f32 %v714, %v821
        %v823 = vrot.slane %v822, 2
        %v824 = vadd.f32 %v822, %v823
        %v825 = vrot.slane %v824, 1
        %v826 = vadd.f32 %v824, %v825
        %v827 = vrot.slane %v715, 4
        %v828 = vadd.f32 %v715, %v827
        %v829 = vrot.slane %v828, 2
        %v830 = vadd.f32 %v828, %v829
        %v831 = vrot.slane %v830, 1
        %v832 = vadd.f32 %v830, %v831
        %v833 = vrot.slane %v716, 4
        %v834 = vadd.f32 %v716, %v833
        %v835 = vrot.slane %v834, 2
        %v836 = vadd.f32 %v834, %v835
        %v837 = vrot.slane %v836, 1
        %v838 = vadd.f32 %v836, %v837
        %v839 = vrot.slane %v717, 4
        %v840 = vadd.f32 %v717, %v839
        %v841 = vrot.slane %v840, 2
        %v842 = vadd.f32 %v840, %v841
        %v843 = vrot.slane %v842, 1
        %v844 = vadd.f32 %v842, %v843
        %v845 = vrot.slane %v718, 4
        %v846 = vadd.f32 %v718, %v845
        %v847 = vrot.slane %v846, 2
        %v848 = vadd.f32 %v846, %v847
        %v849 = vrot.slane %v848, 1
        %v850 = vadd.f32 %v848, %v849
        %v851 = vrot.slane %v719, 4
        %v852 = vadd.f32 %v719, %v851
        %v853 = vrot.slane %v852, 2
        %v854 = vadd.f32 %v852, %v853
        %v855 = vrot.slane %v854, 1
        %v856 = vadd.f32 %v854, %v855
        %v857 = vrot.slane %v720, 4
        %v858 = vadd.f32 %v720, %v857
        %v859 = vrot.slane %v858, 2
        %v860 = vadd.f32 %v858, %v859
        %v861 = vrot.slane %v860, 1
        %v862 = vadd.f32 %v860, %v861
        %v863 = vrot.slane %v721, 4
        %v864 = vadd.f32 %v721, %v863
        %v865 = vrot.slane %v864, 2
        %v866 = vadd.f32 %v864, %v865
        %v867 = vrot.slane %v866, 1
        %v868 = vadd.f32 %v866, %v867
        %v869 = vrot.slane %v722, 4
        %v870 = vadd.f32 %v722, %v869
        %v871 = vrot.slane %v870, 2
        %v872 = vadd.f32 %v870, %v871
        %v873 = vrot.slane %v872, 1
        %v874 = vadd.f32 %v872, %v873
        %v875 = vrot.slane %v723, 4
        %v876 = vadd.f32 %v723, %v875
        %v877 = vrot.slane %v876, 2
        %v878 = vadd.f32 %v876, %v877
        %v879 = vrot.slane %v878, 1
        %v880 = vadd.f32 %v878, %v879
        %v881 = vrot.slane %v724, 4
        %v882 = vadd.f32 %v724, %v881
        %v883 = vrot.slane %v882, 2
        %v884 = vadd.f32 %v882, %v883
        %v885 = vrot.slane %v884, 1
        %v886 = vadd.f32 %v884, %v885
        %v887 = vrot.slane %v725, 4
        %v888 = vadd.f32 %v725, %v887
        %v889 = vrot.slane %v888, 2
        %v890 = vadd.f32 %v888, %v889
        %v891 = vrot.slane %v890, 1
        %v892 = vadd.f32 %v890, %v891
        %v893 = vrot.slane %v726, 4
        %v894 = vadd.f32 %v726, %v893
        %v895 = vrot.slane %v894, 2
        %v896 = vadd.f32 %v894, %v895
        %v897 = vrot.slane %v896, 1
        %v898 = vadd.f32 %v896, %v897
        %v899 = vrot.slane %v727, 4
        %v900 = vadd.f32 %v727, %v899
        %v901 = vrot.slane %v900, 2
        %v902 = vadd.f32 %v900, %v901
        %v903 = vrot.slane %v902, 1
        %v904 = vadd.f32 %v902, %v903
        %v905 = vrot.slane %v728, 4
        %v906 = vadd.f32 %v728, %v905
        %v907 = vrot.slane %v906, 2
        %v908 = vadd.f32 %v906, %v907
        %v909 = vrot.slane %v908, 1
        %v910 = vadd.f32 %v908, %v909
        %v911 = vrot.slane %v729, 4
        %v912 = vadd.f32 %v729, %v911
        %v913 = vrot.slane %v912, 2
        %v914 = vadd.f32 %v912, %v913
        %v915 = vrot.slane %v914, 1
        %v916 = vadd.f32 %v914, %v915
        %v917 = vrot.slane %v730, 4
        %v918 = vadd.f32 %v730, %v917
        %v919 = vrot.slane %v918, 2
        %v920 = vadd.f32 %v918, %v919
        %v921 = vrot.slane %v920, 1
        %v922 = vadd.f32 %v920, %v921
        %v955 = vcombine.low %v736, %v742
        %v956 = vcombine.low %v748, %v754
        %v958 = vunpack.c.l.s4 1983009808
        %v959 = vunpack.c.0.s8 %v958
        %v960 = vlaneseq
        %v961 = vshrl.u32 %v960, 7
        %v962 = vsub.s32 %v959, %v961
        %v963 = vrot.slane %v955, %v962
        %v965 = vunpack.c.l.s4 1983009808
        %v966 = vunpack.c.0.s8 %v965
        %v967 = vlaneseq
        %v968 = vshrl.u32 %v967, 7
        %v969 = vsub.s32 %v966, %v968
        %v970 = vrot.slane %v956, %v969
        %v971 = vcombine.low %v963, %v970
        %v972 = vcombine.low %v760, %v766
        %v973 = vcombine.low %v772, %v778
        %v975 = vunpack.c.l.s4 1983009808
        %v976 = vunpack.c.0.s8 %v975
        %v977 = vlaneseq
        %v978 = vshrl.u32 %v977, 7
        %v979 = vsub.s32 %v976, %v978
        %v980 = vrot.slane %v972, %v979
        %v982 = vunpack.c.l.s4 1983009808
        %v983 = vunpack.c.0.s8 %v982
        %v984 = vlaneseq
        %v985 = vshrl.u32 %v984, 7
        %v986 = vsub.s32 %v983, %v985
        %v987 = vrot.slane %v973, %v986
        %v988 = vcombine.low %v980, %v987
        %v989 = vcombine.low %v784, %v790
        %v990 = vcombine.low %v796, %v802
        %v992 = vunpack.c.l.s4 1983009808
        %v993 = vunpack.c.0.s8 %v992
        %v994 = vlaneseq
        %v995 = vshrl.u32 %v994, 7
        %v996 = vsub.s32 %v993, %v995
        %v997 = vrot.slane %v989, %v996
        %v999 = vunpack.c.l.s4 1983009808
        %v1000 = vunpack.c.0.s8 %v999
        %v1001 = vlaneseq
        %v1002 = vshrl.u32 %v1001, 7
        %v1003 = vsub.s32 %v1000, %v1002
        %v1004 = vrot.slane %v990, %v1003
        %v1005 = vcombine.low %v997, %v1004
        %v1006 = vcombine.low %v808, %v814
        %v1007 = vcombine.low %v820, %v826
        %v1009 = vunpack.c.l.s4 1983009808
        %v1010 = vunpack.c.0.s8 %v1009
        %v1011 = vlaneseq
        %v1012 = vshrl.u32 %v1011, 7
        %v1013 = vsub.s32 %v1010, %v1012
        %v1014 = vrot.slane %v1006, %v1013
        %v1016 = vunpack.c.l.s4 1983009808
        %v1017 = vunpack.c.0.s8 %v1016
        %v1018 = vlaneseq
        %v1019 = vshrl.u32 %v1018, 7
        %v1020 = vsub.s32 %v1017, %v1019
        %v1021 = vrot.slane %v1007, %v1020
        %v1022 = vcombine.low %v1014, %v1021
        %v1023 = vcombine.low %v832, %v838
        %v1024 = vcombine.low %v844, %v850
        %v1026 = vunpack.c.l.s4 1983009808
        %v1027 = vunpack.c.0.s8 %v1026
        %v1028 = vlaneseq
        %v1029 = vshrl.u32 %v1028, 7
        %v1030 = vsub.s32 %v1027, %v1029
        %v1031 = vrot.slane %v1023, %v1030
        %v1033 = vunpack.c.l.s4 1983009808
        %v1034 = vunpack.c.0.s8 %v1033
        %v1035 = vlaneseq
        %v1036 = vshrl.u32 %v1035, 7
        %v1037 = vsub.s32 %v1034, %v1036
        %v1038 = vrot.slane %v1024, %v1037
        %v1039 = vcombine.low %v1031, %v1038
        %v1040 = vcombine.low %v856, %v862
        %v1041 = vcombine.low %v868, %v874
        %v1043 = vunpack.c.l.s4 1983009808
        %v1044 = vunpack.c.0.s8 %v1043
        %v1045 = vlaneseq
        %v1046 = vshrl.u32 %v1045, 7
        %v1047 = vsub.s32 %v1044, %v1046
        %v1048 = vrot.slane %v1040, %v1047
        %v1050 = vunpack.c.l.s4 1983009808
        %v1051 = vunpack.c.0.s8 %v1050
        %v1052 = vlaneseq
        %v1053 = vshrl.u32 %v1052, 7
        %v1054 = vsub.s32 %v1051, %v1053
        %v1055 = vrot.slane %v1041, %v1054
        %v1056 = vcombine.low %v1048, %v1055
        %v1057 = vcombine.low %v880, %v886
        %v1058 = vcombine.low %v892, %v898
        %v1060 = vunpack.c.l.s4 1983009808
        %v1061 = vunpack.c.0.s8 %v1060
        %v1062 = vlaneseq
        %v1063 = vshrl.u32 %v1062, 7
        %v1064 = vsub.s32 %v1061, %v1063
        %v1065 = vrot.slane %v1057, %v1064
        %v1067 = vunpack.c.l.s4 1983009808
        %v1068 = vunpack.c.0.s8 %v1067
        %v1069 = vlaneseq
        %v1070 = vshrl.u32 %v1069, 7
        %v1071 = vsub.s32 %v1068, %v1070
        %v1072 = vrot.slane %v1058, %v1071
        %v1073 = vcombine.low %v1065, %v1072
        %v1074 = vcombine.low %v904, %v910
        %v1075 = vcombine.low %v916, %v922
        %v1077 = vunpack.c.l.s4 1983009808
        %v1078 = vunpack.c.0.s8 %v1077
        %v1079 = vlaneseq
        %v1080 = vshrl.u32 %v1079, 7
        %v1081 = vsub.s32 %v1078, %v1080
        %v1082 = vrot.slane %v1074, %v1081
        %v1084 = vunpack.c.l.s4 1983009808
        %v1085 = vunpack.c.0.s8 %v1084
        %v1086 = vlaneseq
        %v1087 = vshrl.u32 %v1086, 7
        %v1088 = vsub.s32 %v1085, %v1087
        %v1089 = vrot.slane %v1075, %v1088
        %v1090 = vcombine.low %v1082, %v1089
        %vm1091 = vcmask 1044484
        %v1092 = vsel %vm1091, %v971, %v971
        %vm1093 = vcmask 1046534
        %v1094 = vsel %vm1093, %v971, %v1092
        %v1095 = vrot.slane %v1039, 7
        %vm1096 = vcmask 1041409
        %v1097 = vsel %vm1096, %v1095, %v1094
        %vm1098 = vcmask 1043459
        %v1099 = vsel %vm1098, %v1095, %v1097
        %vm1100 = vcmask 1045509
        %v1101 = vsel %vm1100, %v1095, %v1099
        %vm1102 = vcmask 1047559
        %v1103 = vsel %vm1102, %v1095, %v1101
        %v1104 = vsel %vm1091, %v988, %v988
        %v1105 = vsel %vm1093, %v988, %v1104
        %v1106 = vrot.slane %v1056, 7
        %v1107 = vsel %vm1096, %v1106, %v1105
        %v1108 = vsel %vm1098, %v1106, %v1107
        %v1109 = vsel %vm1100, %v1106, %v1108
        %v1110 = vsel %vm1102, %v1106, %v1109
        %v1111 = vsel %vm1091, %v1005, %v1005
        %v1112 = vsel %vm1093, %v1005, %v1111
        %v1113 = vrot.slane %v1073, 7
        %v1114 = vsel %vm1096, %v1113, %v1112
        %v1115 = vsel %vm1098, %v1113, %v1114
        %v1116 = vsel %vm1100, %v1113, %v1115
        %v1117 = vsel %vm1102, %v1113, %v1116
        %v1118 = vsel %vm1091, %v1022, %v1022
        %v1119 = vsel %vm1093, %v1022, %v1118
        %v1120 = vrot.slane %v1090, 7
        %v1121 = vsel %vm1096, %v1120, %v1119
        %v1122 = vsel %vm1098, %v1120, %v1121
        %v1123 = vsel %vm1100, %v1120, %v1122
        %v1124 = vsel %vm1102, %v1120, %v1123
        %v1129 = vadd.f32 %v679, %v1103
        %v1130 = vadd.f32 %v680, %v1110
        %v1131 = vadd.f32 %v681, %v1117
        %v1132 = vadd.f32 %v682, %v1124
        %1133 = vst [vmem:[#allocation2] sm:$0xff] %v1129
        %1134 = vst [vmem:[#allocation2 + $0x8] sm:$0xff] %v1130
        %1135 = vst [vmem:[#allocation2 + $0x10] sm:$0xff] %v1131
        %1136 = vst [vmem:[#allocation2 + $0x18] sm:$0xff] %v1132
        %p1137 = scmp.eq.s32.totalorder %s46, 1
        // Predicated region
        $region129: #{tpu_custom_call.1} parent=71 // pred_check
          %p1138 = pneg %p1137
        $region130: #{tpu_custom_call.1} parent=71 // pred_check_branch
          %1140 = sbr.rel (%p1138) target = $region132
        $region131: #{tpu_custom_call.1} parent=71 // pred_region
          %v1141 = vld [vmem:[#allocation2] sm:$0xff]
          %v1142 = vld [vmem:[#allocation2 + $0x8] sm:$0xff]
          %v1143 = vld [vmem:[#allocation2 + $0x10] sm:$0xff]
          %v1144 = vld [vmem:[#allocation2 + $0x18] sm:$0xff]
          %v1145 = vmul.f32 %v1141, 0.0625
          %v1146 = vmul.f32 %v1142, 0.0625
          %v1147 = vmul.f32 %v1143, 0.0625
          %v1148 = vmul.f32 %v1144, 0.0625
          %v1149 = vld [vmem:[#allocation6] sm:$0xff]
          %v1150 = vld [vmem:[#allocation6 + $0x8] sm:$0xff]
          %v1151 = vld [vmem:[#allocation6 + $0x10] sm:$0xff]
          %v1152 = vld [vmem:[#allocation6 + $0x18] sm:$0xff]
          %v1153 = vld [vmem:[#allocation6 + $0x20] sm:$0xff]
          %v1154 = vld [vmem:[#allocation6 + $0x28] sm:$0xff]
          %v1155 = vld [vmem:[#allocation6 + $0x30] sm:$0xff]
          %v1156 = vld [vmem:[#allocation6 + $0x38] sm:$0xff]
          %v1157 = vld [vmem:[#allocation6 + $0x40] sm:$0xff]
          %v1158 = vld [vmem:[#allocation6 + $0x48] sm:$0xff]
          %v1159 = vld [vmem:[#allocation6 + $0x50] sm:$0xff]
          %v1160 = vld [vmem:[#allocation6 + $0x58] sm:$0xff]
          %v1161 = vld [vmem:[#allocation6 + $0x60] sm:$0xff]
          %v1162 = vld [vmem:[#allocation6 + $0x68] sm:$0xff]
          %v1163 = vld [vmem:[#allocation6 + $0x70] sm:$0xff]
          %v1164 = vld [vmem:[#allocation6 + $0x78] sm:$0xff]
          %v1165 = vld [vmem:[#allocation6 + $0x80] sm:$0xff]
          %v1166 = vld [vmem:[#allocation6 + $0x88] sm:$0xff]
          %v1167 = vld [vmem:[#allocation6 + $0x90] sm:$0xff]
          %v1168 = vld [vmem:[#allocation6 + $0x98] sm:$0xff]
          %v1169 = vld [vmem:[#allocation6 + $0xa0] sm:$0xff]
          %v1170 = vld [vmem:[#allocation6 + $0xa8] sm:$0xff]
          %v1171 = vld [vmem:[#allocation6 + $0xb0] sm:$0xff]
          %v1172 = vld [vmem:[#allocation6 + $0xb8] sm:$0xff]
          %v1173 = vld [vmem:[#allocation6 + $0xc0] sm:$0xff]
          %v1174 = vld [vmem:[#allocation6 + $0xc8] sm:$0xff]
          %v1175 = vld [vmem:[#allocation6 + $0xd0] sm:$0xff]
          %v1176 = vld [vmem:[#allocation6 + $0xd8] sm:$0xff]
          %v1177 = vld [vmem:[#allocation6 + $0xe0] sm:$0xff]
          %v1178 = vld [vmem:[#allocation6 + $0xe8] sm:$0xff]
          %v1179 = vld [vmem:[#allocation6 + $0xf0] sm:$0xff]
          %v1180 = vld [vmem:[#allocation6 + $0xf8] sm:$0xff]
          %v1181 = vld [vmem:[#allocation6 + $0x100] sm:$0xff]
          %v1182 = vld [vmem:[#allocation6 + $0x108] sm:$0xff]
          %v1183 = vld [vmem:[#allocation6 + $0x110] sm:$0xff]
          %v1184 = vld [vmem:[#allocation6 + $0x118] sm:$0xff]
          %v1185 = vld [vmem:[#allocation6 + $0x120] sm:$0xff]
          %v1186 = vld [vmem:[#allocation6 + $0x128] sm:$0xff]
          %v1187 = vld [vmem:[#allocation6 + $0x130] sm:$0xff]
          %v1188 = vld [vmem:[#allocation6 + $0x138] sm:$0xff]
          %v1189 = vld [vmem:[#allocation6 + $0x140] sm:$0xff]
          %v1190 = vld [vmem:[#allocation6 + $0x148] sm:$0xff]
          %v1191 = vld [vmem:[#allocation6 + $0x150] sm:$0xff]
          %v1192 = vld [vmem:[#allocation6 + $0x158] sm:$0xff]
          %v1193 = vld [vmem:[#allocation6 + $0x160] sm:$0xff]
          %v1194 = vld [vmem:[#allocation6 + $0x168] sm:$0xff]
          %v1195 = vld [vmem:[#allocation6 + $0x170] sm:$0xff]
          %v1196 = vld [vmem:[#allocation6 + $0x178] sm:$0xff]
          %v1197 = vld [vmem:[#allocation6 + $0x180] sm:$0xff]
          %v1198 = vld [vmem:[#allocation6 + $0x188] sm:$0xff]
          %v1199 = vld [vmem:[#allocation6 + $0x190] sm:$0xff]
          %v1200 = vld [vmem:[#allocation6 + $0x198] sm:$0xff]
          %v1201 = vld [vmem:[#allocation6 + $0x1a0] sm:$0xff]
          %v1202 = vld [vmem:[#allocation6 + $0x1a8] sm:$0xff]
          %v1203 = vld [vmem:[#allocation6 + $0x1b0] sm:$0xff]
          %v1204 = vld [vmem:[#allocation6 + $0x1b8] sm:$0xff]
          %v1205 = vld [vmem:[#allocation6 + $0x1c0] sm:$0xff]
          %v1206 = vld [vmem:[#allocation6 + $0x1c8] sm:$0xff]
          %v1207 = vld [vmem:[#allocation6 + $0x1d0] sm:$0xff]
          %v1208 = vld [vmem:[#allocation6 + $0x1d8] sm:$0xff]
          %v1209 = vld [vmem:[#allocation6 + $0x1e0] sm:$0xff]
          %v1210 = vld [vmem:[#allocation6 + $0x1e8] sm:$0xff]
          %v1211 = vld [vmem:[#allocation6 + $0x1f0] sm:$0xff]
          %v1212 = vld [vmem:[#allocation6 + $0x1f8] sm:$0xff]
          %v1213 = vld [vmem:[#allocation6 + $0x200] sm:$0xff]
          %v1214 = vld [vmem:[#allocation6 + $0x208] sm:$0xff]
          %v1215 = vld [vmem:[#allocation6 + $0x210] sm:$0xff]
          %v1216 = vld [vmem:[#allocation6 + $0x218] sm:$0xff]
          %v1217 = vld [vmem:[#allocation6 + $0x220] sm:$0xff]
          %v1218 = vld [vmem:[#allocation6 + $0x228] sm:$0xff]
          %v1219 = vld [vmem:[#allocation6 + $0x230] sm:$0xff]
          %v1220 = vld [vmem:[#allocation6 + $0x238] sm:$0xff]
          %v1221 = vld [vmem:[#allocation6 + $0x240] sm:$0xff]
          %v1222 = vld [vmem:[#allocation6 + $0x248] sm:$0xff]
          %v1223 = vld [vmem:[#allocation6 + $0x250] sm:$0xff]
          %v1224 = vld [vmem:[#allocation6 + $0x258] sm:$0xff]
          %v1225 = vld [vmem:[#allocation6 + $0x260] sm:$0xff]
          %v1226 = vld [vmem:[#allocation6 + $0x268] sm:$0xff]
          %v1227 = vld [vmem:[#allocation6 + $0x270] sm:$0xff]
          %v1228 = vld [vmem:[#allocation6 + $0x278] sm:$0xff]
          %v1229 = vld [vmem:[#allocation6 + $0x280] sm:$0xff]
          %v1230 = vld [vmem:[#allocation6 + $0x288] sm:$0xff]
          %v1231 = vld [vmem:[#allocation6 + $0x290] sm:$0xff]
          %v1232 = vld [vmem:[#allocation6 + $0x298] sm:$0xff]
          %v1233 = vld [vmem:[#allocation6 + $0x2a0] sm:$0xff]
          %v1234 = vld [vmem:[#allocation6 + $0x2a8] sm:$0xff]
          %v1235 = vld [vmem:[#allocation6 + $0x2b0] sm:$0xff]
          %v1236 = vld [vmem:[#allocation6 + $0x2b8] sm:$0xff]
          %v1237 = vld [vmem:[#allocation6 + $0x2c0] sm:$0xff]
          %v1238 = vld [vmem:[#allocation6 + $0x2c8] sm:$0xff]
          %v1239 = vld [vmem:[#allocation6 + $0x2d0] sm:$0xff]
          %v1240 = vld [vmem:[#allocation6 + $0x2d8] sm:$0xff]
          %v1241 = vld [vmem:[#allocation6 + $0x2e0] sm:$0xff]
          %v1242 = vld [vmem:[#allocation6 + $0x2e8] sm:$0xff]
          %v1243 = vld [vmem:[#allocation6 + $0x2f0] sm:$0xff]
          %v1244 = vld [vmem:[#allocation6 + $0x2f8] sm:$0xff]
          %v1245 = vld [vmem:[#allocation6 + $0x300] sm:$0xff]
          %v1246 = vld [vmem:[#allocation6 + $0x308] sm:$0xff]
          %v1247 = vld [vmem:[#allocation6 + $0x310] sm:$0xff]
          %v1248 = vld [vmem:[#allocation6 + $0x318] sm:$0xff]
          %v1249 = vld [vmem:[#allocation6 + $0x320] sm:$0xff]
          %v1250 = vld [vmem:[#allocation6 + $0x328] sm:$0xff]
          %v1251 = vld [vmem:[#allocation6 + $0x330] sm:$0xff]
          %v1252 = vld [vmem:[#allocation6 + $0x338] sm:$0xff]
          %v1253 = vld [vmem:[#allocation6 + $0x340] sm:$0xff]
          %v1254 = vld [vmem:[#allocation6 + $0x348] sm:$0xff]
          %v1255 = vld [vmem:[#allocation6 + $0x350] sm:$0xff]
          %v1256 = vld [vmem:[#allocation6 + $0x358] sm:$0xff]
          %v1257 = vld [vmem:[#allocation6 + $0x360] sm:$0xff]
          %v1258 = vld [vmem:[#allocation6 + $0x368] sm:$0xff]
          %v1259 = vld [vmem:[#allocation6 + $0x370] sm:$0xff]
          %v1260 = vld [vmem:[#allocation6 + $0x378] sm:$0xff]
          %v1261 = vld [vmem:[#allocation6 + $0x380] sm:$0xff]
          %v1262 = vld [vmem:[#allocation6 + $0x388] sm:$0xff]
          %v1263 = vld [vmem:[#allocation6 + $0x390] sm:$0xff]
          %v1264 = vld [vmem:[#allocation6 + $0x398] sm:$0xff]
          %v1265 = vld [vmem:[#allocation6 + $0x3a0] sm:$0xff]
          %v1266 = vld [vmem:[#allocation6 + $0x3a8] sm:$0xff]
          %v1267 = vld [vmem:[#allocation6 + $0x3b0] sm:$0xff]
          %v1268 = vld [vmem:[#allocation6 + $0x3b8] sm:$0xff]
          %v1269 = vld [vmem:[#allocation6 + $0x3c0] sm:$0xff]
          %v1270 = vld [vmem:[#allocation6 + $0x3c8] sm:$0xff]
          %v1271 = vld [vmem:[#allocation6 + $0x3d0] sm:$0xff]
          %v1272 = vld [vmem:[#allocation6 + $0x3d8] sm:$0xff]
          %v1273 = vld [vmem:[#allocation6 + $0x3e0] sm:$0xff]
          %v1274 = vld [vmem:[#allocation6 + $0x3e8] sm:$0xff]
          %v1275 = vld [vmem:[#allocation6 + $0x3f0] sm:$0xff]
          %v1276 = vld [vmem:[#allocation6 + $0x3f8] sm:$0xff]
          %v1277 = vld [vmem:[#allocation6 + $0x400] sm:$0xff]
          %v1278 = vld [vmem:[#allocation6 + $0x408] sm:$0xff]
          %v1279 = vld [vmem:[#allocation6 + $0x410] sm:$0xff]
          %v1280 = vld [vmem:[#allocation6 + $0x418] sm:$0xff]
          %v1281 = vld [vmem:[#allocation6 + $0x420] sm:$0xff]
          %v1282 = vld [vmem:[#allocation6 + $0x428] sm:$0xff]
          %v1283 = vld [vmem:[#allocation6 + $0x430] sm:$0xff]
          %v1284 = vld [vmem:[#allocation6 + $0x438] sm:$0xff]
          %v1285 = vld [vmem:[#allocation6 + $0x440] sm:$0xff]
          %v1286 = vld [vmem:[#allocation6 + $0x448] sm:$0xff]
          %v1287 = vld [vmem:[#allocation6 + $0x450] sm:$0xff]
          %v1288 = vld [vmem:[#allocation6 + $0x458] sm:$0xff]
          %v1289 = vld [vmem:[#allocation6 + $0x460] sm:$0xff]
          %v1290 = vld [vmem:[#allocation6 + $0x468] sm:$0xff]
          %v1291 = vld [vmem:[#allocation6 + $0x470] sm:$0xff]
          %v1292 = vld [vmem:[#allocation6 + $0x478] sm:$0xff]
          %v1293 = vld [vmem:[#allocation6 + $0x480] sm:$0xff]
          %v1294 = vld [vmem:[#allocation6 + $0x488] sm:$0xff]
          %v1295 = vld [vmem:[#allocation6 + $0x490] sm:$0xff]
          %v1296 = vld [vmem:[#allocation6 + $0x498] sm:$0xff]
          %v1297 = vld [vmem:[#allocation6 + $0x4a0] sm:$0xff]
          %v1298 = vld [vmem:[#allocation6 + $0x4a8] sm:$0xff]
          %v1299 = vld [vmem:[#allocation6 + $0x4b0] sm:$0xff]
          %v1300 = vld [vmem:[#allocation6 + $0x4b8] sm:$0xff]
          %v1301 = vld [vmem:[#allocation6 + $0x4c0] sm:$0xff]
          %v1302 = vld [vmem:[#allocation6 + $0x4c8] sm:$0xff]
          %v1303 = vld [vmem:[#allocation6 + $0x4d0] sm:$0xff]
          %v1304 = vld [vmem:[#allocation6 + $0x4d8] sm:$0xff]
          %v1305 = vld [vmem:[#allocation6 + $0x4e0] sm:$0xff]
          %v1306 = vld [vmem:[#allocation6 + $0x4e8] sm:$0xff]
          %v1307 = vld [vmem:[#allocation6 + $0x4f0] sm:$0xff]
          %v1308 = vld [vmem:[#allocation6 + $0x4f8] sm:$0xff]
          %v1309 = vld [vmem:[#allocation6 + $0x500] sm:$0xff]
          %v1310 = vld [vmem:[#allocation6 + $0x508] sm:$0xff]
          %v1311 = vld [vmem:[#allocation6 + $0x510] sm:$0xff]
          %v1312 = vld [vmem:[#allocation6 + $0x518] sm:$0xff]
          %v1313 = vld [vmem:[#allocation6 + $0x520] sm:$0xff]
          %v1314 = vld [vmem:[#allocation6 + $0x528] sm:$0xff]
          %v1315 = vld [vmem:[#allocation6 + $0x530] sm:$0xff]
          %v1316 = vld [vmem:[#allocation6 + $0x538] sm:$0xff]
          %v1317 = vld [vmem:[#allocation6 + $0x540] sm:$0xff]
          %v1318 = vld [vmem:[#allocation6 + $0x548] sm:$0xff]
          %v1319 = vld [vmem:[#allocation6 + $0x550] sm:$0xff]
          %v1320 = vld [vmem:[#allocation6 + $0x558] sm:$0xff]
          %v1321 = vld [vmem:[#allocation6 + $0x560] sm:$0xff]
          %v1322 = vld [vmem:[#allocation6 + $0x568] sm:$0xff]
          %v1323 = vld [vmem:[#allocation6 + $0x570] sm:$0xff]
          %v1324 = vld [vmem:[#allocation6 + $0x578] sm:$0xff]
          %v1325 = vld [vmem:[#allocation6 + $0x580] sm:$0xff]
          %v1326 = vld [vmem:[#allocation6 + $0x588] sm:$0xff]
          %v1327 = vld [vmem:[#allocation6 + $0x590] sm:$0xff]
          %v1328 = vld [vmem:[#allocation6 + $0x598] sm:$0xff]
          %v1329 = vld [vmem:[#allocation6 + $0x5a0] sm:$0xff]
          %v1330 = vld [vmem:[#allocation6 + $0x5a8] sm:$0xff]
          %v1331 = vld [vmem:[#allocation6 + $0x5b0] sm:$0xff]
          %v1332 = vld [vmem:[#allocation6 + $0x5b8] sm:$0xff]
          %v1333 = vld [vmem:[#allocation6 + $0x5c0] sm:$0xff]
          %v1334 = vld [vmem:[#allocation6 + $0x5c8] sm:$0xff]
          %v1335 = vld [vmem:[#allocation6 + $0x5d0] sm:$0xff]
          %v1336 = vld [vmem:[#allocation6 + $0x5d8] sm:$0xff]
          %v1337 = vld [vmem:[#allocation6 + $0x5e0] sm:$0xff]
          %v1338 = vld [vmem:[#allocation6 + $0x5e8] sm:$0xff]
          %v1339 = vld [vmem:[#allocation6 + $0x5f0] sm:$0xff]
          %v1340 = vld [vmem:[#allocation6 + $0x5f8] sm:$0xff]
          %v1341 = vld [vmem:[#allocation6 + $0x600] sm:$0xff]
          %v1342 = vld [vmem:[#allocation6 + $0x608] sm:$0xff]
          %v1343 = vld [vmem:[#allocation6 + $0x610] sm:$0xff]
          %v1344 = vld [vmem:[#allocation6 + $0x618] sm:$0xff]
          %v1345 = vld [vmem:[#allocation6 + $0x620] sm:$0xff]
          %v1346 = vld [vmem:[#allocation6 + $0x628] sm:$0xff]
          %v1347 = vld [vmem:[#allocation6 + $0x630] sm:$0xff]
          %v1348 = vld [vmem:[#allocation6 + $0x638] sm:$0xff]
          %v1349 = vld [vmem:[#allocation6 + $0x640] sm:$0xff]
          %v1350 = vld [vmem:[#allocation6 + $0x648] sm:$0xff]
          %v1351 = vld [vmem:[#allocation6 + $0x650] sm:$0xff]
          %v1352 = vld [vmem:[#allocation6 + $0x658] sm:$0xff]
          %v1353 = vld [vmem:[#allocation6 + $0x660] sm:$0xff]
          %v1354 = vld [vmem:[#allocation6 + $0x668] sm:$0xff]
          %v1355 = vld [vmem:[#allocation6 + $0x670] sm:$0xff]
          %v1356 = vld [vmem:[#allocation6 + $0x678] sm:$0xff]
          %v1357 = vld [vmem:[#allocation6 + $0x680] sm:$0xff]
          %v1358 = vld [vmem:[#allocation6 + $0x688] sm:$0xff]
          %v1359 = vld [vmem:[#allocation6 + $0x690] sm:$0xff]
          %v1360 = vld [vmem:[#allocation6 + $0x698] sm:$0xff]
          %v1361 = vld [vmem:[#allocation6 + $0x6a0] sm:$0xff]
          %v1362 = vld [vmem:[#allocation6 + $0x6a8] sm:$0xff]
          %v1363 = vld [vmem:[#allocation6 + $0x6b0] sm:$0xff]
          %v1364 = vld [vmem:[#allocation6 + $0x6b8] sm:$0xff]
          %v1365 = vld [vmem:[#allocation6 + $0x6c0] sm:$0xff]
          %v1366 = vld [vmem:[#allocation6 + $0x6c8] sm:$0xff]
          %v1367 = vld [vmem:[#allocation6 + $0x6d0] sm:$0xff]
          %v1368 = vld [vmem:[#allocation6 + $0x6d8] sm:$0xff]
          %v1369 = vld [vmem:[#allocation6 + $0x6e0] sm:$0xff]
          %v1370 = vld [vmem:[#allocation6 + $0x6e8] sm:$0xff]
          %v1371 = vld [vmem:[#allocation6 + $0x6f0] sm:$0xff]
          %v1372 = vld [vmem:[#allocation6 + $0x6f8] sm:$0xff]
          %v1373 = vld [vmem:[#allocation6 + $0x700] sm:$0xff]
          %v1374 = vld [vmem:[#allocation6 + $0x708] sm:$0xff]
          %v1375 = vld [vmem:[#allocation6 + $0x710] sm:$0xff]
          %v1376 = vld [vmem:[#allocation6 + $0x718] sm:$0xff]
          %v1377 = vld [vmem:[#allocation6 + $0x720] sm:$0xff]
          %v1378 = vld [vmem:[#allocation6 + $0x728] sm:$0xff]
          %v1379 = vld [vmem:[#allocation6 + $0x730] sm:$0xff]
          %v1380 = vld [vmem:[#allocation6 + $0x738] sm:$0xff]
          %v1381 = vld [vmem:[#allocation6 + $0x740] sm:$0xff]
          %v1382 = vld [vmem:[#allocation6 + $0x748] sm:$0xff]
          %v1383 = vld [vmem:[#allocation6 + $0x750] sm:$0xff]
          %v1384 = vld [vmem:[#allocation6 + $0x758] sm:$0xff]
          %v1385 = vld [vmem:[#allocation6 + $0x760] sm:$0xff]
          %v1386 = vld [vmem:[#allocation6 + $0x768] sm:$0xff]
          %v1387 = vld [vmem:[#allocation6 + $0x770] sm:$0xff]
          %v1388 = vld [vmem:[#allocation6 + $0x778] sm:$0xff]
          %v1389 = vld [vmem:[#allocation6 + $0x780] sm:$0xff]
          %v1390 = vld [vmem:[#allocation6 + $0x788] sm:$0xff]
          %v1391 = vld [vmem:[#allocation6 + $0x790] sm:$0xff]
          %v1392 = vld [vmem:[#allocation6 + $0x798] sm:$0xff]
          %v1393 = vld [vmem:[#allocation6 + $0x7a0] sm:$0xff]
          %v1394 = vld [vmem:[#allocation6 + $0x7a8] sm:$0xff]
          %v1395 = vld [vmem:[#allocation6 + $0x7b0] sm:$0xff]
          %v1396 = vld [vmem:[#allocation6 + $0x7b8] sm:$0xff]
          %v1397 = vld [vmem:[#allocation6 + $0x7c0] sm:$0xff]
          %v1398 = vld [vmem:[#allocation6 + $0x7c8] sm:$0xff]
          %v1399 = vld [vmem:[#allocation6 + $0x7d0] sm:$0xff]
          %v1400 = vld [vmem:[#allocation6 + $0x7d8] sm:$0xff]
          %v1401 = vld [vmem:[#allocation6 + $0x7e0] sm:$0xff]
          %v1402 = vld [vmem:[#allocation6 + $0x7e8] sm:$0xff]
          %v1403 = vld [vmem:[#allocation6 + $0x7f0] sm:$0xff]
          %v1404 = vld [vmem:[#allocation6 + $0x7f8] sm:$0xff]
          %v1405 = vld [vmem:[#allocation6 + $0x800] sm:$0xff]
          %v1406 = vld [vmem:[#allocation6 + $0x808] sm:$0xff]
          %v1407 = vld [vmem:[#allocation6 + $0x810] sm:$0xff]
          %v1408 = vld [vmem:[#allocation6 + $0x818] sm:$0xff]
          %v1409 = vld [vmem:[#allocation6 + $0x820] sm:$0xff]
          %v1410 = vld [vmem:[#allocation6 + $0x828] sm:$0xff]
          %v1411 = vld [vmem:[#allocation6 + $0x830] sm:$0xff]
          %v1412 = vld [vmem:[#allocation6 + $0x838] sm:$0xff]
          %v1413 = vld [vmem:[#allocation6 + $0x840] sm:$0xff]
          %v1414 = vld [vmem:[#allocation6 + $0x848] sm:$0xff]
          %v1415 = vld [vmem:[#allocation6 + $0x850] sm:$0xff]
          %v1416 = vld [vmem:[#allocation6 + $0x858] sm:$0xff]
          %v1417 = vld [vmem:[#allocation6 + $0x860] sm:$0xff]
          %v1418 = vld [vmem:[#allocation6 + $0x868] sm:$0xff]
          %v1419 = vld [vmem:[#allocation6 + $0x870] sm:$0xff]
          %v1420 = vld [vmem:[#allocation6 + $0x878] sm:$0xff]
          %v1421 = vld [vmem:[#allocation6 + $0x880] sm:$0xff]
          %v1422 = vld [vmem:[#allocation6 + $0x888] sm:$0xff]
          %v1423 = vld [vmem:[#allocation6 + $0x890] sm:$0xff]
          %v1424 = vld [vmem:[#allocation6 + $0x898] sm:$0xff]
          %v1425 = vld [vmem:[#allocation6 + $0x8a0] sm:$0xff]
          %v1426 = vld [vmem:[#allocation6 + $0x8a8] sm:$0xff]
          %v1427 = vld [vmem:[#allocation6 + $0x8b0] sm:$0xff]
          %v1428 = vld [vmem:[#allocation6 + $0x8b8] sm:$0xff]
          %v1429 = vld [vmem:[#allocation6 + $0x8c0] sm:$0xff]
          %v1430 = vld [vmem:[#allocation6 + $0x8c8] sm:$0xff]
          %v1431 = vld [vmem:[#allocation6 + $0x8d0] sm:$0xff]
          %v1432 = vld [vmem:[#allocation6 + $0x8d8] sm:$0xff]
          %v1433 = vld [vmem:[#allocation6 + $0x8e0] sm:$0xff]
          %v1434 = vld [vmem:[#allocation6 + $0x8e8] sm:$0xff]
          %v1435 = vld [vmem:[#allocation6 + $0x8f0] sm:$0xff]
          %v1436 = vld [vmem:[#allocation6 + $0x8f8] sm:$0xff]
          %v1437 = vld [vmem:[#allocation6 + $0x900] sm:$0xff]
          %v1438 = vld [vmem:[#allocation6 + $0x908] sm:$0xff]
          %v1439 = vld [vmem:[#allocation6 + $0x910] sm:$0xff]
          %v1440 = vld [vmem:[#allocation6 + $0x918] sm:$0xff]
          %v1441 = vld [vmem:[#allocation6 + $0x920] sm:$0xff]
          %v1442 = vld [vmem:[#allocation6 + $0x928] sm:$0xff]
          %v1443 = vld [vmem:[#allocation6 + $0x930] sm:$0xff]
          %v1444 = vld [vmem:[#allocation6 + $0x938] sm:$0xff]
          %v1445 = vld [vmem:[#allocation6 + $0x940] sm:$0xff]
          %v1446 = vld [vmem:[#allocation6 + $0x948] sm:$0xff]
          %v1447 = vld [vmem:[#allocation6 + $0x950] sm:$0xff]
          %v1448 = vld [vmem:[#allocation6 + $0x958] sm:$0xff]
          %v1449 = vld [vmem:[#allocation6 + $0x960] sm:$0xff]
          %v1450 = vld [vmem:[#allocation6 + $0x968] sm:$0xff]
          %v1451 = vld [vmem:[#allocation6 + $0x970] sm:$0xff]
          %v1452 = vld [vmem:[#allocation6 + $0x978] sm:$0xff]
          %v1453 = vld [vmem:[#allocation6 + $0x980] sm:$0xff]
          %v1454 = vld [vmem:[#allocation6 + $0x988] sm:$0xff]
          %v1455 = vld [vmem:[#allocation6 + $0x990] sm:$0xff]
          %v1456 = vld [vmem:[#allocation6 + $0x998] sm:$0xff]
          %v1457 = vld [vmem:[#allocation6 + $0x9a0] sm:$0xff]
          %v1458 = vld [vmem:[#allocation6 + $0x9a8] sm:$0xff]
          %v1459 = vld [vmem:[#allocation6 + $0x9b0] sm:$0xff]
          %v1460 = vld [vmem:[#allocation6 + $0x9b8] sm:$0xff]
          %v1461 = vld [vmem:[#allocation6 + $0x9c0] sm:$0xff]
          %v1462 = vld [vmem:[#allocation6 + $0x9c8] sm:$0xff]
          %v1463 = vld [vmem:[#allocation6 + $0x9d0] sm:$0xff]
          %v1464 = vld [vmem:[#allocation6 + $0x9d8] sm:$0xff]
          %v1465 = vld [vmem:[#allocation6 + $0x9e0] sm:$0xff]
          %v1466 = vld [vmem:[#allocation6 + $0x9e8] sm:$0xff]
          %v1467 = vld [vmem:[#allocation6 + $0x9f0] sm:$0xff]
          %v1468 = vld [vmem:[#allocation6 + $0x9f8] sm:$0xff]
          %v1469 = vld [vmem:[#allocation6 + $0xa00] sm:$0xff]
          %v1470 = vld [vmem:[#allocation6 + $0xa08] sm:$0xff]
          %v1471 = vld [vmem:[#allocation6 + $0xa10] sm:$0xff]
          %v1472 = vld [vmem:[#allocation6 + $0xa18] sm:$0xff]
          %v1473 = vld [vmem:[#allocation6 + $0xa20] sm:$0xff]
          %v1474 = vld [vmem:[#allocation6 + $0xa28] sm:$0xff]
          %v1475 = vld [vmem:[#allocation6 + $0xa30] sm:$0xff]
          %v1476 = vld [vmem:[#allocation6 + $0xa38] sm:$0xff]
          %v1477 = vld [vmem:[#allocation6 + $0xa40] sm:$0xff]
          %v1478 = vld [vmem:[#allocation6 + $0xa48] sm:$0xff]
          %v1479 = vld [vmem:[#allocation6 + $0xa50] sm:$0xff]
          %v1480 = vld [vmem:[#allocation6 + $0xa58] sm:$0xff]
          %v1481 = vld [vmem:[#allocation6 + $0xa60] sm:$0xff]
          %v1482 = vld [vmem:[#allocation6 + $0xa68] sm:$0xff]
          %v1483 = vld [vmem:[#allocation6 + $0xa70] sm:$0xff]
          %v1484 = vld [vmem:[#allocation6 + $0xa78] sm:$0xff]
          %v1485 = vld [vmem:[#allocation6 + $0xa80] sm:$0xff]
          %v1486 = vld [vmem:[#allocation6 + $0xa88] sm:$0xff]
          %v1487 = vld [vmem:[#allocation6 + $0xa90] sm:$0xff]
          %v1488 = vld [vmem:[#allocation6 + $0xa98] sm:$0xff]
          %v1489 = vld [vmem:[#allocation6 + $0xaa0] sm:$0xff]
          %v1490 = vld [vmem:[#allocation6 + $0xaa8] sm:$0xff]
          %v1491 = vld [vmem:[#allocation6 + $0xab0] sm:$0xff]
          %v1492 = vld [vmem:[#allocation6 + $0xab8] sm:$0xff]
          %v1493 = vld [vmem:[#allocation6 + $0xac0] sm:$0xff]
          %v1494 = vld [vmem:[#allocation6 + $0xac8] sm:$0xff]
          %v1495 = vld [vmem:[#allocation6 + $0xad0] sm:$0xff]
          %v1496 = vld [vmem:[#allocation6 + $0xad8] sm:$0xff]
          %v1497 = vld [vmem:[#allocation6 + $0xae0] sm:$0xff]
          %v1498 = vld [vmem:[#allocation6 + $0xae8] sm:$0xff]
          %v1499 = vld [vmem:[#allocation6 + $0xaf0] sm:$0xff]
          %v1500 = vld [vmem:[#allocation6 + $0xaf8] sm:$0xff]
          %v1501 = vld [vmem:[#allocation6 + $0xb00] sm:$0xff]
          %v1502 = vld [vmem:[#allocation6 + $0xb08] sm:$0xff]
          %v1503 = vld [vmem:[#allocation6 + $0xb10] sm:$0xff]
          %v1504 = vld [vmem:[#allocation6 + $0xb18] sm:$0xff]
          %v1505 = vld [vmem:[#allocation6 + $0xb20] sm:$0xff]
          %v1506 = vld [vmem:[#allocation6 + $0xb28] sm:$0xff]
          %v1507 = vld [vmem:[#allocation6 + $0xb30] sm:$0xff]
          %v1508 = vld [vmem:[#allocation6 + $0xb38] sm:$0xff]
          %v1509 = vld [vmem:[#allocation6 + $0xb40] sm:$0xff]
          %v1510 = vld [vmem:[#allocation6 + $0xb48] sm:$0xff]
          %v1511 = vld [vmem:[#allocation6 + $0xb50] sm:$0xff]
          %v1512 = vld [vmem:[#allocation6 + $0xb58] sm:$0xff]
          %v1513 = vld [vmem:[#allocation6 + $0xb60] sm:$0xff]
          %v1514 = vld [vmem:[#allocation6 + $0xb68] sm:$0xff]
          %v1515 = vld [vmem:[#allocation6 + $0xb70] sm:$0xff]
          %v1516 = vld [vmem:[#allocation6 + $0xb78] sm:$0xff]
          %v1517 = vld [vmem:[#allocation6 + $0xb80] sm:$0xff]
          %v1518 = vld [vmem:[#allocation6 + $0xb88] sm:$0xff]
          %v1519 = vld [vmem:[#allocation6 + $0xb90] sm:$0xff]
          %v1520 = vld [vmem:[#allocation6 + $0xb98] sm:$0xff]
          %v1521 = vld [vmem:[#allocation6 + $0xba0] sm:$0xff]
          %v1522 = vld [vmem:[#allocation6 + $0xba8] sm:$0xff]
          %v1523 = vld [vmem:[#allocation6 + $0xbb0] sm:$0xff]
          %v1524 = vld [vmem:[#allocation6 + $0xbb8] sm:$0xff]
          %v1525 = vld [vmem:[#allocation6 + $0xbc0] sm:$0xff]
          %v1526 = vld [vmem:[#allocation6 + $0xbc8] sm:$0xff]
          %v1527 = vld [vmem:[#allocation6 + $0xbd0] sm:$0xff]
          %v1528 = vld [vmem:[#allocation6 + $0xbd8] sm:$0xff]
          %v1529 = vld [vmem:[#allocation6 + $0xbe0] sm:$0xff]
          %v1530 = vld [vmem:[#allocation6 + $0xbe8] sm:$0xff]
          %v1531 = vld [vmem:[#allocation6 + $0xbf0] sm:$0xff]
          %v1532 = vld [vmem:[#allocation6 + $0xbf8] sm:$0xff]
          %v1533 = vld [vmem:[#allocation6 + $0xc00] sm:$0xff]
          %v1534 = vld [vmem:[#allocation6 + $0xc08] sm:$0xff]
          %v1535 = vld [vmem:[#allocation6 + $0xc10] sm:$0xff]
          %v1536 = vld [vmem:[#allocation6 + $0xc18] sm:$0xff]
          %v1537 = vld [vmem:[#allocation6 + $0xc20] sm:$0xff]
          %v1538 = vld [vmem:[#allocation6 + $0xc28] sm:$0xff]
          %v1539 = vld [vmem:[#allocation6 + $0xc30] sm:$0xff]
          %v1540 = vld [vmem:[#allocation6 + $0xc38] sm:$0xff]
          %v1541 = vld [vmem:[#allocation6 + $0xc40] sm:$0xff]
          %v1542 = vld [vmem:[#allocation6 + $0xc48] sm:$0xff]
          %v1543 = vld [vmem:[#allocation6 + $0xc50] sm:$0xff]
          %v1544 = vld [vmem:[#allocation6 + $0xc58] sm:$0xff]
          %v1545 = vld [vmem:[#allocation6 + $0xc60] sm:$0xff]
          %v1546 = vld [vmem:[#allocation6 + $0xc68] sm:$0xff]
          %v1547 = vld [vmem:[#allocation6 + $0xc70] sm:$0xff]
          %v1548 = vld [vmem:[#allocation6 + $0xc78] sm:$0xff]
          %v1549 = vld [vmem:[#allocation6 + $0xc80] sm:$0xff]
          %v1550 = vld [vmem:[#allocation6 + $0xc88] sm:$0xff]
          %v1551 = vld [vmem:[#allocation6 + $0xc90] sm:$0xff]
          %v1552 = vld [vmem:[#allocation6 + $0xc98] sm:$0xff]
          %v1553 = vld [vmem:[#allocation6 + $0xca0] sm:$0xff]
          %v1554 = vld [vmem:[#allocation6 + $0xca8] sm:$0xff]
          %v1555 = vld [vmem:[#allocation6 + $0xcb0] sm:$0xff]
          %v1556 = vld [vmem:[#allocation6 + $0xcb8] sm:$0xff]
          %v1557 = vld [vmem:[#allocation6 + $0xcc0] sm:$0xff]
          %v1558 = vld [vmem:[#allocation6 + $0xcc8] sm:$0xff]
          %v1559 = vld [vmem:[#allocation6 + $0xcd0] sm:$0xff]
          %v1560 = vld [vmem:[#allocation6 + $0xcd8] sm:$0xff]
          %v1561 = vld [vmem:[#allocation6 + $0xce0] sm:$0xff]
          %v1562 = vld [vmem:[#allocation6 + $0xce8] sm:$0xff]
          %v1563 = vld [vmem:[#allocation6 + $0xcf0] sm:$0xff]
          %v1564 = vld [vmem:[#allocation6 + $0xcf8] sm:$0xff]
          %v1565 = vld [vmem:[#allocation6 + $0xd00] sm:$0xff]
          %v1566 = vld [vmem:[#allocation6 + $0xd08] sm:$0xff]
          %v1567 = vld [vmem:[#allocation6 + $0xd10] sm:$0xff]
          %v1568 = vld [vmem:[#allocation6 + $0xd18] sm:$0xff]
          %v1569 = vld [vmem:[#allocation6 + $0xd20] sm:$0xff]
          %v1570 = vld [vmem:[#allocation6 + $0xd28] sm:$0xff]
          %v1571 = vld [vmem:[#allocation6 + $0xd30] sm:$0xff]
          %v1572 = vld [vmem:[#allocation6 + $0xd38] sm:$0xff]
          %v1573 = vld [vmem:[#allocation6 + $0xd40] sm:$0xff]
          %v1574 = vld [vmem:[#allocation6 + $0xd48] sm:$0xff]
          %v1575 = vld [vmem:[#allocation6 + $0xd50] sm:$0xff]
          %v1576 = vld [vmem:[#allocation6 + $0xd58] sm:$0xff]
          %v1577 = vld [vmem:[#allocation6 + $0xd60] sm:$0xff]
          %v1578 = vld [vmem:[#allocation6 + $0xd68] sm:$0xff]
          %v1579 = vld [vmem:[#allocation6 + $0xd70] sm:$0xff]
          %v1580 = vld [vmem:[#allocation6 + $0xd78] sm:$0xff]
          %v1581 = vld [vmem:[#allocation6 + $0xd80] sm:$0xff]
          %v1582 = vld [vmem:[#allocation6 + $0xd88] sm:$0xff]
          %v1583 = vld [vmem:[#allocation6 + $0xd90] sm:$0xff]
          %v1584 = vld [vmem:[#allocation6 + $0xd98] sm:$0xff]
          %v1585 = vld [vmem:[#allocation6 + $0xda0] sm:$0xff]
          %v1586 = vld [vmem:[#allocation6 + $0xda8] sm:$0xff]
          %v1587 = vld [vmem:[#allocation6 + $0xdb0] sm:$0xff]
          %v1588 = vld [vmem:[#allocation6 + $0xdb8] sm:$0xff]
          %v1589 = vld [vmem:[#allocation6 + $0xdc0] sm:$0xff]
          %v1590 = vld [vmem:[#allocation6 + $0xdc8] sm:$0xff]
          %v1591 = vld [vmem:[#allocation6 + $0xdd0] sm:$0xff]
          %v1592 = vld [vmem:[#allocation6 + $0xdd8] sm:$0xff]
          %v1593 = vld [vmem:[#allocation6 + $0xde0] sm:$0xff]
          %v1594 = vld [vmem:[#allocation6 + $0xde8] sm:$0xff]
          %v1595 = vld [vmem:[#allocation6 + $0xdf0] sm:$0xff]
          %v1596 = vld [vmem:[#allocation6 + $0xdf8] sm:$0xff]
          %v1597 = vld [vmem:[#allocation6 + $0xe00] sm:$0xff]
          %v1598 = vld [vmem:[#allocation6 + $0xe08] sm:$0xff]
          %v1599 = vld [vmem:[#allocation6 + $0xe10] sm:$0xff]
          %v1600 = vld [vmem:[#allocation6 + $0xe18] sm:$0xff]
          %v1601 = vld [vmem:[#allocation6 + $0xe20] sm:$0xff]
          %v1602 = vld [vmem:[#allocation6 + $0xe28] sm:$0xff]
          %v1603 = vld [vmem:[#allocation6 + $0xe30] sm:$0xff]
          %v1604 = vld [vmem:[#allocation6 + $0xe38] sm:$0xff]
          %v1605 = vld [vmem:[#allocation6 + $0xe40] sm:$0xff]
          %v1606 = vld [vmem:[#allocation6 + $0xe48] sm:$0xff]
          %v1607 = vld [vmem:[#allocation6 + $0xe50] sm:$0xff]
          %v1608 = vld [vmem:[#allocation6 + $0xe58] sm:$0xff]
          %v1609 = vld [vmem:[#allocation6 + $0xe60] sm:$0xff]
          %v1610 = vld [vmem:[#allocation6 + $0xe68] sm:$0xff]
          %v1611 = vld [vmem:[#allocation6 + $0xe70] sm:$0xff]
          %v1612 = vld [vmem:[#allocation6 + $0xe78] sm:$0xff]
          %v1613 = vld [vmem:[#allocation6 + $0xe80] sm:$0xff]
          %v1614 = vld [vmem:[#allocation6 + $0xe88] sm:$0xff]
          %v1615 = vld [vmem:[#allocation6 + $0xe90] sm:$0xff]
          %v1616 = vld [vmem:[#allocation6 + $0xe98] sm:$0xff]
          %v1617 = vld [vmem:[#allocation6 + $0xea0] sm:$0xff]
          %v1618 = vld [vmem:[#allocation6 + $0xea8] sm:$0xff]
          %v1619 = vld [vmem:[#allocation6 + $0xeb0] sm:$0xff]
          %v1620 = vld [vmem:[#allocation6 + $0xeb8] sm:$0xff]
          %v1621 = vld [vmem:[#allocation6 + $0xec0] sm:$0xff]
          %v1622 = vld [vmem:[#allocation6 + $0xec8] sm:$0xff]
          %v1623 = vld [vmem:[#allocation6 + $0xed0] sm:$0xff]
          %v1624 = vld [vmem:[#allocation6 + $0xed8] sm:$0xff]
          %v1625 = vld [vmem:[#allocation6 + $0xee0] sm:$0xff]
          %v1626 = vld [vmem:[#allocation6 + $0xee8] sm:$0xff]
          %v1627 = vld [vmem:[#allocation6 + $0xef0] sm:$0xff]
          %v1628 = vld [vmem:[#allocation6 + $0xef8] sm:$0xff]
          %v1629 = vld [vmem:[#allocation6 + $0xf00] sm:$0xff]
          %v1630 = vld [vmem:[#allocation6 + $0xf08] sm:$0xff]
          %v1631 = vld [vmem:[#allocation6 + $0xf10] sm:$0xff]
          %v1632 = vld [vmem:[#allocation6 + $0xf18] sm:$0xff]
          %v1633 = vld [vmem:[#allocation6 + $0xf20] sm:$0xff]
          %v1634 = vld [vmem:[#allocation6 + $0xf28] sm:$0xff]
          %v1635 = vld [vmem:[#allocation6 + $0xf30] sm:$0xff]
          %v1636 = vld [vmem:[#allocation6 + $0xf38] sm:$0xff]
          %v1637 = vld [vmem:[#allocation6 + $0xf40] sm:$0xff]
          %v1638 = vld [vmem:[#allocation6 + $0xf48] sm:$0xff]
          %v1639 = vld [vmem:[#allocation6 + $0xf50] sm:$0xff]
          %v1640 = vld [vmem:[#allocation6 + $0xf58] sm:$0xff]
          %v1641 = vld [vmem:[#allocation6 + $0xf60] sm:$0xff]
          %v1642 = vld [vmem:[#allocation6 + $0xf68] sm:$0xff]
          %v1643 = vld [vmem:[#allocation6 + $0xf70] sm:$0xff]
          %v1644 = vld [vmem:[#allocation6 + $0xf78] sm:$0xff]
          %v1645 = vld [vmem:[#allocation6 + $0xf80] sm:$0xff]
          %v1646 = vld [vmem:[#allocation6 + $0xf88] sm:$0xff]
          %v1647 = vld [vmem:[#allocation6 + $0xf90] sm:$0xff]
          %v1648 = vld [vmem:[#allocation6 + $0xf98] sm:$0xff]
          %v1649 = vld [vmem:[#allocation6 + $0xfa0] sm:$0xff]
          %v1650 = vld [vmem:[#allocation6 + $0xfa8] sm:$0xff]
          %v1651 = vld [vmem:[#allocation6 + $0xfb0] sm:$0xff]
          %v1652 = vld [vmem:[#allocation6 + $0xfb8] sm:$0xff]
          %v1653 = vld [vmem:[#allocation6 + $0xfc0] sm:$0xff]
          %v1654 = vld [vmem:[#allocation6 + $0xfc8] sm:$0xff]
          %v1655 = vld [vmem:[#allocation6 + $0xfd0] sm:$0xff]
          %v1656 = vld [vmem:[#allocation6 + $0xfd8] sm:$0xff]
          %v1657 = vld [vmem:[#allocation6 + $0xfe0] sm:$0xff]
          %v1658 = vld [vmem:[#allocation6 + $0xfe8] sm:$0xff]
          %v1659 = vld [vmem:[#allocation6 + $0xff0] sm:$0xff]
          %v1660 = vld [vmem:[#allocation6 + $0xff8] sm:$0xff]
          %v1661 = vld [vmem:[#allocation6 + $0x1000] sm:$0xff]
          %v1662 = vld [vmem:[#allocation6 + $0x1008] sm:$0xff]
          %v1663 = vld [vmem:[#allocation6 + $0x1010] sm:$0xff]
          %v1664 = vld [vmem:[#allocation6 + $0x1018] sm:$0xff]
          %v1665 = vld [vmem:[#allocation6 + $0x1020] sm:$0xff]
          %v1666 = vld [vmem:[#allocation6 + $0x1028] sm:$0xff]
          %v1667 = vld [vmem:[#allocation6 + $0x1030] sm:$0xff]
          %v1668 = vld [vmem:[#allocation6 + $0x1038] sm:$0xff]
          %v1669 = vld [vmem:[#allocation6 + $0x1040] sm:$0xff]
          %v1670 = vld [vmem:[#allocation6 + $0x1048] sm:$0xff]
          %v1671 = vld [vmem:[#allocation6 + $0x1050] sm:$0xff]
          %v1672 = vld [vmem:[#allocation6 + $0x1058] sm:$0xff]
          %v1673 = vld [vmem:[#allocation6 + $0x1060] sm:$0xff]
          %v1674 = vld [vmem:[#allocation6 + $0x1068] sm:$0xff]
          %v1675 = vld [vmem:[#allocation6 + $0x1070] sm:$0xff]
          %v1676 = vld [vmem:[#allocation6 + $0x1078] sm:$0xff]
          %v1677 = vld [vmem:[#allocation6 + $0x1080] sm:$0xff]
          %v1678 = vld [vmem:[#allocation6 + $0x1088] sm:$0xff]
          %v1679 = vld [vmem:[#allocation6 + $0x1090] sm:$0xff]
          %v1680 = vld [vmem:[#allocation6 + $0x1098] sm:$0xff]
          %v1681 = vld [vmem:[#allocation6 + $0x10a0] sm:$0xff]
          %v1682 = vld [vmem:[#allocation6 + $0x10a8] sm:$0xff]
          %v1683 = vld [vmem:[#allocation6 + $0x10b0] sm:$0xff]
          %v1684 = vld [vmem:[#allocation6 + $0x10b8] sm:$0xff]
          %v1685 = vld [vmem:[#allocation6 + $0x10c0] sm:$0xff]
          %v1686 = vld [vmem:[#allocation6 + $0x10c8] sm:$0xff]
          %v1687 = vld [vmem:[#allocation6 + $0x10d0] sm:$0xff]
          %v1688 = vld [vmem:[#allocation6 + $0x10d8] sm:$0xff]
          %v1689 = vld [vmem:[#allocation6 + $0x10e0] sm:$0xff]
          %v1690 = vld [vmem:[#allocation6 + $0x10e8] sm:$0xff]
          %v1691 = vld [vmem:[#allocation6 + $0x10f0] sm:$0xff]
          %v1692 = vld [vmem:[#allocation6 + $0x10f8] sm:$0xff]
          %v1693 = vld [vmem:[#allocation6 + $0x1100] sm:$0xff]
          %v1694 = vld [vmem:[#allocation6 + $0x1108] sm:$0xff]
          %v1695 = vld [vmem:[#allocation6 + $0x1110] sm:$0xff]
          %v1696 = vld [vmem:[#allocation6 + $0x1118] sm:$0xff]
          %v1697 = vld [vmem:[#allocation6 + $0x1120] sm:$0xff]
          %v1698 = vld [vmem:[#allocation6 + $0x1128] sm:$0xff]
          %v1699 = vld [vmem:[#allocation6 + $0x1130] sm:$0xff]
          %v1700 = vld [vmem:[#allocation6 + $0x1138] sm:$0xff]
          %v1701 = vld [vmem:[#allocation6 + $0x1140] sm:$0xff]
          %v1702 = vld [vmem:[#allocation6 + $0x1148] sm:$0xff]
          %v1703 = vld [vmem:[#allocation6 + $0x1150] sm:$0xff]
          %v1704 = vld [vmem:[#allocation6 + $0x1158] sm:$0xff]
          %v1705 = vld [vmem:[#allocation6 + $0x1160] sm:$0xff]
          %v1706 = vld [vmem:[#allocation6 + $0x1168] sm:$0xff]
          %v1707 = vld [vmem:[#allocation6 + $0x1170] sm:$0xff]
          %v1708 = vld [vmem:[#allocation6 + $0x1178] sm:$0xff]
          %v1709 = vld [vmem:[#allocation6 + $0x1180] sm:$0xff]
          %v1710 = vld [vmem:[#allocation6 + $0x1188] sm:$0xff]
          %v1711 = vld [vmem:[#allocation6 + $0x1190] sm:$0xff]
          %v1712 = vld [vmem:[#allocation6 + $0x1198] sm:$0xff]
          %v1713 = vld [vmem:[#allocation6 + $0x11a0] sm:$0xff]
          %v1714 = vld [vmem:[#allocation6 + $0x11a8] sm:$0xff]
          %v1715 = vld [vmem:[#allocation6 + $0x11b0] sm:$0xff]
          %v1716 = vld [vmem:[#allocation6 + $0x11b8] sm:$0xff]
          %v1717 = vld [vmem:[#allocation6 + $0x11c0] sm:$0xff]
          %v1718 = vld [vmem:[#allocation6 + $0x11c8] sm:$0xff]
          %v1719 = vld [vmem:[#allocation6 + $0x11d0] sm:$0xff]
          %v1720 = vld [vmem:[#allocation6 + $0x11d8] sm:$0xff]
          %v1721 = vld [vmem:[#allocation6 + $0x11e0] sm:$0xff]
          %v1722 = vld [vmem:[#allocation6 + $0x11e8] sm:$0xff]
          %v1723 = vld [vmem:[#allocation6 + $0x11f0] sm:$0xff]
          %v1724 = vld [vmem:[#allocation6 + $0x11f8] sm:$0xff]
          %v1725 = vld [vmem:[#allocation6 + $0x1200] sm:$0xff]
          %v1726 = vld [vmem:[#allocation6 + $0x1208] sm:$0xff]
          %v1727 = vld [vmem:[#allocation6 + $0x1210] sm:$0xff]
          %v1728 = vld [vmem:[#allocation6 + $0x1218] sm:$0xff]
          %v1729 = vld [vmem:[#allocation6 + $0x1220] sm:$0xff]
          %v1730 = vld [vmem:[#allocation6 + $0x1228] sm:$0xff]
          %v1731 = vld [vmem:[#allocation6 + $0x1230] sm:$0xff]
          %v1732 = vld [vmem:[#allocation6 + $0x1238] sm:$0xff]
          %v1733 = vld [vmem:[#allocation6 + $0x1240] sm:$0xff]
          %v1734 = vld [vmem:[#allocation6 + $0x1248] sm:$0xff]
          %v1735 = vld [vmem:[#allocation6 + $0x1250] sm:$0xff]
          %v1736 = vld [vmem:[#allocation6 + $0x1258] sm:$0xff]
          %v1737 = vld [vmem:[#allocation6 + $0x1260] sm:$0xff]
          %v1738 = vld [vmem:[#allocation6 + $0x1268] sm:$0xff]
          %v1739 = vld [vmem:[#allocation6 + $0x1270] sm:$0xff]
          %v1740 = vld [vmem:[#allocation6 + $0x1278] sm:$0xff]
          %v1741 = vld [vmem:[#allocation6 + $0x1280] sm:$0xff]
          %v1742 = vld [vmem:[#allocation6 + $0x1288] sm:$0xff]
          %v1743 = vld [vmem:[#allocation6 + $0x1290] sm:$0xff]
          %v1744 = vld [vmem:[#allocation6 + $0x1298] sm:$0xff]
          %v1745 = vld [vmem:[#allocation6 + $0x12a0] sm:$0xff]
          %v1746 = vld [vmem:[#allocation6 + $0x12a8] sm:$0xff]
          %v1747 = vld [vmem:[#allocation6 + $0x12b0] sm:$0xff]
          %v1748 = vld [vmem:[#allocation6 + $0x12b8] sm:$0xff]
          %v1749 = vld [vmem:[#allocation6 + $0x12c0] sm:$0xff]
          %v1750 = vld [vmem:[#allocation6 + $0x12c8] sm:$0xff]
          %v1751 = vld [vmem:[#allocation6 + $0x12d0] sm:$0xff]
          %v1752 = vld [vmem:[#allocation6 + $0x12d8] sm:$0xff]
          %v1753 = vld [vmem:[#allocation6 + $0x12e0] sm:$0xff]
          %v1754 = vld [vmem:[#allocation6 + $0x12e8] sm:$0xff]
          %v1755 = vld [vmem:[#allocation6 + $0x12f0] sm:$0xff]
          %v1756 = vld [vmem:[#allocation6 + $0x12f8] sm:$0xff]
          %v1757 = vld [vmem:[#allocation6 + $0x1300] sm:$0xff]
          %v1758 = vld [vmem:[#allocation6 + $0x1308] sm:$0xff]
          %v1759 = vld [vmem:[#allocation6 + $0x1310] sm:$0xff]
          %v1760 = vld [vmem:[#allocation6 + $0x1318] sm:$0xff]
          %v1761 = vld [vmem:[#allocation6 + $0x1320] sm:$0xff]
          %v1762 = vld [vmem:[#allocation6 + $0x1328] sm:$0xff]
          %v1763 = vld [vmem:[#allocation6 + $0x1330] sm:$0xff]
          %v1764 = vld [vmem:[#allocation6 + $0x1338] sm:$0xff]
          %v1765 = vld [vmem:[#allocation6 + $0x1340] sm:$0xff]
          %v1766 = vld [vmem:[#allocation6 + $0x1348] sm:$0xff]
          %v1767 = vld [vmem:[#allocation6 + $0x1350] sm:$0xff]
          %v1768 = vld [vmem:[#allocation6 + $0x1358] sm:$0xff]
          %v1769 = vld [vmem:[#allocation6 + $0x1360] sm:$0xff]
          %v1770 = vld [vmem:[#allocation6 + $0x1368] sm:$0xff]
          %v1771 = vld [vmem:[#allocation6 + $0x1370] sm:$0xff]
          %v1772 = vld [vmem:[#allocation6 + $0x1378] sm:$0xff]
          %v1773 = vld [vmem:[#allocation6 + $0x1380] sm:$0xff]
          %v1774 = vld [vmem:[#allocation6 + $0x1388] sm:$0xff]
          %v1775 = vld [vmem:[#allocation6 + $0x1390] sm:$0xff]
          %v1776 = vld [vmem:[#allocation6 + $0x1398] sm:$0xff]
          %v1777 = vld [vmem:[#allocation6 + $0x13a0] sm:$0xff]
          %v1778 = vld [vmem:[#allocation6 + $0x13a8] sm:$0xff]
          %v1779 = vld [vmem:[#allocation6 + $0x13b0] sm:$0xff]
          %v1780 = vld [vmem:[#allocation6 + $0x13b8] sm:$0xff]
          %v1781 = vld [vmem:[#allocation6 + $0x13c0] sm:$0xff]
          %v1782 = vld [vmem:[#allocation6 + $0x13c8] sm:$0xff]
          %v1783 = vld [vmem:[#allocation6 + $0x13d0] sm:$0xff]
          %v1784 = vld [vmem:[#allocation6 + $0x13d8] sm:$0xff]
          %v1785 = vld [vmem:[#allocation6 + $0x13e0] sm:$0xff]
          %v1786 = vld [vmem:[#allocation6 + $0x13e8] sm:$0xff]
          %v1787 = vld [vmem:[#allocation6 + $0x13f0] sm:$0xff]
          %v1788 = vld [vmem:[#allocation6 + $0x13f8] sm:$0xff]
          %v1789 = vld [vmem:[#allocation6 + $0x1400] sm:$0xff]
          %v1790 = vld [vmem:[#allocation6 + $0x1408] sm:$0xff]
          %v1791 = vld [vmem:[#allocation6 + $0x1410] sm:$0xff]
          %v1792 = vld [vmem:[#allocation6 + $0x1418] sm:$0xff]
          %v1793 = vld [vmem:[#allocation6 + $0x1420] sm:$0xff]
          %v1794 = vld [vmem:[#allocation6 + $0x1428] sm:$0xff]
          %v1795 = vld [vmem:[#allocation6 + $0x1430] sm:$0xff]
          %v1796 = vld [vmem:[#allocation6 + $0x1438] sm:$0xff]
          %v1797 = vld [vmem:[#allocation6 + $0x1440] sm:$0xff]
          %v1798 = vld [vmem:[#allocation6 + $0x1448] sm:$0xff]
          %v1799 = vld [vmem:[#allocation6 + $0x1450] sm:$0xff]
          %v1800 = vld [vmem:[#allocation6 + $0x1458] sm:$0xff]
          %v1801 = vld [vmem:[#allocation6 + $0x1460] sm:$0xff]
          %v1802 = vld [vmem:[#allocation6 + $0x1468] sm:$0xff]
          %v1803 = vld [vmem:[#allocation6 + $0x1470] sm:$0xff]
          %v1804 = vld [vmem:[#allocation6 + $0x1478] sm:$0xff]
          %v1805 = vld [vmem:[#allocation6 + $0x1480] sm:$0xff]
          %v1806 = vld [vmem:[#allocation6 + $0x1488] sm:$0xff]
          %v1807 = vld [vmem:[#allocation6 + $0x1490] sm:$0xff]
          %v1808 = vld [vmem:[#allocation6 + $0x1498] sm:$0xff]
          %v1809 = vld [vmem:[#allocation6 + $0x14a0] sm:$0xff]
          %v1810 = vld [vmem:[#allocation6 + $0x14a8] sm:$0xff]
          %v1811 = vld [vmem:[#allocation6 + $0x14b0] sm:$0xff]
          %v1812 = vld [vmem:[#allocation6 + $0x14b8] sm:$0xff]
          %v1813 = vld [vmem:[#allocation6 + $0x14c0] sm:$0xff]
          %v1814 = vld [vmem:[#allocation6 + $0x14c8] sm:$0xff]
          %v1815 = vld [vmem:[#allocation6 + $0x14d0] sm:$0xff]
          %v1816 = vld [vmem:[#allocation6 + $0x14d8] sm:$0xff]
          %v1817 = vld [vmem:[#allocation6 + $0x14e0] sm:$0xff]
          %v1818 = vld [vmem:[#allocation6 + $0x14e8] sm:$0xff]
          %v1819 = vld [vmem:[#allocation6 + $0x14f0] sm:$0xff]
          %v1820 = vld [vmem:[#allocation6 + $0x14f8] sm:$0xff]
          %v1821 = vld [vmem:[#allocation6 + $0x1500] sm:$0xff]
          %v1822 = vld [vmem:[#allocation6 + $0x1508] sm:$0xff]
          %v1823 = vld [vmem:[#allocation6 + $0x1510] sm:$0xff]
          %v1824 = vld [vmem:[#allocation6 + $0x1518] sm:$0xff]
          %v1825 = vld [vmem:[#allocation6 + $0x1520] sm:$0xff]
          %v1826 = vld [vmem:[#allocation6 + $0x1528] sm:$0xff]
          %v1827 = vld [vmem:[#allocation6 + $0x1530] sm:$0xff]
          %v1828 = vld [vmem:[#allocation6 + $0x1538] sm:$0xff]
          %v1829 = vld [vmem:[#allocation6 + $0x1540] sm:$0xff]
          %v1830 = vld [vmem:[#allocation6 + $0x1548] sm:$0xff]
          %v1831 = vld [vmem:[#allocation6 + $0x1550] sm:$0xff]
          %v1832 = vld [vmem:[#allocation6 + $0x1558] sm:$0xff]
          %v1833 = vld [vmem:[#allocation6 + $0x1560] sm:$0xff]
          %v1834 = vld [vmem:[#allocation6 + $0x1568] sm:$0xff]
          %v1835 = vld [vmem:[#allocation6 + $0x1570] sm:$0xff]
          %v1836 = vld [vmem:[#allocation6 + $0x1578] sm:$0xff]
          %v1837 = vld [vmem:[#allocation6 + $0x1580] sm:$0xff]
          %v1838 = vld [vmem:[#allocation6 + $0x1588] sm:$0xff]
          %v1839 = vld [vmem:[#allocation6 + $0x1590] sm:$0xff]
          %v1840 = vld [vmem:[#allocation6 + $0x1598] sm:$0xff]
          %v1841 = vld [vmem:[#allocation6 + $0x15a0] sm:$0xff]
          %v1842 = vld [vmem:[#allocation6 + $0x15a8] sm:$0xff]
          %v1843 = vld [vmem:[#allocation6 + $0x15b0] sm:$0xff]
          %v1844 = vld [vmem:[#allocation6 + $0x15b8] sm:$0xff]
          %v1845 = vld [vmem:[#allocation6 + $0x15c0] sm:$0xff]
          %v1846 = vld [vmem:[#allocation6 + $0x15c8] sm:$0xff]
          %v1847 = vld [vmem:[#allocation6 + $0x15d0] sm:$0xff]
          %v1848 = vld [vmem:[#allocation6 + $0x15d8] sm:$0xff]
          %v1849 = vld [vmem:[#allocation6 + $0x15e0] sm:$0xff]
          %v1850 = vld [vmem:[#allocation6 + $0x15e8] sm:$0xff]
          %v1851 = vld [vmem:[#allocation6 + $0x15f0] sm:$0xff]
          %v1852 = vld [vmem:[#allocation6 + $0x15f8] sm:$0xff]
          %v1853 = vld [vmem:[#allocation6 + $0x1600] sm:$0xff]
          %v1854 = vld [vmem:[#allocation6 + $0x1608] sm:$0xff]
          %v1855 = vld [vmem:[#allocation6 + $0x1610] sm:$0xff]
          %v1856 = vld [vmem:[#allocation6 + $0x1618] sm:$0xff]
          %v1857 = vld [vmem:[#allocation6 + $0x1620] sm:$0xff]
          %v1858 = vld [vmem:[#allocation6 + $0x1628] sm:$0xff]
          %v1859 = vld [vmem:[#allocation6 + $0x1630] sm:$0xff]
          %v1860 = vld [vmem:[#allocation6 + $0x1638] sm:$0xff]
          %v1861 = vld [vmem:[#allocation6 + $0x1640] sm:$0xff]
          %v1862 = vld [vmem:[#allocation6 + $0x1648] sm:$0xff]
          %v1863 = vld [vmem:[#allocation6 + $0x1650] sm:$0xff]
          %v1864 = vld [vmem:[#allocation6 + $0x1658] sm:$0xff]
          %v1865 = vld [vmem:[#allocation6 + $0x1660] sm:$0xff]
          %v1866 = vld [vmem:[#allocation6 + $0x1668] sm:$0xff]
          %v1867 = vld [vmem:[#allocation6 + $0x1670] sm:$0xff]
          %v1868 = vld [vmem:[#allocation6 + $0x1678] sm:$0xff]
          %v1869 = vld [vmem:[#allocation6 + $0x1680] sm:$0xff]
          %v1870 = vld [vmem:[#allocation6 + $0x1688] sm:$0xff]
          %v1871 = vld [vmem:[#allocation6 + $0x1690] sm:$0xff]
          %v1872 = vld [vmem:[#allocation6 + $0x1698] sm:$0xff]
          %v1873 = vld [vmem:[#allocation6 + $0x16a0] sm:$0xff]
          %v1874 = vld [vmem:[#allocation6 + $0x16a8] sm:$0xff]
          %v1875 = vld [vmem:[#allocation6 + $0x16b0] sm:$0xff]
          %v1876 = vld [vmem:[#allocation6 + $0x16b8] sm:$0xff]
          %v1877 = vld [vmem:[#allocation6 + $0x16c0] sm:$0xff]
          %v1878 = vld [vmem:[#allocation6 + $0x16c8] sm:$0xff]
          %v1879 = vld [vmem:[#allocation6 + $0x16d0] sm:$0xff]
          %v1880 = vld [vmem:[#allocation6 + $0x16d8] sm:$0xff]
          %v1881 = vld [vmem:[#allocation6 + $0x16e0] sm:$0xff]
          %v1882 = vld [vmem:[#allocation6 + $0x16e8] sm:$0xff]
          %v1883 = vld [vmem:[#allocation6 + $0x16f0] sm:$0xff]
          %v1884 = vld [vmem:[#allocation6 + $0x16f8] sm:$0xff]
          %v1885 = vld [vmem:[#allocation6 + $0x1700] sm:$0xff]
          %v1886 = vld [vmem:[#allocation6 + $0x1708] sm:$0xff]
          %v1887 = vld [vmem:[#allocation6 + $0x1710] sm:$0xff]
          %v1888 = vld [vmem:[#allocation6 + $0x1718] sm:$0xff]
          %v1889 = vld [vmem:[#allocation6 + $0x1720] sm:$0xff]
          %v1890 = vld [vmem:[#allocation6 + $0x1728] sm:$0xff]
          %v1891 = vld [vmem:[#allocation6 + $0x1730] sm:$0xff]
          %v1892 = vld [vmem:[#allocation6 + $0x1738] sm:$0xff]
          %v1893 = vld [vmem:[#allocation6 + $0x1740] sm:$0xff]
          %v1894 = vld [vmem:[#allocation6 + $0x1748] sm:$0xff]
          %v1895 = vld [vmem:[#allocation6 + $0x1750] sm:$0xff]
          %v1896 = vld [vmem:[#allocation6 + $0x1758] sm:$0xff]
          %v1897 = vld [vmem:[#allocation6 + $0x1760] sm:$0xff]
          %v1898 = vld [vmem:[#allocation6 + $0x1768] sm:$0xff]
          %v1899 = vld [vmem:[#allocation6 + $0x1770] sm:$0xff]
          %v1900 = vld [vmem:[#allocation6 + $0x1778] sm:$0xff]
          %v1901 = vld [vmem:[#allocation6 + $0x1780] sm:$0xff]
          %v1902 = vld [vmem:[#allocation6 + $0x1788] sm:$0xff]
          %v1903 = vld [vmem:[#allocation6 + $0x1790] sm:$0xff]
          %v1904 = vld [vmem:[#allocation6 + $0x1798] sm:$0xff]
          %v1905 = vld [vmem:[#allocation6 + $0x17a0] sm:$0xff]
          %v1906 = vld [vmem:[#allocation6 + $0x17a8] sm:$0xff]
          %v1907 = vld [vmem:[#allocation6 + $0x17b0] sm:$0xff]
          %v1908 = vld [vmem:[#allocation6 + $0x17b8] sm:$0xff]
          %v1909 = vld [vmem:[#allocation6 + $0x17c0] sm:$0xff]
          %v1910 = vld [vmem:[#allocation6 + $0x17c8] sm:$0xff]
          %v1911 = vld [vmem:[#allocation6 + $0x17d0] sm:$0xff]
          %v1912 = vld [vmem:[#allocation6 + $0x17d8] sm:$0xff]
          %v1913 = vld [vmem:[#allocation6 + $0x17e0] sm:$0xff]
          %v1914 = vld [vmem:[#allocation6 + $0x17e8] sm:$0xff]
          %v1915 = vld [vmem:[#allocation6 + $0x17f0] sm:$0xff]
          %v1916 = vld [vmem:[#allocation6 + $0x17f8] sm:$0xff]
          %v1917 = vld [vmem:[#allocation6 + $0x1800] sm:$0xff]
          %v1918 = vld [vmem:[#allocation6 + $0x1808] sm:$0xff]
          %v1919 = vld [vmem:[#allocation6 + $0x1810] sm:$0xff]
          %v1920 = vld [vmem:[#allocation6 + $0x1818] sm:$0xff]
          %v1921 = vld [vmem:[#allocation6 + $0x1820] sm:$0xff]
          %v1922 = vld [vmem:[#allocation6 + $0x1828] sm:$0xff]
          %v1923 = vld [vmem:[#allocation6 + $0x1830] sm:$0xff]
          %v1924 = vld [vmem:[#allocation6 + $0x1838] sm:$0xff]
          %v1925 = vld [vmem:[#allocation6 + $0x1840] sm:$0xff]
          %v1926 = vld [vmem:[#allocation6 + $0x1848] sm:$0xff]
          %v1927 = vld [vmem:[#allocation6 + $0x1850] sm:$0xff]
          %v1928 = vld [vmem:[#allocation6 + $0x1858] sm:$0xff]
          %v1929 = vld [vmem:[#allocation6 + $0x1860] sm:$0xff]
          %v1930 = vld [vmem:[#allocation6 + $0x1868] sm:$0xff]
          %v1931 = vld [vmem:[#allocation6 + $0x1870] sm:$0xff]
          %v1932 = vld [vmem:[#allocation6 + $0x1878] sm:$0xff]
          %v1933 = vld [vmem:[#allocation6 + $0x1880] sm:$0xff]
          %v1934 = vld [vmem:[#allocation6 + $0x1888] sm:$0xff]
          %v1935 = vld [vmem:[#allocation6 + $0x1890] sm:$0xff]
          %v1936 = vld [vmem:[#allocation6 + $0x1898] sm:$0xff]
          %v1937 = vld [vmem:[#allocation6 + $0x18a0] sm:$0xff]
          %v1938 = vld [vmem:[#allocation6 + $0x18a8] sm:$0xff]
          %v1939 = vld [vmem:[#allocation6 + $0x18b0] sm:$0xff]
          %v1940 = vld [vmem:[#allocation6 + $0x18b8] sm:$0xff]
          %v1941 = vld [vmem:[#allocation6 + $0x18c0] sm:$0xff]
          %v1942 = vld [vmem:[#allocation6 + $0x18c8] sm:$0xff]
          %v1943 = vld [vmem:[#allocation6 + $0x18d0] sm:$0xff]
          %v1944 = vld [vmem:[#allocation6 + $0x18d8] sm:$0xff]
          %v1945 = vld [vmem:[#allocation6 + $0x18e0] sm:$0xff]
          %v1946 = vld [vmem:[#allocation6 + $0x18e8] sm:$0xff]
          %v1947 = vld [vmem:[#allocation6 + $0x18f0] sm:$0xff]
          %v1948 = vld [vmem:[#allocation6 + $0x18f8] sm:$0xff]
          %v1949 = vld [vmem:[#allocation6 + $0x1900] sm:$0xff]
          %v1950 = vld [vmem:[#allocation6 + $0x1908] sm:$0xff]
          %v1951 = vld [vmem:[#allocation6 + $0x1910] sm:$0xff]
          %v1952 = vld [vmem:[#allocation6 + $0x1918] sm:$0xff]
          %v1953 = vld [vmem:[#allocation6 + $0x1920] sm:$0xff]
          %v1954 = vld [vmem:[#allocation6 + $0x1928] sm:$0xff]
          %v1955 = vld [vmem:[#allocation6 + $0x1930] sm:$0xff]
          %v1956 = vld [vmem:[#allocation6 + $0x1938] sm:$0xff]
          %v1957 = vld [vmem:[#allocation6 + $0x1940] sm:$0xff]
          %v1958 = vld [vmem:[#allocation6 + $0x1948] sm:$0xff]
          %v1959 = vld [vmem:[#allocation6 + $0x1950] sm:$0xff]
          %v1960 = vld [vmem:[#allocation6 + $0x1958] sm:$0xff]
          %v1961 = vld [vmem:[#allocation6 + $0x1960] sm:$0xff]
          %v1962 = vld [vmem:[#allocation6 + $0x1968] sm:$0xff]
          %v1963 = vld [vmem:[#allocation6 + $0x1970] sm:$0xff]
          %v1964 = vld [vmem:[#allocation6 + $0x1978] sm:$0xff]
          %v1965 = vld [vmem:[#allocation6 + $0x1980] sm:$0xff]
          %v1966 = vld [vmem:[#allocation6 + $0x1988] sm:$0xff]
          %v1967 = vld [vmem:[#allocation6 + $0x1990] sm:$0xff]
          %v1968 = vld [vmem:[#allocation6 + $0x1998] sm:$0xff]
          %v1969 = vld [vmem:[#allocation6 + $0x19a0] sm:$0xff]
          %v1970 = vld [vmem:[#allocation6 + $0x19a8] sm:$0xff]
          %v1971 = vld [vmem:[#allocation6 + $0x19b0] sm:$0xff]
          %v1972 = vld [vmem:[#allocation6 + $0x19b8] sm:$0xff]
          %v1973 = vld [vmem:[#allocation6 + $0x19c0] sm:$0xff]
          %v1974 = vld [vmem:[#allocation6 + $0x19c8] sm:$0xff]
          %v1975 = vld [vmem:[#allocation6 + $0x19d0] sm:$0xff]
          %v1976 = vld [vmem:[#allocation6 + $0x19d8] sm:$0xff]
          %v1977 = vld [vmem:[#allocation6 + $0x19e0] sm:$0xff]
          %v1978 = vld [vmem:[#allocation6 + $0x19e8] sm:$0xff]
          %v1979 = vld [vmem:[#allocation6 + $0x19f0] sm:$0xff]
          %v1980 = vld [vmem:[#allocation6 + $0x19f8] sm:$0xff]
          %v1981 = vld [vmem:[#allocation6 + $0x1a00] sm:$0xff]
          %v1982 = vld [vmem:[#allocation6 + $0x1a08] sm:$0xff]
          %v1983 = vld [vmem:[#allocation6 + $0x1a10] sm:$0xff]
          %v1984 = vld [vmem:[#allocation6 + $0x1a18] sm:$0xff]
          %v1985 = vld [vmem:[#allocation6 + $0x1a20] sm:$0xff]
          %v1986 = vld [vmem:[#allocation6 + $0x1a28] sm:$0xff]
          %v1987 = vld [vmem:[#allocation6 + $0x1a30] sm:$0xff]
          %v1988 = vld [vmem:[#allocation6 + $0x1a38] sm:$0xff]
          %v1989 = vld [vmem:[#allocation6 + $0x1a40] sm:$0xff]
          %v1990 = vld [vmem:[#allocation6 + $0x1a48] sm:$0xff]
          %v1991 = vld [vmem:[#allocation6 + $0x1a50] sm:$0xff]
          %v1992 = vld [vmem:[#allocation6 + $0x1a58] sm:$0xff]
          %v1993 = vld [vmem:[#allocation6 + $0x1a60] sm:$0xff]
          %v1994 = vld [vmem:[#allocation6 + $0x1a68] sm:$0xff]
          %v1995 = vld [vmem:[#allocation6 + $0x1a70] sm:$0xff]
          %v1996 = vld [vmem:[#allocation6 + $0x1a78] sm:$0xff]
          %v1997 = vld [vmem:[#allocation6 + $0x1a80] sm:$0xff]
          %v1998 = vld [vmem:[#allocation6 + $0x1a88] sm:$0xff]
          %v1999 = vld [vmem:[#allocation6 + $0x1a90] sm:$0xff]
          %v2000 = vld [vmem:[#allocation6 + $0x1a98] sm:$0xff]
          %v2001 = vld [vmem:[#allocation6 + $0x1aa0] sm:$0xff]
          %v2002 = vld [vmem:[#allocation6 + $0x1aa8] sm:$0xff]
          %v2003 = vld [vmem:[#allocation6 + $0x1ab0] sm:$0xff]
          %v2004 = vld [vmem:[#allocation6 + $0x1ab8] sm:$0xff]
          %v2005 = vld [vmem:[#allocation6 + $0x1ac0] sm:$0xff]
          %v2006 = vld [vmem:[#allocation6 + $0x1ac8] sm:$0xff]
          %v2007 = vld [vmem:[#allocation6 + $0x1ad0] sm:$0xff]
          %v2008 = vld [vmem:[#allocation6 + $0x1ad8] sm:$0xff]
          %v2009 = vld [vmem:[#allocation6 + $0x1ae0] sm:$0xff]
          %v2010 = vld [vmem:[#allocation6 + $0x1ae8] sm:$0xff]
          %v2011 = vld [vmem:[#allocation6 + $0x1af0] sm:$0xff]
          %v2012 = vld [vmem:[#allocation6 + $0x1af8] sm:$0xff]
          %v2013 = vld [vmem:[#allocation6 + $0x1b00] sm:$0xff]
          %v2014 = vld [vmem:[#allocation6 + $0x1b08] sm:$0xff]
          %v2015 = vld [vmem:[#allocation6 + $0x1b10] sm:$0xff]
          %v2016 = vld [vmem:[#allocation6 + $0x1b18] sm:$0xff]
          %v2017 = vld [vmem:[#allocation6 + $0x1b20] sm:$0xff]
          %v2018 = vld [vmem:[#allocation6 + $0x1b28] sm:$0xff]
          %v2019 = vld [vmem:[#allocation6 + $0x1b30] sm:$0xff]
          %v2020 = vld [vmem:[#allocation6 + $0x1b38] sm:$0xff]
          %v2021 = vld [vmem:[#allocation6 + $0x1b40] sm:$0xff]
          %v2022 = vld [vmem:[#allocation6 + $0x1b48] sm:$0xff]
          %v2023 = vld [vmem:[#allocation6 + $0x1b50] sm:$0xff]
          %v2024 = vld [vmem:[#allocation6 + $0x1b58] sm:$0xff]
          %v2025 = vld [vmem:[#allocation6 + $0x1b60] sm:$0xff]
          %v2026 = vld [vmem:[#allocation6 + $0x1b68] sm:$0xff]
          %v2027 = vld [vmem:[#allocation6 + $0x1b70] sm:$0xff]
          %v2028 = vld [vmem:[#allocation6 + $0x1b78] sm:$0xff]
          %v2029 = vld [vmem:[#allocation6 + $0x1b80] sm:$0xff]
          %v2030 = vld [vmem:[#allocation6 + $0x1b88] sm:$0xff]
          %v2031 = vld [vmem:[#allocation6 + $0x1b90] sm:$0xff]
          %v2032 = vld [vmem:[#allocation6 + $0x1b98] sm:$0xff]
          %v2033 = vld [vmem:[#allocation6 + $0x1ba0] sm:$0xff]
          %v2034 = vld [vmem:[#allocation6 + $0x1ba8] sm:$0xff]
          %v2035 = vld [vmem:[#allocation6 + $0x1bb0] sm:$0xff]
          %v2036 = vld [vmem:[#allocation6 + $0x1bb8] sm:$0xff]
          %v2037 = vld [vmem:[#allocation6 + $0x1bc0] sm:$0xff]
          %v2038 = vld [vmem:[#allocation6 + $0x1bc8] sm:$0xff]
          %v2039 = vld [vmem:[#allocation6 + $0x1bd0] sm:$0xff]
          %v2040 = vld [vmem:[#allocation6 + $0x1bd8] sm:$0xff]
          %v2041 = vld [vmem:[#allocation6 + $0x1be0] sm:$0xff]
          %v2042 = vld [vmem:[#allocation6 + $0x1be8] sm:$0xff]
          %v2043 = vld [vmem:[#allocation6 + $0x1bf0] sm:$0xff]
          %v2044 = vld [vmem:[#allocation6 + $0x1bf8] sm:$0xff]
          %v2045 = vld [vmem:[#allocation6 + $0x1c00] sm:$0xff]
          %v2046 = vld [vmem:[#allocation6 + $0x1c08] sm:$0xff]
          %v2047 = vld [vmem:[#allocation6 + $0x1c10] sm:$0xff]
          %v2048 = vld [vmem:[#allocation6 + $0x1c18] sm:$0xff]
          %v2049 = vld [vmem:[#allocation6 + $0x1c20] sm:$0xff]
          %v2050 = vld [vmem:[#allocation6 + $0x1c28] sm:$0xff]
          %v2051 = vld [vmem:[#allocation6 + $0x1c30] sm:$0xff]
          %v2052 = vld [vmem:[#allocation6 + $0x1c38] sm:$0xff]
          %v2053 = vld [vmem:[#allocation6 + $0x1c40] sm:$0xff]
          %v2054 = vld [vmem:[#allocation6 + $0x1c48] sm:$0xff]
          %v2055 = vld [vmem:[#allocation6 + $0x1c50] sm:$0xff]
          %v2056 = vld [vmem:[#allocation6 + $0x1c58] sm:$0xff]
          %v2057 = vld [vmem:[#allocation6 + $0x1c60] sm:$0xff]
          %v2058 = vld [vmem:[#allocation6 + $0x1c68] sm:$0xff]
          %v2059 = vld [vmem:[#allocation6 + $0x1c70] sm:$0xff]
          %v2060 = vld [vmem:[#allocation6 + $0x1c78] sm:$0xff]
          %v2061 = vld [vmem:[#allocation6 + $0x1c80] sm:$0xff]
          %v2062 = vld [vmem:[#allocation6 + $0x1c88] sm:$0xff]
          %v2063 = vld [vmem:[#allocation6 + $0x1c90] sm:$0xff]
          %v2064 = vld [vmem:[#allocation6 + $0x1c98] sm:$0xff]
          %v2065 = vld [vmem:[#allocation6 + $0x1ca0] sm:$0xff]
          %v2066 = vld [vmem:[#allocation6 + $0x1ca8] sm:$0xff]
          %v2067 = vld [vmem:[#allocation6 + $0x1cb0] sm:$0xff]
          %v2068 = vld [vmem:[#allocation6 + $0x1cb8] sm:$0xff]
          %v2069 = vld [vmem:[#allocation6 + $0x1cc0] sm:$0xff]
          %v2070 = vld [vmem:[#allocation6 + $0x1cc8] sm:$0xff]
          %v2071 = vld [vmem:[#allocation6 + $0x1cd0] sm:$0xff]
          %v2072 = vld [vmem:[#allocation6 + $0x1cd8] sm:$0xff]
          %v2073 = vld [vmem:[#allocation6 + $0x1ce0] sm:$0xff]
          %v2074 = vld [vmem:[#allocation6 + $0x1ce8] sm:$0xff]
          %v2075 = vld [vmem:[#allocation6 + $0x1cf0] sm:$0xff]
          %v2076 = vld [vmem:[#allocation6 + $0x1cf8] sm:$0xff]
          %v2077 = vld [vmem:[#allocation6 + $0x1d00] sm:$0xff]
          %v2078 = vld [vmem:[#allocation6 + $0x1d08] sm:$0xff]
          %v2079 = vld [vmem:[#allocation6 + $0x1d10] sm:$0xff]
          %v2080 = vld [vmem:[#allocation6 + $0x1d18] sm:$0xff]
          %v2081 = vld [vmem:[#allocation6 + $0x1d20] sm:$0xff]
          %v2082 = vld [vmem:[#allocation6 + $0x1d28] sm:$0xff]
          %v2083 = vld [vmem:[#allocation6 + $0x1d30] sm:$0xff]
          %v2084 = vld [vmem:[#allocation6 + $0x1d38] sm:$0xff]
          %v2085 = vld [vmem:[#allocation6 + $0x1d40] sm:$0xff]
          %v2086 = vld [vmem:[#allocation6 + $0x1d48] sm:$0xff]
          %v2087 = vld [vmem:[#allocation6 + $0x1d50] sm:$0xff]
          %v2088 = vld [vmem:[#allocation6 + $0x1d58] sm:$0xff]
          %v2089 = vld [vmem:[#allocation6 + $0x1d60] sm:$0xff]
          %v2090 = vld [vmem:[#allocation6 + $0x1d68] sm:$0xff]
          %v2091 = vld [vmem:[#allocation6 + $0x1d70] sm:$0xff]
          %v2092 = vld [vmem:[#allocation6 + $0x1d78] sm:$0xff]
          %v2093 = vld [vmem:[#allocation6 + $0x1d80] sm:$0xff]
          %v2094 = vld [vmem:[#allocation6 + $0x1d88] sm:$0xff]
          %v2095 = vld [vmem:[#allocation6 + $0x1d90] sm:$0xff]
          %v2096 = vld [vmem:[#allocation6 + $0x1d98] sm:$0xff]
          %v2097 = vld [vmem:[#allocation6 + $0x1da0] sm:$0xff]
          %v2098 = vld [vmem:[#allocation6 + $0x1da8] sm:$0xff]
          %v2099 = vld [vmem:[#allocation6 + $0x1db0] sm:$0xff]
          %v2100 = vld [vmem:[#allocation6 + $0x1db8] sm:$0xff]
          %v2101 = vld [vmem:[#allocation6 + $0x1dc0] sm:$0xff]
          %v2102 = vld [vmem:[#allocation6 + $0x1dc8] sm:$0xff]
          %v2103 = vld [vmem:[#allocation6 + $0x1dd0] sm:$0xff]
          %v2104 = vld [vmem:[#allocation6 + $0x1dd8] sm:$0xff]
          %v2105 = vld [vmem:[#allocation6 + $0x1de0] sm:$0xff]
          %v2106 = vld [vmem:[#allocation6 + $0x1de8] sm:$0xff]
          %v2107 = vld [vmem:[#allocation6 + $0x1df0] sm:$0xff]
          %v2108 = vld [vmem:[#allocation6 + $0x1df8] sm:$0xff]
          %v2109 = vld [vmem:[#allocation6 + $0x1e00] sm:$0xff]
          %v2110 = vld [vmem:[#allocation6 + $0x1e08] sm:$0xff]
          %v2111 = vld [vmem:[#allocation6 + $0x1e10] sm:$0xff]
          %v2112 = vld [vmem:[#allocation6 + $0x1e18] sm:$0xff]
          %v2113 = vld [vmem:[#allocation6 + $0x1e20] sm:$0xff]
          %v2114 = vld [vmem:[#allocation6 + $0x1e28] sm:$0xff]
          %v2115 = vld [vmem:[#allocation6 + $0x1e30] sm:$0xff]
          %v2116 = vld [vmem:[#allocation6 + $0x1e38] sm:$0xff]
          %v2117 = vld [vmem:[#allocation6 + $0x1e40] sm:$0xff]
          %v2118 = vld [vmem:[#allocation6 + $0x1e48] sm:$0xff]
          %v2119 = vld [vmem:[#allocation6 + $0x1e50] sm:$0xff]
          %v2120 = vld [vmem:[#allocation6 + $0x1e58] sm:$0xff]
          %v2121 = vld [vmem:[#allocation6 + $0x1e60] sm:$0xff]
          %v2122 = vld [vmem:[#allocation6 + $0x1e68] sm:$0xff]
          %v2123 = vld [vmem:[#allocation6 + $0x1e70] sm:$0xff]
          %v2124 = vld [vmem:[#allocation6 + $0x1e78] sm:$0xff]
          %v2125 = vld [vmem:[#allocation6 + $0x1e80] sm:$0xff]
          %v2126 = vld [vmem:[#allocation6 + $0x1e88] sm:$0xff]
          %v2127 = vld [vmem:[#allocation6 + $0x1e90] sm:$0xff]
          %v2128 = vld [vmem:[#allocation6 + $0x1e98] sm:$0xff]
          %v2129 = vld [vmem:[#allocation6 + $0x1ea0] sm:$0xff]
          %v2130 = vld [vmem:[#allocation6 + $0x1ea8] sm:$0xff]
          %v2131 = vld [vmem:[#allocation6 + $0x1eb0] sm:$0xff]
          %v2132 = vld [vmem:[#allocation6 + $0x1eb8] sm:$0xff]
          %v2133 = vld [vmem:[#allocation6 + $0x1ec0] sm:$0xff]
          %v2134 = vld [vmem:[#allocation6 + $0x1ec8] sm:$0xff]
          %v2135 = vld [vmem:[#allocation6 + $0x1ed0] sm:$0xff]
          %v2136 = vld [vmem:[#allocation6 + $0x1ed8] sm:$0xff]
          %v2137 = vld [vmem:[#allocation6 + $0x1ee0] sm:$0xff]
          %v2138 = vld [vmem:[#allocation6 + $0x1ee8] sm:$0xff]
          %v2139 = vld [vmem:[#allocation6 + $0x1ef0] sm:$0xff]
          %v2140 = vld [vmem:[#allocation6 + $0x1ef8] sm:$0xff]
          %v2141 = vld [vmem:[#allocation6 + $0x1f00] sm:$0xff]
          %v2142 = vld [vmem:[#allocation6 + $0x1f08] sm:$0xff]
          %v2143 = vld [vmem:[#allocation6 + $0x1f10] sm:$0xff]
          %v2144 = vld [vmem:[#allocation6 + $0x1f18] sm:$0xff]
          %v2145 = vld [vmem:[#allocation6 + $0x1f20] sm:$0xff]
          %v2146 = vld [vmem:[#allocation6 + $0x1f28] sm:$0xff]
          %v2147 = vld [vmem:[#allocation6 + $0x1f30] sm:$0xff]
          %v2148 = vld [vmem:[#allocation6 + $0x1f38] sm:$0xff]
          %v2149 = vld [vmem:[#allocation6 + $0x1f40] sm:$0xff]
          %v2150 = vld [vmem:[#allocation6 + $0x1f48] sm:$0xff]
          %v2151 = vld [vmem:[#allocation6 + $0x1f50] sm:$0xff]
          %v2152 = vld [vmem:[#allocation6 + $0x1f58] sm:$0xff]
          %v2153 = vld [vmem:[#allocation6 + $0x1f60] sm:$0xff]
          %v2154 = vld [vmem:[#allocation6 + $0x1f68] sm:$0xff]
          %v2155 = vld [vmem:[#allocation6 + $0x1f70] sm:$0xff]
          %v2156 = vld [vmem:[#allocation6 + $0x1f78] sm:$0xff]
          %v2157 = vld [vmem:[#allocation6 + $0x1f80] sm:$0xff]
          %v2158 = vld [vmem:[#allocation6 + $0x1f88] sm:$0xff]
          %v2159 = vld [vmem:[#allocation6 + $0x1f90] sm:$0xff]
          %v2160 = vld [vmem:[#allocation6 + $0x1f98] sm:$0xff]
          %v2161 = vld [vmem:[#allocation6 + $0x1fa0] sm:$0xff]
          %v2162 = vld [vmem:[#allocation6 + $0x1fa8] sm:$0xff]
          %v2163 = vld [vmem:[#allocation6 + $0x1fb0] sm:$0xff]
          %v2164 = vld [vmem:[#allocation6 + $0x1fb8] sm:$0xff]
          %v2165 = vld [vmem:[#allocation6 + $0x1fc0] sm:$0xff]
          %v2166 = vld [vmem:[#allocation6 + $0x1fc8] sm:$0xff]
          %v2167 = vld [vmem:[#allocation6 + $0x1fd0] sm:$0xff]
          %v2168 = vld [vmem:[#allocation6 + $0x1fd8] sm:$0xff]
          %v2169 = vld [vmem:[#allocation6 + $0x1fe0] sm:$0xff]
          %v2170 = vld [vmem:[#allocation6 + $0x1fe8] sm:$0xff]
          %v2171 = vld [vmem:[#allocation6 + $0x1ff0] sm:$0xff]
          %v2172 = vld [vmem:[#allocation6 + $0x1ff8] sm:$0xff]
          %v2173 = vld [vmem:[#allocation6 + $0x2000] sm:$0xff]
          %v2174 = vld [vmem:[#allocation6 + $0x2008] sm:$0xff]
          %v2175 = vld [vmem:[#allocation6 + $0x2010] sm:$0xff]
          %v2176 = vld [vmem:[#allocation6 + $0x2018] sm:$0xff]
          %v2177 = vld [vmem:[#allocation6 + $0x2020] sm:$0xff]
          %v2178 = vld [vmem:[#allocation6 + $0x2028] sm:$0xff]
          %v2179 = vld [vmem:[#allocation6 + $0x2030] sm:$0xff]
          %v2180 = vld [vmem:[#allocation6 + $0x2038] sm:$0xff]
          %v2181 = vld [vmem:[#allocation6 + $0x2040] sm:$0xff]
          %v2182 = vld [vmem:[#allocation6 + $0x2048] sm:$0xff]
          %v2183 = vld [vmem:[#allocation6 + $0x2050] sm:$0xff]
          %v2184 = vld [vmem:[#allocation6 + $0x2058] sm:$0xff]
          %v2185 = vld [vmem:[#allocation6 + $0x2060] sm:$0xff]
          %v2186 = vld [vmem:[#allocation6 + $0x2068] sm:$0xff]
          %v2187 = vld [vmem:[#allocation6 + $0x2070] sm:$0xff]
          %v2188 = vld [vmem:[#allocation6 + $0x2078] sm:$0xff]
          %v2189 = vld [vmem:[#allocation6 + $0x2080] sm:$0xff]
          %v2190 = vld [vmem:[#allocation6 + $0x2088] sm:$0xff]
          %v2191 = vld [vmem:[#allocation6 + $0x2090] sm:$0xff]
          %v2192 = vld [vmem:[#allocation6 + $0x2098] sm:$0xff]
          %v2193 = vld [vmem:[#allocation6 + $0x20a0] sm:$0xff]
          %v2194 = vld [vmem:[#allocation6 + $0x20a8] sm:$0xff]
          %v2195 = vld [vmem:[#allocation6 + $0x20b0] sm:$0xff]
          %v2196 = vld [vmem:[#allocation6 + $0x20b8] sm:$0xff]
          %v2197 = vld [vmem:[#allocation6 + $0x20c0] sm:$0xff]
          %v2198 = vld [vmem:[#allocation6 + $0x20c8] sm:$0xff]
          %v2199 = vld [vmem:[#allocation6 + $0x20d0] sm:$0xff]
          %v2200 = vld [vmem:[#allocation6 + $0x20d8] sm:$0xff]
          %v2201 = vld [vmem:[#allocation6 + $0x20e0] sm:$0xff]
          %v2202 = vld [vmem:[#allocation6 + $0x20e8] sm:$0xff]
          %v2203 = vld [vmem:[#allocation6 + $0x20f0] sm:$0xff]
          %v2204 = vld [vmem:[#allocation6 + $0x20f8] sm:$0xff]
          %v2205 = vld [vmem:[#allocation6 + $0x2100] sm:$0xff]
          %v2206 = vld [vmem:[#allocation6 + $0x2108] sm:$0xff]
          %v2207 = vld [vmem:[#allocation6 + $0x2110] sm:$0xff]
          %v2208 = vld [vmem:[#allocation6 + $0x2118] sm:$0xff]
          %v2209 = vld [vmem:[#allocation6 + $0x2120] sm:$0xff]
          %v2210 = vld [vmem:[#allocation6 + $0x2128] sm:$0xff]
          %v2211 = vld [vmem:[#allocation6 + $0x2130] sm:$0xff]
          %v2212 = vld [vmem:[#allocation6 + $0x2138] sm:$0xff]
          %v2213 = vld [vmem:[#allocation6 + $0x2140] sm:$0xff]
          %v2214 = vld [vmem:[#allocation6 + $0x2148] sm:$0xff]
          %v2215 = vld [vmem:[#allocation6 + $0x2150] sm:$0xff]
          %v2216 = vld [vmem:[#allocation6 + $0x2158] sm:$0xff]
          %v2217 = vld [vmem:[#allocation6 + $0x2160] sm:$0xff]
          %v2218 = vld [vmem:[#allocation6 + $0x2168] sm:$0xff]
          %v2219 = vld [vmem:[#allocation6 + $0x2170] sm:$0xff]
          %v2220 = vld [vmem:[#allocation6 + $0x2178] sm:$0xff]
          %v2221 = vld [vmem:[#allocation6 + $0x2180] sm:$0xff]
          %v2222 = vld [vmem:[#allocation6 + $0x2188] sm:$0xff]
          %v2223 = vld [vmem:[#allocation6 + $0x2190] sm:$0xff]
          %v2224 = vld [vmem:[#allocation6 + $0x2198] sm:$0xff]
          %v2225 = vld [vmem:[#allocation6 + $0x21a0] sm:$0xff]
          %v2226 = vld [vmem:[#allocation6 + $0x21a8] sm:$0xff]
          %v2227 = vld [vmem:[#allocation6 + $0x21b0] sm:$0xff]
          %v2228 = vld [vmem:[#allocation6 + $0x21b8] sm:$0xff]
          %v2229 = vld [vmem:[#allocation6 + $0x21c0] sm:$0xff]
          %v2230 = vld [vmem:[#allocation6 + $0x21c8] sm:$0xff]
          %v2231 = vld [vmem:[#allocation6 + $0x21d0] sm:$0xff]
          %v2232 = vld [vmem:[#allocation6 + $0x21d8] sm:$0xff]
          %v2233 = vld [vmem:[#allocation6 + $0x21e0] sm:$0xff]
          %v2234 = vld [vmem:[#allocation6 + $0x21e8] sm:$0xff]
          %v2235 = vld [vmem:[#allocation6 + $0x21f0] sm:$0xff]
          %v2236 = vld [vmem:[#allocation6 + $0x21f8] sm:$0xff]
          %v2237 = vld [vmem:[#allocation6 + $0x2200] sm:$0xff]
          %v2238 = vld [vmem:[#allocation6 + $0x2208] sm:$0xff]
          %v2239 = vld [vmem:[#allocation6 + $0x2210] sm:$0xff]
          %v2240 = vld [vmem:[#allocation6 + $0x2218] sm:$0xff]
          %v2241 = vld [vmem:[#allocation6 + $0x2220] sm:$0xff]
          %v2242 = vld [vmem:[#allocation6 + $0x2228] sm:$0xff]
          %v2243 = vld [vmem:[#allocation6 + $0x2230] sm:$0xff]
          %v2244 = vld [vmem:[#allocation6 + $0x2238] sm:$0xff]
          %v2245 = vld [vmem:[#allocation6 + $0x2240] sm:$0xff]
          %v2246 = vld [vmem:[#allocation6 + $0x2248] sm:$0xff]
          %v2247 = vld [vmem:[#allocation6 + $0x2250] sm:$0xff]
          %v2248 = vld [vmem:[#allocation6 + $0x2258] sm:$0xff]
          %v2249 = vld [vmem:[#allocation6 + $0x2260] sm:$0xff]
          %v2250 = vld [vmem:[#allocation6 + $0x2268] sm:$0xff]
          %v2251 = vld [vmem:[#allocation6 + $0x2270] sm:$0xff]
          %v2252 = vld [vmem:[#allocation6 + $0x2278] sm:$0xff]
          %v2253 = vld [vmem:[#allocation6 + $0x2280] sm:$0xff]
          %v2254 = vld [vmem:[#allocation6 + $0x2288] sm:$0xff]
          %v2255 = vld [vmem:[#allocation6 + $0x2290] sm:$0xff]
          %v2256 = vld [vmem:[#allocation6 + $0x2298] sm:$0xff]
          %v2257 = vld [vmem:[#allocation6 + $0x22a0] sm:$0xff]
          %v2258 = vld [vmem:[#allocation6 + $0x22a8] sm:$0xff]
          %v2259 = vld [vmem:[#allocation6 + $0x22b0] sm:$0xff]
          %v2260 = vld [vmem:[#allocation6 + $0x22b8] sm:$0xff]
          %v2261 = vld [vmem:[#allocation6 + $0x22c0] sm:$0xff]
          %v2262 = vld [vmem:[#allocation6 + $0x22c8] sm:$0xff]
          %v2263 = vld [vmem:[#allocation6 + $0x22d0] sm:$0xff]
          %v2264 = vld [vmem:[#allocation6 + $0x22d8] sm:$0xff]
          %v2265 = vld [vmem:[#allocation6 + $0x22e0] sm:$0xff]
          %v2266 = vld [vmem:[#allocation6 + $0x22e8] sm:$0xff]
          %v2267 = vld [vmem:[#allocation6 + $0x22f0] sm:$0xff]
          %v2268 = vld [vmem:[#allocation6 + $0x22f8] sm:$0xff]
          %v2269 = vld [vmem:[#allocation6 + $0x2300] sm:$0xff]
          %v2270 = vld [vmem:[#allocation6 + $0x2308] sm:$0xff]
          %v2271 = vld [vmem:[#allocation6 + $0x2310] sm:$0xff]
          %v2272 = vld [vmem:[#allocation6 + $0x2318] sm:$0xff]
          %v2273 = vld [vmem:[#allocation6 + $0x2320] sm:$0xff]
          %v2274 = vld [vmem:[#allocation6 + $0x2328] sm:$0xff]
          %v2275 = vld [vmem:[#allocation6 + $0x2330] sm:$0xff]
          %v2276 = vld [vmem:[#allocation6 + $0x2338] sm:$0xff]
          %v2277 = vld [vmem:[#allocation6 + $0x2340] sm:$0xff]
          %v2278 = vld [vmem:[#allocation6 + $0x2348] sm:$0xff]
          %v2279 = vld [vmem:[#allocation6 + $0x2350] sm:$0xff]
          %v2280 = vld [vmem:[#allocation6 + $0x2358] sm:$0xff]
          %v2281 = vld [vmem:[#allocation6 + $0x2360] sm:$0xff]
          %v2282 = vld [vmem:[#allocation6 + $0x2368] sm:$0xff]
          %v2283 = vld [vmem:[#allocation6 + $0x2370] sm:$0xff]
          %v2284 = vld [vmem:[#allocation6 + $0x2378] sm:$0xff]
          %v2285 = vld [vmem:[#allocation6 + $0x2380] sm:$0xff]
          %v2286 = vld [vmem:[#allocation6 + $0x2388] sm:$0xff]
          %v2287 = vld [vmem:[#allocation6 + $0x2390] sm:$0xff]
          %v2288 = vld [vmem:[#allocation6 + $0x2398] sm:$0xff]
          %v2289 = vld [vmem:[#allocation6 + $0x23a0] sm:$0xff]
          %v2290 = vld [vmem:[#allocation6 + $0x23a8] sm:$0xff]
          %v2291 = vld [vmem:[#allocation6 + $0x23b0] sm:$0xff]
          %v2292 = vld [vmem:[#allocation6 + $0x23b8] sm:$0xff]
          %v2293 = vld [vmem:[#allocation6 + $0x23c0] sm:$0xff]
          %v2294 = vld [vmem:[#allocation6 + $0x23c8] sm:$0xff]
          %v2295 = vld [vmem:[#allocation6 + $0x23d0] sm:$0xff]
          %v2296 = vld [vmem:[#allocation6 + $0x23d8] sm:$0xff]
          %v2297 = vld [vmem:[#allocation6 + $0x23e0] sm:$0xff]
          %v2298 = vld [vmem:[#allocation6 + $0x23e8] sm:$0xff]
          %v2299 = vld [vmem:[#allocation6 + $0x23f0] sm:$0xff]
          %v2300 = vld [vmem:[#allocation6 + $0x23f8] sm:$0xff]
          %v2301 = vld [vmem:[#allocation6 + $0x2400] sm:$0xff]
          %v2302 = vld [vmem:[#allocation6 + $0x2408] sm:$0xff]
          %v2303 = vld [vmem:[#allocation6 + $0x2410] sm:$0xff]
          %v2304 = vld [vmem:[#allocation6 + $0x2418] sm:$0xff]
          %v2305 = vld [vmem:[#allocation6 + $0x2420] sm:$0xff]
          %v2306 = vld [vmem:[#allocation6 + $0x2428] sm:$0xff]
          %v2307 = vld [vmem:[#allocation6 + $0x2430] sm:$0xff]
          %v2308 = vld [vmem:[#allocation6 + $0x2438] sm:$0xff]
          %v2309 = vld [vmem:[#allocation6 + $0x2440] sm:$0xff]
          %v2310 = vld [vmem:[#allocation6 + $0x2448] sm:$0xff]
          %v2311 = vld [vmem:[#allocation6 + $0x2450] sm:$0xff]
          %v2312 = vld [vmem:[#allocation6 + $0x2458] sm:$0xff]
          %v2313 = vld [vmem:[#allocation6 + $0x2460] sm:$0xff]
          %v2314 = vld [vmem:[#allocation6 + $0x2468] sm:$0xff]
          %v2315 = vld [vmem:[#allocation6 + $0x2470] sm:$0xff]
          %v2316 = vld [vmem:[#allocation6 + $0x2478] sm:$0xff]
          %v2317 = vld [vmem:[#allocation6 + $0x2480] sm:$0xff]
          %v2318 = vld [vmem:[#allocation6 + $0x2488] sm:$0xff]
          %v2319 = vld [vmem:[#allocation6 + $0x2490] sm:$0xff]
          %v2320 = vld [vmem:[#allocation6 + $0x2498] sm:$0xff]
          %v2321 = vld [vmem:[#allocation6 + $0x24a0] sm:$0xff]
          %v2322 = vld [vmem:[#allocation6 + $0x24a8] sm:$0xff]
          %v2323 = vld [vmem:[#allocation6 + $0x24b0] sm:$0xff]
          %v2324 = vld [vmem:[#allocation6 + $0x24b8] sm:$0xff]
          %v2325 = vld [vmem:[#allocation6 + $0x24c0] sm:$0xff]
          %v2326 = vld [vmem:[#allocation6 + $0x24c8] sm:$0xff]
          %v2327 = vld [vmem:[#allocation6 + $0x24d0] sm:$0xff]
          %v2328 = vld [vmem:[#allocation6 + $0x24d8] sm:$0xff]
          %v2329 = vld [vmem:[#allocation6 + $0x24e0] sm:$0xff]
          %v2330 = vld [vmem:[#allocation6 + $0x24e8] sm:$0xff]
          %v2331 = vld [vmem:[#allocation6 + $0x24f0] sm:$0xff]
          %v2332 = vld [vmem:[#allocation6 + $0x24f8] sm:$0xff]
          %v2333 = vld [vmem:[#allocation6 + $0x2500] sm:$0xff]
          %v2334 = vld [vmem:[#allocation6 + $0x2508] sm:$0xff]
          %v2335 = vld [vmem:[#allocation6 + $0x2510] sm:$0xff]
          %v2336 = vld [vmem:[#allocation6 + $0x2518] sm:$0xff]
          %v2337 = vld [vmem:[#allocation6 + $0x2520] sm:$0xff]
          %v2338 = vld [vmem:[#allocation6 + $0x2528] sm:$0xff]
          %v2339 = vld [vmem:[#allocation6 + $0x2530] sm:$0xff]
          %v2340 = vld [vmem:[#allocation6 + $0x2538] sm:$0xff]
          %v2341 = vld [vmem:[#allocation6 + $0x2540] sm:$0xff]
          %v2342 = vld [vmem:[#allocation6 + $0x2548] sm:$0xff]
          %v2343 = vld [vmem:[#allocation6 + $0x2550] sm:$0xff]
          %v2344 = vld [vmem:[#allocation6 + $0x2558] sm:$0xff]
          %v2345 = vld [vmem:[#allocation6 + $0x2560] sm:$0xff]
          %v2346 = vld [vmem:[#allocation6 + $0x2568] sm:$0xff]
          %v2347 = vld [vmem:[#allocation6 + $0x2570] sm:$0xff]
          %v2348 = vld [vmem:[#allocation6 + $0x2578] sm:$0xff]
          %v2349 = vld [vmem:[#allocation6 + $0x2580] sm:$0xff]
          %v2350 = vld [vmem:[#allocation6 + $0x2588] sm:$0xff]
          %v2351 = vld [vmem:[#allocation6 + $0x2590] sm:$0xff]
          %v2352 = vld [vmem:[#allocation6 + $0x2598] sm:$0xff]
          %v2353 = vld [vmem:[#allocation6 + $0x25a0] sm:$0xff]
          %v2354 = vld [vmem:[#allocation6 + $0x25a8] sm:$0xff]
          %v2355 = vld [vmem:[#allocation6 + $0x25b0] sm:$0xff]
          %v2356 = vld [vmem:[#allocation6 + $0x25b8] sm:$0xff]
          %v2357 = vld [vmem:[#allocation6 + $0x25c0] sm:$0xff]
          %v2358 = vld [vmem:[#allocation6 + $0x25c8] sm:$0xff]
          %v2359 = vld [vmem:[#allocation6 + $0x25d0] sm:$0xff]
          %v2360 = vld [vmem:[#allocation6 + $0x25d8] sm:$0xff]
          %v2361 = vld [vmem:[#allocation6 + $0x25e0] sm:$0xff]
          %v2362 = vld [vmem:[#allocation6 + $0x25e8] sm:$0xff]
          %v2363 = vld [vmem:[#allocation6 + $0x25f0] sm:$0xff]
          %v2364 = vld [vmem:[#allocation6 + $0x25f8] sm:$0xff]
          %v2365 = vld [vmem:[#allocation6 + $0x2600] sm:$0xff]
          %v2366 = vld [vmem:[#allocation6 + $0x2608] sm:$0xff]
          %v2367 = vld [vmem:[#allocation6 + $0x2610] sm:$0xff]
          %v2368 = vld [vmem:[#allocation6 + $0x2618] sm:$0xff]
          %v2369 = vld [vmem:[#allocation6 + $0x2620] sm:$0xff]
          %v2370 = vld [vmem:[#allocation6 + $0x2628] sm:$0xff]
          %v2371 = vld [vmem:[#allocation6 + $0x2630] sm:$0xff]
          %v2372 = vld [vmem:[#allocation6 + $0x2638] sm:$0xff]
          %v2373 = vld [vmem:[#allocation6 + $0x2640] sm:$0xff]
          %v2374 = vld [vmem:[#allocation6 + $0x2648] sm:$0xff]
          %v2375 = vld [vmem:[#allocation6 + $0x2650] sm:$0xff]
          %v2376 = vld [vmem:[#allocation6 + $0x2658] sm:$0xff]
          %v2377 = vld [vmem:[#allocation6 + $0x2660] sm:$0xff]
          %v2378 = vld [vmem:[#allocation6 + $0x2668] sm:$0xff]
          %v2379 = vld [vmem:[#allocation6 + $0x2670] sm:$0xff]
          %v2380 = vld [vmem:[#allocation6 + $0x2678] sm:$0xff]
          %v2381 = vld [vmem:[#allocation6 + $0x2680] sm:$0xff]
          %v2382 = vld [vmem:[#allocation6 + $0x2688] sm:$0xff]
          %v2383 = vld [vmem:[#allocation6 + $0x2690] sm:$0xff]
          %v2384 = vld [vmem:[#allocation6 + $0x2698] sm:$0xff]
          %v2385 = vld [vmem:[#allocation6 + $0x26a0] sm:$0xff]
          %v2386 = vld [vmem:[#allocation6 + $0x26a8] sm:$0xff]
          %v2387 = vld [vmem:[#allocation6 + $0x26b0] sm:$0xff]
          %v2388 = vld [vmem:[#allocation6 + $0x26b8] sm:$0xff]
          %v2389 = vld [vmem:[#allocation6 + $0x26c0] sm:$0xff]
          %v2390 = vld [vmem:[#allocation6 + $0x26c8] sm:$0xff]
          %v2391 = vld [vmem:[#allocation6 + $0x26d0] sm:$0xff]
          %v2392 = vld [vmem:[#allocation6 + $0x26d8] sm:$0xff]
          %v2393 = vld [vmem:[#allocation6 + $0x26e0] sm:$0xff]
          %v2394 = vld [vmem:[#allocation6 + $0x26e8] sm:$0xff]
          %v2395 = vld [vmem:[#allocation6 + $0x26f0] sm:$0xff]
          %v2396 = vld [vmem:[#allocation6 + $0x26f8] sm:$0xff]
          %v2397 = vld [vmem:[#allocation6 + $0x2700] sm:$0xff]
          %v2398 = vld [vmem:[#allocation6 + $0x2708] sm:$0xff]
          %v2399 = vld [vmem:[#allocation6 + $0x2710] sm:$0xff]
          %v2400 = vld [vmem:[#allocation6 + $0x2718] sm:$0xff]
          %v2401 = vld [vmem:[#allocation6 + $0x2720] sm:$0xff]
          %v2402 = vld [vmem:[#allocation6 + $0x2728] sm:$0xff]
          %v2403 = vld [vmem:[#allocation6 + $0x2730] sm:$0xff]
          %v2404 = vld [vmem:[#allocation6 + $0x2738] sm:$0xff]
          %v2405 = vld [vmem:[#allocation6 + $0x2740] sm:$0xff]
          %v2406 = vld [vmem:[#allocation6 + $0x2748] sm:$0xff]
          %v2407 = vld [vmem:[#allocation6 + $0x2750] sm:$0xff]
          %v2408 = vld [vmem:[#allocation6 + $0x2758] sm:$0xff]
          %v2409 = vld [vmem:[#allocation6 + $0x2760] sm:$0xff]
          %v2410 = vld [vmem:[#allocation6 + $0x2768] sm:$0xff]
          %v2411 = vld [vmem:[#allocation6 + $0x2770] sm:$0xff]
          %v2412 = vld [vmem:[#allocation6 + $0x2778] sm:$0xff]
          %v2413 = vld [vmem:[#allocation6 + $0x2780] sm:$0xff]
          %v2414 = vld [vmem:[#allocation6 + $0x2788] sm:$0xff]
          %v2415 = vld [vmem:[#allocation6 + $0x2790] sm:$0xff]
          %v2416 = vld [vmem:[#allocation6 + $0x2798] sm:$0xff]
          %v2417 = vld [vmem:[#allocation6 + $0x27a0] sm:$0xff]
          %v2418 = vld [vmem:[#allocation6 + $0x27a8] sm:$0xff]
          %v2419 = vld [vmem:[#allocation6 + $0x27b0] sm:$0xff]
          %v2420 = vld [vmem:[#allocation6 + $0x27b8] sm:$0xff]
          %v2421 = vld [vmem:[#allocation6 + $0x27c0] sm:$0xff]
          %v2422 = vld [vmem:[#allocation6 + $0x27c8] sm:$0xff]
          %v2423 = vld [vmem:[#allocation6 + $0x27d0] sm:$0xff]
          %v2424 = vld [vmem:[#allocation6 + $0x27d8] sm:$0xff]
          %v2425 = vld [vmem:[#allocation6 + $0x27e0] sm:$0xff]
          %v2426 = vld [vmem:[#allocation6 + $0x27e8] sm:$0xff]
          %v2427 = vld [vmem:[#allocation6 + $0x27f0] sm:$0xff]
          %v2428 = vld [vmem:[#allocation6 + $0x27f8] sm:$0xff]
          %v2429 = vld [vmem:[#allocation8] sm:$0x1f]
          %v2431 = vlaneseq
          %v2432 = vshrl.u32 %v2431, 7
          %v2433 = vsub.s32 0, %v2432
          %v2434 = vrot.slane %v2429, %v2433
          %v2435 = vlaneseq
          %v2436 = vshrl.u32 %v2435, 7
          %v2437 = vsub.s32 1, %v2436
          %v2438 = vrot.slane %v2429, %v2437
          %v2439 = vlaneseq
          %v2440 = vshrl.u32 %v2439, 7
          %v2441 = vsub.s32 2, %v2440
          %v2442 = vrot.slane %v2429, %v2441
          %v2443 = vlaneseq
          %v2444 = vshrl.u32 %v2443, 7
          %v2445 = vsub.s32 3, %v2444
          %v2446 = vrot.slane %v2429, %v2445
          %v2447 = vlaneseq
          %v2448 = vshrl.u32 %v2447, 7
          %v2449 = vsub.s32 4, %v2448
          %v2450 = vrot.slane %v2429, %v2449
          %v2460 = vcombine.high %v1145, %v1145
          %v2462 = vunpack.c.l.s4 1983009808
          %v2463 = vunpack.c.0.s8 %v2462
          %v2464 = vlaneseq
          %v2465 = vshrl.u32 %v2464, 7
          %v2466 = vsub.s32 %v2463, %v2465
          %v2467 = vrot.slane %v1145, %v2466
          %v2469 = vunpack.c.l.s4 1983009808
          %v2470 = vunpack.c.0.s8 %v2469
          %v2471 = vlaneseq
          %v2472 = vshrl.u32 %v2471, 7
          %v2473 = vsub.s32 %v2470, %v2472
          %v2474 = vrot.slane %v2460, %v2473
          %v2475 = vcombine.high %v2467, %v2467
          %v2476 = vcombine.high %v2474, %v2474
          %v2477 = vcombine.high %v1146, %v1146
          %v2479 = vunpack.c.l.s4 1983009808
          %v2480 = vunpack.c.0.s8 %v2479
          %v2481 = vlaneseq
          %v2482 = vshrl.u32 %v2481, 7
          %v2483 = vsub.s32 %v2480, %v2482
          %v2484 = vrot.slane %v1146, %v2483
          %v2486 = vunpack.c.l.s4 1983009808
          %v2487 = vunpack.c.0.s8 %v2486
          %v2488 = vlaneseq
          %v2489 = vshrl.u32 %v2488, 7
          %v2490 = vsub.s32 %v2487, %v2489
          %v2491 = vrot.slane %v2477, %v2490
          %v2492 = vcombine.high %v2484, %v2484
          %v2493 = vcombine.high %v2491, %v2491
          %v2494 = vcombine.high %v1147, %v1147
          %v2496 = vunpack.c.l.s4 1983009808
          %v2497 = vunpack.c.0.s8 %v2496
          %v2498 = vlaneseq
          %v2499 = vshrl.u32 %v2498, 7
          %v2500 = vsub.s32 %v2497, %v2499
          %v2501 = vrot.slane %v1147, %v2500
          %v2503 = vunpack.c.l.s4 1983009808
          %v2504 = vunpack.c.0.s8 %v2503
          %v2505 = vlaneseq
          %v2506 = vshrl.u32 %v2505, 7
          %v2507 = vsub.s32 %v2504, %v2506
          %v2508 = vrot.slane %v2494, %v2507
          %v2509 = vcombine.high %v2501, %v2501
          %v2510 = vcombine.high %v2508, %v2508
          %v2511 = vcombine.high %v1148, %v1148
          %v2513 = vunpack.c.l.s4 1983009808
          %v2514 = vunpack.c.0.s8 %v2513
          %v2515 = vlaneseq
          %v2516 = vshrl.u32 %v2515, 7
          %v2517 = vsub.s32 %v2514, %v2516
          %v2518 = vrot.slane %v1148, %v2517
          %v2520 = vunpack.c.l.s4 1983009808
          %v2521 = vunpack.c.0.s8 %v2520
          %v2522 = vlaneseq
          %v2523 = vshrl.u32 %v2522, 7
          %v2524 = vsub.s32 %v2521, %v2523
          %v2525 = vrot.slane %v2511, %v2524
          %v2526 = vcombine.high %v2518, %v2518
          %v2527 = vcombine.high %v2525, %v2525
          %2544 = vmatprep.subr.mxu0 %v1150
          %2545 = vmatpush1.msra.mxu0 %v1149
          %2546 = vmatprep.subr.mxu0 %v1155
          %2547 = vmatpush1.msra.mxu0 %v1154
          %2548 = vmatprep.subr.mxu0 %v1160
          %2549 = vmatpush1.msra.mxu0 %v1159
          %2550 = vmatprep.subr.mxu0 %v1165
          %2551 = vmatpush1.msra.mxu0 %v1164
          %2552 = vmatprep.subr.mxu0 %v1170
          %2553 = vmatpush1.msra.mxu0 %v1169
          %2554 = vmatprep.subr.mxu0 %v1175
          %2555 = vmatpush1.msra.mxu0 %v1174
          %2556 = vmatprep.subr.mxu0 %v1180
          %2557 = vmatpush1.msra.mxu0 %v1179
          %2558 = vmatprep.subr.mxu0 %v1185
          %2559 = vmatpush1.msra.mxu0 %v1184
          %2560 = vmatprep.subr.mxu0 %v1190
          %2561 = vmatpush1.msra.mxu0 %v1189
          %2562 = vmatprep.subr.mxu0 %v1195
          %2563 = vmatpush1.msra.mxu0 %v1194
          %2564 = vmatprep.subr.mxu0 %v1200
          %2565 = vmatpush1.msra.mxu0 %v1199
          %2566 = vmatprep.subr.mxu0 %v1205
          %2567 = vmatpush1.msra.mxu0 %v1204
          %2568 = vmatprep.subr.mxu0 %v1210
          %2569 = vmatpush1.msra.mxu0 %v1209
          %2570 = vmatprep.subr.mxu0 %v1215
          %2571 = vmatpush1.msra.mxu0 %v1214
          %2572 = vmatprep.subr.mxu0 %v1220
          %2573 = vmatpush1.msra.mxu0 %v1219
          %2574 = vmatprep.subr.mxu0 %v1225
          %2575 = vmatpush1.msra.mxu0 %v1224
          %2576 = vmatprep.subr.mxu0 %v1230
          %2577 = vmatpush1.msra.mxu0 %v1229
          %2578 = vmatprep.subr.mxu0 %v1235
          %2579 = vmatpush1.msra.mxu0 %v1234
          %2580 = vmatprep.subr.mxu0 %v1240
          %2581 = vmatpush1.msra.mxu0 %v1239
          %2582 = vmatprep.subr.mxu0 %v1245
          %2583 = vmatpush1.msra.mxu0 %v1244
          %2584 = vmatprep.subr.mxu0 %v1250
          %2585 = vmatpush1.msra.mxu0 %v1249
          %2586 = vmatprep.subr.mxu0 %v1255
          %2587 = vmatpush1.msra.mxu0 %v1254
          %2588 = vmatprep.subr.mxu0 %v1260
          %2589 = vmatpush1.msra.mxu0 %v1259
          %2590 = vmatprep.subr.mxu0 %v1265
          %2591 = vmatpush1.msra.mxu0 %v1264
          %2592 = vmatprep.subr.mxu0 %v1270
          %2593 = vmatpush1.msra.mxu0 %v1269
          %2594 = vmatprep.subr.mxu0 %v1275
          %2595 = vmatpush1.msra.mxu0 %v1274
          %2596 = vmatprep.subr.mxu0 %v1280
          %2597 = vmatpush1.msra.mxu0 %v1279
          %2598 = vmatprep.subr.mxu0 %v1285
          %2599 = vmatpush1.msra.mxu0 %v1284
          %2600 = vmatprep.subr.mxu0 %v1290
          %2601 = vmatpush1.msra.mxu0 %v1289
          %2602 = vmatprep.subr.mxu0 %v1295
          %2603 = vmatpush1.msra.mxu0 %v1294
          %2604 = vmatprep.subr.mxu0 %v1300
          %2605 = vmatpush1.msra.mxu0 %v1299
          %2606 = vmatprep.subr.mxu0 %v1305
          %2607 = vmatpush1.msra.mxu0 %v1304
          %2608 = vmatprep.mubr.f32.mxu0 %v2475
          %2609 = vmatmul.mubr.f32.gmra.mrb[0].mxu0 %v2467
          %v2610 = vpop.f32.mrb[0].mxu0
          %v2611 = vadd.f32 %v2434, %v2610
          %v2612 = vpop.f32.mrb[0].mxu0
          %v2613 = vadd.f32 %v2438, %v2612
          %2614 = vdwg.mxu0
          %2615 = vmatprep.subr.mxu0 %v1310
          %2616 = vmatpush1.msra.mxu0 %v1309
          %2617 = vmatprep.subr.mxu0 %v1315
          %2618 = vmatpush1.msra.mxu0 %v1314
          %2619 = vmatprep.subr.mxu0 %v1320
          %2620 = vmatpush1.msra.mxu0 %v1319
          %2621 = vmatprep.subr.mxu0 %v1325
          %2622 = vmatpush1.msra.mxu0 %v1324
          %2623 = vmatprep.subr.mxu0 %v1330
          %2624 = vmatpush1.msra.mxu0 %v1329
          %2625 = vmatprep.subr.mxu0 %v1335
          %2626 = vmatpush1.msra.mxu0 %v1334
          %2627 = vmatprep.subr.mxu0 %v1340
          %2628 = vmatpush1.msra.mxu0 %v1339
          %2629 = vmatprep.subr.mxu0 %v1345
          %2630 = vmatpush1.msra.mxu0 %v1344
          %2631 = vmatprep.subr.mxu0 %v1350
          %2632 = vmatpush1.msra.mxu0 %v1349
          %2633 = vmatprep.subr.mxu0 %v1355
          %2634 = vmatpush1.msra.mxu0 %v1354
          %2635 = vmatprep.subr.mxu0 %v1360
          %2636 = vmatpush1.msra.mxu0 %v1359
          %2637 = vmatprep.subr.mxu0 %v1365
          %2638 = vmatpush1.msra.mxu0 %v1364
          %2639 = vmatprep.subr.mxu0 %v1370
          %2640 = vmatpush1.msra.mxu0 %v1369
          %2641 = vmatprep.subr.mxu0 %v1375
          %2642 = vmatpush1.msra.mxu0 %v1374
          %2643 = vmatprep.subr.mxu0 %v1380
          %2644 = vmatpush1.msra.mxu0 %v1379
          %2645 = vmatprep.subr.mxu0 %v1385
          %2646 = vmatpush1.msra.mxu0 %v1384
          %2647 = vmatprep.subr.mxu0 %v1390
          %2648 = vmatpush1.msra.mxu0 %v1389
          %2649 = vmatprep.subr.mxu0 %v1395
          %2650 = vmatpush1.msra.mxu0 %v1394
          %2651 = vmatprep.subr.mxu0 %v1400
          %2652 = vmatpush1.msra.mxu0 %v1399
          %2653 = vmatprep.subr.mxu0 %v1405
          %2654 = vmatpush1.msra.mxu0 %v1404
          %2655 = vmatprep.subr.mxu0 %v1410
          %2656 = vmatpush1.msra.mxu0 %v1409
          %2657 = vmatprep.subr.mxu0 %v1415
          %2658 = vmatpush1.msra.mxu0 %v1414
          %2659 = vmatprep.subr.mxu0 %v1420
          %2660 = vmatpush1.msra.mxu0 %v1419
          %2661 = vmatprep.subr.mxu0 %v1425
          %2662 = vmatpush1.msra.mxu0 %v1424
          %2663 = vmatprep.subr.mxu0 %v1430
          %2664 = vmatpush1.msra.mxu0 %v1429
          %2665 = vmatprep.subr.mxu0 %v1435
          %2666 = vmatpush1.msra.mxu0 %v1434
          %2667 = vmatprep.subr.mxu0 %v1440
          %2668 = vmatpush1.msra.mxu0 %v1439
          %2669 = vmatprep.subr.mxu0 %v1445
          %2670 = vmatpush1.msra.mxu0 %v1444
          %2671 = vmatprep.subr.mxu0 %v1450
          %2672 = vmatpush1.msra.mxu0 %v1449
          %2673 = vmatprep.subr.mxu0 %v1455
          %2674 = vmatpush1.msra.mxu0 %v1454
          %2675 = vmatprep.subr.mxu0 %v1460
          %2676 = vmatpush1.msra.mxu0 %v1459
          %2677 = vmatprep.subr.mxu0 %v1465
          %2678 = vmatpush1.msra.mxu0 %v1464
          %2679 = vmatprep.mubr.f32.mxu0 %v2476
          %2680 = vmatmul.mubr.f32.gmra.mrb[0].mxu0 %v2474
          %v2681 = vpop.f32.mrb[0].mxu0
          %v2682 = vadd.f32 %v2611, %v2681
          %v2683 = vpop.f32.mrb[0].mxu0
          %v2684 = vadd.f32 %v2613, %v2683
          %2685 = vdwg.mxu0
          %2686 = vmatprep.subr.mxu0 %v1470
          %2687 = vmatpush1.msra.mxu0 %v1469
          %2688 = vmatprep.subr.mxu0 %v1475
          %2689 = vmatpush1.msra.mxu0 %v1474
          %2690 = vmatprep.subr.mxu0 %v1480
          %2691 = vmatpush1.msra.mxu0 %v1479
          %2692 = vmatprep.subr.mxu0 %v1485
          %2693 = vmatpush1.msra.mxu0 %v1484
          %2694 = vmatprep.subr.mxu0 %v1490
          %2695 = vmatpush1.msra.mxu0 %v1489
          %2696 = vmatprep.subr.mxu0 %v1495
          %2697 = vmatpush1.msra.mxu0 %v1494
          %2698 = vmatprep.subr.mxu0 %v1500
          %2699 = vmatpush1.msra.mxu0 %v1499
          %2700 = vmatprep.subr.mxu0 %v1505
          %2701 = vmatpush1.msra.mxu0 %v1504
          %2702 = vmatprep.subr.mxu0 %v1510
          %2703 = vmatpush1.msra.mxu0 %v1509
          %2704 = vmatprep.subr.mxu0 %v1515
          %2705 = vmatpush1.msra.mxu0 %v1514
          %2706 = vmatprep.subr.mxu0 %v1520
          %2707 = vmatpush1.msra.mxu0 %v1519
          %2708 = vmatprep.subr.mxu0 %v1525
          %2709 = vmatpush1.msra.mxu0 %v1524
          %2710 = vmatprep.subr.mxu0 %v1530
          %2711 = vmatpush1.msra.mxu0 %v1529
          %2712 = vmatprep.subr.mxu0 %v1535
          %2713 = vmatpush1.msra.mxu0 %v1534
          %2714 = vmatprep.subr.mxu0 %v1540
          %2715 = vmatpush1.msra.mxu0 %v1539
          %2716 = vmatprep.subr.mxu0 %v1545
          %2717 = vmatpush1.msra.mxu0 %v1544
          %2718 = vmatprep.subr.mxu0 %v1550
          %2719 = vmatpush1.msra.mxu0 %v1549
          %2720 = vmatprep.subr.mxu0 %v1555
          %2721 = vmatpush1.msra.mxu0 %v1554
          %2722 = vmatprep.subr.mxu0 %v1560
          %2723 = vmatpush1.msra.mxu0 %v1559
          %2724 = vmatprep.subr.mxu0 %v1565
          %2725 = vmatpush1.msra.mxu0 %v1564
          %2726 = vmatprep.subr.mxu0 %v1570
          %2727 = vmatpush1.msra.mxu0 %v1569
          %2728 = vmatprep.subr.mxu0 %v1575
          %2729 = vmatpush1.msra.mxu0 %v1574
          %2730 = vmatprep.subr.mxu0 %v1580
          %2731 = vmatpush1.msra.mxu0 %v1579
          %2732 = vmatprep.subr.mxu0 %v1585
          %2733 = vmatpush1.msra.mxu0 %v1584
          %2734 = vmatprep.subr.mxu0 %v1590
          %2735 = vmatpush1.msra.mxu0 %v1589
          %2736 = vmatprep.subr.mxu0 %v1595
          %2737 = vmatpush1.msra.mxu0 %v1594
          %2738 = vmatprep.subr.mxu0 %v1600
          %2739 = vmatpush1.msra.mxu0 %v1599
          %2740 = vmatprep.subr.mxu0 %v1605
          %2741 = vmatpush1.msra.mxu0 %v1604
          %2742 = vmatprep.subr.mxu0 %v1610
          %2743 = vmatpush1.msra.mxu0 %v1609
          %2744 = vmatprep.subr.mxu0 %v1615
          %2745 = vmatpush1.msra.mxu0 %v1614
          %2746 = vmatprep.subr.mxu0 %v1620
          %2747 = vmatpush1.msra.mxu0 %v1619
          %2748 = vmatprep.subr.mxu0 %v1625
          %2749 = vmatpush1.msra.mxu0 %v1624
          %2750 = vmatprep.mubr.f32.mxu0 %v2492
          %2751 = vmatmul.mubr.f32.gmra.mrb[0].mxu0 %v2484
          %v2752 = vpop.f32.mrb[0].mxu0
          %v2753 = vadd.f32 %v2682, %v2752
          %v2754 = vpop.f32.mrb[0].mxu0
          %v2755 = vadd.f32 %v2684, %v2754
          %2756 = vdwg.mxu0
          %2757 = vmatprep.subr.mxu0 %v1630
          %2758 = vmatpush1.msra.mxu0 %v1629
          %2759 = vmatprep.subr.mxu0 %v1635
          %2760 = vmatpush1.msra.mxu0 %v1634
          %2761 = vmatprep.subr.mxu0 %v1640
          %2762 = vmatpush1.msra.mxu0 %v1639
          %2763 = vmatprep.subr.mxu0 %v1645
          %2764 = vmatpush1.msra.mxu0 %v1644
          %2765 = vmatprep.subr.mxu0 %v1650
          %2766 = vmatpush1.msra.mxu0 %v1649
          %2767 = vmatprep.subr.mxu0 %v1655
          %2768 = vmatpush1.msra.mxu0 %v1654
          %2769 = vmatprep.subr.mxu0 %v1660
          %2770 = vmatpush1.msra.mxu0 %v1659
          %2771 = vmatprep.subr.mxu0 %v1665
          %2772 = vmatpush1.msra.mxu0 %v1664
          %2773 = vmatprep.subr.mxu0 %v1670
          %2774 = vmatpush1.msra.mxu0 %v1669
          %2775 = vmatprep.subr.mxu0 %v1675
          %2776 = vmatpush1.msra.mxu0 %v1674
          %2777 = vmatprep.subr.mxu0 %v1680
          %2778 = vmatpush1.msra.mxu0 %v1679
          %2779 = vmatprep.subr.mxu0 %v1685
          %2780 = vmatpush1.msra.mxu0 %v1684
          %2781 = vmatprep.subr.mxu0 %v1690
          %2782 = vmatpush1.msra.mxu0 %v1689
          %2783 = vmatprep.subr.mxu0 %v1695
          %2784 = vmatpush1.msra.mxu0 %v1694
          %2785 = vmatprep.subr.mxu0 %v1700
          %2786 = vmatpush1.msra.mxu0 %v1699
          %2787 = vmatprep.subr.mxu0 %v1705
          %2788 = vmatpush1.msra.mxu0 %v1704
          %2789 = vmatprep.subr.mxu0 %v1710
          %2790 = vmatpush1.msra.mxu0 %v1709
          %2791 = vmatprep.subr.mxu0 %v1715
          %2792 = vmatpush1.msra.mxu0 %v1714
          %2793 = vmatprep.subr.mxu0 %v1720
          %2794 = vmatpush1.msra.mxu0 %v1719
          %2795 = vmatprep.subr.mxu0 %v1725
          %2796 = vmatpush1.msra.mxu0 %v1724
          %2797 = vmatprep.subr.mxu0 %v1730
          %2798 = vmatpush1.msra.mxu0 %v1729
          %2799 = vmatprep.subr.mxu0 %v1735
          %2800 = vmatpush1.msra.mxu0 %v1734
          %2801 = vmatprep.subr.mxu0 %v1740
          %2802 = vmatpush1.msra.mxu0 %v1739
          %2803 = vmatprep.subr.mxu0 %v1745
          %2804 = vmatpush1.msra.mxu0 %v1744
          %2805 = vmatprep.subr.mxu0 %v1750
          %2806 = vmatpush1.msra.mxu0 %v1749
          %2807 = vmatprep.subr.mxu0 %v1755
          %2808 = vmatpush1.msra.mxu0 %v1754
          %2809 = vmatprep.subr.mxu0 %v1760
          %2810 = vmatpush1.msra.mxu0 %v1759
          %2811 = vmatprep.subr.mxu0 %v1765
          %2812 = vmatpush1.msra.mxu0 %v1764
          %2813 = vmatprep.subr.mxu0 %v1770
          %2814 = vmatpush1.msra.mxu0 %v1769
          %2815 = vmatprep.subr.mxu0 %v1775
          %2816 = vmatpush1.msra.mxu0 %v1774
          %2817 = vmatprep.subr.mxu0 %v1780
          %2818 = vmatpush1.msra.mxu0 %v1779
          %2819 = vmatprep.subr.mxu0 %v1785
          %2820 = vmatpush1.msra.mxu0 %v1784
          %2821 = vmatprep.mubr.f32.mxu0 %v2493
          %2822 = vmatmul.mubr.f32.gmra.mrb[0].mxu0 %v2491
          %v2823 = vpop.f32.mrb[0].mxu0
          %v2824 = vadd.f32 %v2753, %v2823
          %v2825 = vpop.f32.mrb[0].mxu0
          %v2826 = vadd.f32 %v2755, %v2825
          %2827 = vdwg.mxu0
          %2828 = vmatprep.subr.mxu0 %v1790
          %2829 = vmatpush1.msra.mxu0 %v1789
          %2830 = vmatprep.subr.mxu0 %v1795
          %2831 = vmatpush1.msra.mxu0 %v1794
          %2832 = vmatprep.subr.mxu0 %v1800
          %2833 = vmatpush1.msra.mxu0 %v1799
          %2834 = vmatprep.subr.mxu0 %v1805
          %2835 = vmatpush1.msra.mxu0 %v1804
          %2836 = vmatprep.subr.mxu0 %v1810
          %2837 = vmatpush1.msra.mxu0 %v1809
          %2838 = vmatprep.subr.mxu0 %v1815
          %2839 = vmatpush1.msra.mxu0 %v1814
          %2840 = vmatprep.subr.mxu0 %v1820
          %2841 = vmatpush1.msra.mxu0 %v1819
          %2842 = vmatprep.subr.mxu0 %v1825
          %2843 = vmatpush1.msra.mxu0 %v1824
          %2844 = vmatprep.subr.mxu0 %v1830
          %2845 = vmatpush1.msra.mxu0 %v1829
          %2846 = vmatprep.subr.mxu0 %v1835
          %2847 = vmatpush1.msra.mxu0 %v1834
          %2848 = vmatprep.subr.mxu0 %v1840
          %2849 = vmatpush1.msra.mxu0 %v1839
          %2850 = vmatprep.subr.mxu0 %v1845
          %2851 = vmatpush1.msra.mxu0 %v1844
          %2852 = vmatprep.subr.mxu0 %v1850
          %2853 = vmatpush1.msra.mxu0 %v1849
          %2854 = vmatprep.subr.mxu0 %v1855
          %2855 = vmatpush1.msra.mxu0 %v1854
          %2856 = vmatprep.subr.mxu0 %v1860
          %2857 = vmatpush1.msra.mxu0 %v1859
          %2858 = vmatprep.subr.mxu0 %v1865
          %2859 = vmatpush1.msra.mxu0 %v1864
          %2860 = vmatprep.subr.mxu0 %v1870
          %2861 = vmatpush1.msra.mxu0 %v1869
          %2862 = vmatprep.subr.mxu0 %v1875
          %2863 = vmatpush1.msra.mxu0 %v1874
          %2864 = vmatprep.subr.mxu0 %v1880
          %2865 = vmatpush1.msra.mxu0 %v1879
          %2866 = vmatprep.subr.mxu0 %v1885
          %2867 = vmatpush1.msra.mxu0 %v1884
          %2868 = vmatprep.subr.mxu0 %v1890
          %2869 = vmatpush1.msra.mxu0 %v1889
          %2870 = vmatprep.subr.mxu0 %v1895
          %2871 = vmatpush1.msra.mxu0 %v1894
          %2872 = vmatprep.subr.mxu0 %v1900
          %2873 = vmatpush1.msra.mxu0 %v1899
          %2874 = vmatprep.subr.mxu0 %v1905
          %2875 = vmatpush1.msra.mxu0 %v1904
          %2876 = vmatprep.subr.mxu0 %v1910
          %2877 = vmatpush1.msra.mxu0 %v1909
          %2878 = vmatprep.subr.mxu0 %v1915
          %2879 = vmatpush1.msra.mxu0 %v1914
          %2880 = vmatprep.subr.mxu0 %v1920
          %2881 = vmatpush1.msra.mxu0 %v1919
          %2882 = vmatprep.subr.mxu0 %v1925
          %2883 = vmatpush1.msra.mxu0 %v1924
          %2884 = vmatprep.subr.mxu0 %v1930
          %2885 = vmatpush1.msra.mxu0 %v1929
          %2886 = vmatprep.subr.mxu0 %v1935
          %2887 = vmatpush1.msra.mxu0 %v1934
          %2888 = vmatprep.subr.mxu0 %v1940
          %2889 = vmatpush1.msra.mxu0 %v1939
          %2890 = vmatprep.subr.mxu0 %v1945
          %2891 = vmatpush1.msra.mxu0 %v1944
          %2892 = vmatprep.mubr.f32.mxu0 %v2509
          %2893 = vmatmul.mubr.f32.gmra.mrb[0].mxu0 %v2501
          %v2894 = vpop.f32.mrb[0].mxu0
          %v2895 = vadd.f32 %v2824, %v2894
          %v2896 = vpop.f32.mrb[0].mxu0
          %v2897 = vadd.f32 %v2826, %v2896
          %2898 = vdwg.mxu0
          %2899 = vmatprep.subr.mxu0 %v1950
          %2900 = vmatpush1.msra.mxu0 %v1949
          %2901 = vmatprep.subr.mxu0 %v1955
          %2902 = vmatpush1.msra.mxu0 %v1954
          %2903 = vmatprep.subr.mxu0 %v1960
          %2904 = vmatpush1.msra.mxu0 %v1959
          %2905 = vmatprep.subr.mxu0 %v1965
          %2906 = vmatpush1.msra.mxu0 %v1964
          %2907 = vmatprep.subr.mxu0 %v1970
          %2908 = vmatpush1.msra.mxu0 %v1969
          %2909 = vmatprep.subr.mxu0 %v1975
          %2910 = vmatpush1.msra.mxu0 %v1974
          %2911 = vmatprep.subr.mxu0 %v1980
          %2912 = vmatpush1.msra.mxu0 %v1979
          %2913 = vmatprep.subr.mxu0 %v1985
          %2914 = vmatpush1.msra.mxu0 %v1984
          %2915 = vmatprep.subr.mxu0 %v1990
          %2916 = vmatpush1.msra.mxu0 %v1989
          %2917 = vmatprep.subr.mxu0 %v1995
          %2918 = vmatpush1.msra.mxu0 %v1994
          %2919 = vmatprep.subr.mxu0 %v2000
          %2920 = vmatpush1.msra.mxu0 %v1999
          %2921 = vmatprep.subr.mxu0 %v2005
          %2922 = vmatpush1.msra.mxu0 %v2004
          %2923 = vmatprep.subr.mxu0 %v2010
          %2924 = vmatpush1.msra.mxu0 %v2009
          %2925 = vmatprep.subr.mxu0 %v2015
          %2926 = vmatpush1.msra.mxu0 %v2014
          %2927 = vmatprep.subr.mxu0 %v2020
          %2928 = vmatpush1.msra.mxu0 %v2019
          %2929 = vmatprep.subr.mxu0 %v2025
          %2930 = vmatpush1.msra.mxu0 %v2024
          %2931 = vmatprep.subr.mxu0 %v2030
          %2932 = vmatpush1.msra.mxu0 %v2029
          %2933 = vmatprep.subr.mxu0 %v2035
          %2934 = vmatpush1.msra.mxu0 %v2034
          %2935 = vmatprep.subr.mxu0 %v2040
          %2936 = vmatpush1.msra.mxu0 %v2039
          %2937 = vmatprep.subr.mxu0 %v2045
          %2938 = vmatpush1.msra.mxu0 %v2044
          %2939 = vmatprep.subr.mxu0 %v2050
          %2940 = vmatpush1.msra.mxu0 %v2049
          %2941 = vmatprep.subr.mxu0 %v2055
          %2942 = vmatpush1.msra.mxu0 %v2054
          %2943 = vmatprep.subr.mxu0 %v2060
          %2944 = vmatpush1.msra.mxu0 %v2059
          %2945 = vmatprep.subr.mxu0 %v2065
          %2946 = vmatpush1.msra.mxu0 %v2064
          %2947 = vmatprep.subr.mxu0 %v2070
          %2948 = vmatpush1.msra.mxu0 %v2069
          %2949 = vmatprep.subr.mxu0 %v2075
          %2950 = vmatpush1.msra.mxu0 %v2074
          %2951 = vmatprep.subr.mxu0 %v2080
          %2952 = vmatpush1.msra.mxu0 %v2079
          %2953 = vmatprep.subr.mxu0 %v2085
          %2954 = vmatpush1.msra.mxu0 %v2084
          %2955 = vmatprep.subr.mxu0 %v2090
          %2956 = vmatpush1.msra.mxu0 %v2089
          %2957 = vmatprep.subr.mxu0 %v2095
          %2958 = vmatpush1.msra.mxu0 %v2094
          %2959 = vmatprep.subr.mxu0 %v2100
          %2960 = vmatpush1.msra.mxu0 %v2099
          %2961 = vmatprep.subr.mxu0 %v2105
          %2962 = vmatpush1.msra.mxu0 %v2104
          %2963 = vmatprep.mubr.f32.mxu0 %v2510
          %2964 = vmatmul.mubr.f32.gmra.mrb[0].mxu0 %v2508
          %v2965 = vpop.f32.mrb[0].mxu0
          %v2966 = vadd.f32 %v2895, %v2965
          %v2967 = vpop.f32.mrb[0].mxu0
          %v2968 = vadd.f32 %v2897, %v2967
          %2969 = vdwg.mxu0
          %2970 = vmatprep.subr.mxu0 %v2110
          %2971 = vmatpush1.msra.mxu0 %v2109
          %2972 = vmatprep.subr.mxu0 %v2115
          %2973 = vmatpush1.msra.mxu0 %v2114
          %2974 = vmatprep.subr.mxu0 %v2120
          %2975 = vmatpush1.msra.mxu0 %v2119
          %2976 = vmatprep.subr.mxu0 %v2125
          %2977 = vmatpush1.msra.mxu0 %v2124
          %2978 = vmatprep.subr.mxu0 %v2130
          %2979 = vmatpush1.msra.mxu0 %v2129
          %2980 = vmatprep.subr.mxu0 %v2135
          %2981 = vmatpush1.msra.mxu0 %v2134
          %2982 = vmatprep.subr.mxu0 %v2140
          %2983 = vmatpush1.msra.mxu0 %v2139
          %2984 = vmatprep.subr.mxu0 %v2145
          %2985 = vmatpush1.msra.mxu0 %v2144
          %2986 = vmatprep.subr.mxu0 %v2150
          %2987 = vmatpush1.msra.mxu0 %v2149
          %2988 = vmatprep.subr.mxu0 %v2155
          %2989 = vmatpush1.msra.mxu0 %v2154
          %2990 = vmatprep.subr.mxu0 %v2160
          %2991 = vmatpush1.msra.mxu0 %v2159
          %2992 = vmatprep.subr.mxu0 %v2165
          %2993 = vmatpush1.msra.mxu0 %v2164
          %2994 = vmatprep.subr.mxu0 %v2170
          %2995 = vmatpush1.msra.mxu0 %v2169
          %2996 = vmatprep.subr.mxu0 %v2175
          %2997 = vmatpush1.msra.mxu0 %v2174
          %2998 = vmatprep.subr.mxu0 %v2180
          %2999 = vmatpush1.msra.mxu0 %v2179
          %3000 = vmatprep.subr.mxu0 %v2185
          %3001 = vmatpush1.msra.mxu0 %v2184
          %3002 = vmatprep.subr.mxu0 %v2190
          %3003 = vmatpush1.msra.mxu0 %v2189
          %3004 = vmatprep.subr.mxu0 %v2195
          %3005 = vmatpush1.msra.mxu0 %v2194
          %3006 = vmatprep.subr.mxu0 %v2200
          %3007 = vmatpush1.msra.mxu0 %v2199
          %3008 = vmatprep.subr.mxu0 %v2205
          %3009 = vmatpush1.msra.mxu0 %v2204
          %3010 = vmatprep.subr.mxu0 %v2210
          %3011 = vmatpush1.msra.mxu0 %v2209
          %3012 = vmatprep.subr.mxu0 %v2215
          %3013 = vmatpush1.msra.mxu0 %v2214
          %3014 = vmatprep.subr.mxu0 %v2220
          %3015 = vmatpush1.msra.mxu0 %v2219
          %3016 = vmatprep.subr.mxu0 %v2225
          %3017 = vmatpush1.msra.mxu0 %v2224
          %3018 = vmatprep.subr.mxu0 %v2230
          %3019 = vmatpush1.msra.mxu0 %v2229
          %3020 = vmatprep.subr.mxu0 %v2235
          %3021 = vmatpush1.msra.mxu0 %v2234
          %3022 = vmatprep.subr.mxu0 %v2240
          %3023 = vmatpush1.msra.mxu0 %v2239
          %3024 = vmatprep.subr.mxu0 %v2245
          %3025 = vmatpush1.msra.mxu0 %v2244
          %3026 = vmatprep.subr.mxu0 %v2250
          %3027 = vmatpush1.msra.mxu0 %v2249
          %3028 = vmatprep.subr.mxu0 %v2255
          %3029 = vmatpush1.msra.mxu0 %v2254
          %3030 = vmatprep.subr.mxu0 %v2260
          %3031 = vmatpush1.msra.mxu0 %v2259
          %3032 = vmatprep.subr.mxu0 %v2265
          %3033 = vmatpush1.msra.mxu0 %v2264
          %3034 = vmatprep.mubr.f32.mxu0 %v2526
          %3035 = vmatmul.mubr.f32.gmra.mrb[0].mxu0 %v2518
          %v3036 = vpop.f32.mrb[0].mxu0
          %v3037 = vadd.f32 %v2966, %v3036
          %v3038 = vpop.f32.mrb[0].mxu0
          %v3039 = vadd.f32 %v2968, %v3038
          %3040 = vdwg.mxu0
          %3041 = vmatprep.subr.mxu0 %v2270
          %3042 = vmatpush1.msra.mxu0 %v2269
          %3043 = vmatprep.subr.mxu0 %v2275
          %3044 = vmatpush1.msra.mxu0 %v2274
          %3045 = vmatprep.subr.mxu0 %v2280
          %3046 = vmatpush1.msra.mxu0 %v2279
          %3047 = vmatprep.subr.mxu0 %v2285
          %3048 = vmatpush1.msra.mxu0 %v2284
          %3049 = vmatprep.subr.mxu0 %v2290
          %3050 = vmatpush1.msra.mxu0 %v2289
          %3051 = vmatprep.subr.mxu0 %v2295
          %3052 = vmatpush1.msra.mxu0 %v2294
          %3053 = vmatprep.subr.mxu0 %v2300
          %3054 = vmatpush1.msra.mxu0 %v2299
          %3055 = vmatprep.subr.mxu0 %v2305
          %3056 = vmatpush1.msra.mxu0 %v2304
          %3057 = vmatprep.subr.mxu0 %v2310
          %3058 = vmatpush1.msra.mxu0 %v2309
          %3059 = vmatprep.subr.mxu0 %v2315
          %3060 = vmatpush1.msra.mxu0 %v2314
          %3061 = vmatprep.subr.mxu0 %v2320
          %3062 = vmatpush1.msra.mxu0 %v2319
          %3063 = vmatprep.subr.mxu0 %v2325
          %3064 = vmatpush1.msra.mxu0 %v2324
          %3065 = vmatprep.subr.mxu0 %v2330
          %3066 = vmatpush1.msra.mxu0 %v2329
          %3067 = vmatprep.subr.mxu0 %v2335
          %3068 = vmatpush1.msra.mxu0 %v2334
          %3069 = vmatprep.subr.mxu0 %v2340
          %3070 = vmatpush1.msra.mxu0 %v2339
          %3071 = vmatprep.subr.mxu0 %v2345
          %3072 = vmatpush1.msra.mxu0 %v2344
          %3073 = vmatprep.subr.mxu0 %v2350
          %3074 = vmatpush1.msra.mxu0 %v2349
          %3075 = vmatprep.subr.mxu0 %v2355
          %3076 = vmatpush1.msra.mxu0 %v2354
          %3077 = vmatprep.subr.mxu0 %v2360
          %3078 = vmatpush1.msra.mxu0 %v2359
          %3079 = vmatprep.subr.mxu0 %v2365
          %3080 = vmatpush1.msra.mxu0 %v2364
          %3081 = vmatprep.subr.mxu0 %v2370
          %3082 = vmatpush1.msra.mxu0 %v2369
          %3083 = vmatprep.subr.mxu0 %v2375
          %3084 = vmatpush1.msra.mxu0 %v2374
          %3085 = vmatprep.subr.mxu0 %v2380
          %3086 = vmatpush1.msra.mxu0 %v2379
          %3087 = vmatprep.subr.mxu0 %v2385
          %3088 = vmatpush1.msra.mxu0 %v2384
          %3089 = vmatprep.subr.mxu0 %v2390
          %3090 = vmatpush1.msra.mxu0 %v2389
          %3091 = vmatprep.subr.mxu0 %v2395
          %3092 = vmatpush1.msra.mxu0 %v2394
          %3093 = vmatprep.subr.mxu0 %v2400
          %3094 = vmatpush1.msra.mxu0 %v2399
          %3095 = vmatprep.subr.mxu0 %v2405
          %3096 = vmatpush1.msra.mxu0 %v2404
          %3097 = vmatprep.subr.mxu0 %v2410
          %3098 = vmatpush1.msra.mxu0 %v2409
          %3099 = vmatprep.subr.mxu0 %v2415
          %3100 = vmatpush1.msra.mxu0 %v2414
          %3101 = vmatprep.subr.mxu0 %v2420
          %3102 = vmatpush1.msra.mxu0 %v2419
          %3103 = vmatprep.subr.mxu0 %v2425
          %3104 = vmatpush1.msra.mxu0 %v2424
          %3105 = vmatprep.mubr.f32.mxu0 %v2527
          %3106 = vmatmul.mubr.f32.gmra.mrb[0].mxu0 %v2525
          %v3107 = vpop.f32.mrb[0].mxu0
          %v3108 = vadd.f32 %v3037, %v3107
          %v3109 = vpop.f32.mrb[0].mxu0
          %v3110 = vadd.f32 %v3039, %v3109
          %3111 = vdwg.mxu0
          %3112 = vmatprep.subr.mxu0 %v1152
          %3113 = vmatpush1.msra.mxu0 %v1151
          %3114 = vmatprep.subr.mxu0 %v1157
          %3115 = vmatpush1.msra.mxu0 %v1156
          %3116 = vmatprep.subr.mxu0 %v1162
          %3117 = vmatpush1.msra.mxu0 %v1161
          %3118 = vmatprep.subr.mxu0 %v1167
          %3119 = vmatpush1.msra.mxu0 %v1166
          %3120 = vmatprep.subr.mxu0 %v1172
          %3121 = vmatpush1.msra.mxu0 %v1171
          %3122 = vmatprep.subr.mxu0 %v1177
          %3123 = vmatpush1.msra.mxu0 %v1176
          %3124 = vmatprep.subr.mxu0 %v1182
          %3125 = vmatpush1.msra.mxu0 %v1181
          %3126 = vmatprep.subr.mxu0 %v1187
          %3127 = vmatpush1.msra.mxu0 %v1186
          %3128 = vmatprep.subr.mxu0 %v1192
          %3129 = vmatpush1.msra.mxu0 %v1191
          %3130 = vmatprep.subr.mxu0 %v1197
          %3131 = vmatpush1.msra.mxu0 %v1196
          %3132 = vmatprep.subr.mxu0 %v1202
          %3133 = vmatpush1.msra.mxu0 %v1201
          %3134 = vmatprep.subr.mxu0 %v1207
          %3135 = vmatpush1.msra.mxu0 %v1206
          %3136 = vmatprep.subr.mxu0 %v1212
          %3137 = vmatpush1.msra.mxu0 %v1211
          %3138 = vmatprep.subr.mxu0 %v1217
          %3139 = vmatpush1.msra.mxu0 %v1216
          %3140 = vmatprep.subr.mxu0 %v1222
          %3141 = vmatpush1.msra.mxu0 %v1221
          %3142 = vmatprep.subr.mxu0 %v1227
          %3143 = vmatpush1.msra.mxu0 %v1226
          %3144 = vmatprep.subr.mxu0 %v1232
          %3145 = vmatpush1.msra.mxu0 %v1231
          %3146 = vmatprep.subr.mxu0 %v1237
          %3147 = vmatpush1.msra.mxu0 %v1236
          %3148 = vmatprep.subr.mxu0 %v1242
          %3149 = vmatpush1.msra.mxu0 %v1241
          %3150 = vmatprep.subr.mxu0 %v1247
          %3151 = vmatpush1.msra.mxu0 %v1246
          %3152 = vmatprep.subr.mxu0 %v1252
          %3153 = vmatpush1.msra.mxu0 %v1251
          %3154 = vmatprep.subr.mxu0 %v1257
          %3155 = vmatpush1.msra.mxu0 %v1256
          %3156 = vmatprep.subr.mxu0 %v1262
          %3157 = vmatpush1.msra.mxu0 %v1261
          %3158 = vmatprep.subr.mxu0 %v1267
          %3159 = vmatpush1.msra.mxu0 %v1266
          %3160 = vmatprep.subr.mxu0 %v1272
          %3161 = vmatpush1.msra.mxu0 %v1271
          %3162 = vmatprep.subr.mxu0 %v1277
          %3163 = vmatpush1.msra.mxu0 %v1276
          %3164 = vmatprep.subr.mxu0 %v1282
          %3165 = vmatpush1.msra.mxu0 %v1281
          %3166 = vmatprep.subr.mxu0 %v1287
          %3167 = vmatpush1.msra.mxu0 %v1286
          %3168 = vmatprep.subr.mxu0 %v1292
          %3169 = vmatpush1.msra.mxu0 %v1291
          %3170 = vmatprep.subr.mxu0 %v1297
          %3171 = vmatpush1.msra.mxu0 %v1296
          %3172 = vmatprep.subr.mxu0 %v1302
          %3173 = vmatpush1.msra.mxu0 %v1301
          %3174 = vmatprep.subr.mxu0 %v1307
          %3175 = vmatpush1.msra.mxu0 %v1306
          %3176 = vmatprep.mubr.f32.mxu0 %v2475
          %3177 = vmatmul.mubr.f32.gmra.mrb[0].mxu0 %v2467
          %v3178 = vpop.f32.mrb[0].mxu0
          %v3179 = vadd.f32 %v2442, %v3178
          %v3180 = vpop.f32.mrb[0].mxu0
          %v3181 = vadd.f32 %v2446, %v3180
          %3182 = vdwg.mxu0
          %3183 = vmatprep.subr.mxu0 %v1312
          %3184 = vmatpush1.msra.mxu0 %v1311
          %3185 = vmatprep.subr.mxu0 %v1317
          %3186 = vmatpush1.msra.mxu0 %v1316
          %3187 = vmatprep.subr.mxu0 %v1322
          %3188 = vmatpush1.msra.mxu0 %v1321
          %3189 = vmatprep.subr.mxu0 %v1327
          %3190 = vmatpush1.msra.mxu0 %v1326
          %3191 = vmatprep.subr.mxu0 %v1332
          %3192 = vmatpush1.msra.mxu0 %v1331
          %3193 = vmatprep.subr.mxu0 %v1337
          %3194 = vmatpush1.msra.mxu0 %v1336
          %3195 = vmatprep.subr.mxu0 %v1342
          %3196 = vmatpush1.msra.mxu0 %v1341
          %3197 = vmatprep.subr.mxu0 %v1347
          %3198 = vmatpush1.msra.mxu0 %v1346
          %3199 = vmatprep.subr.mxu0 %v1352
          %3200 = vmatpush1.msra.mxu0 %v1351
          %3201 = vmatprep.subr.mxu0 %v1357
          %3202 = vmatpush1.msra.mxu0 %v1356
          %3203 = vmatprep.subr.mxu0 %v1362
          %3204 = vmatpush1.msra.mxu0 %v1361
          %3205 = vmatprep.subr.mxu0 %v1367
          %3206 = vmatpush1.msra.mxu0 %v1366
          %3207 = vmatprep.subr.mxu0 %v1372
          %3208 = vmatpush1.msra.mxu0 %v1371
          %3209 = vmatprep.subr.mxu0 %v1377
          %3210 = vmatpush1.msra.mxu0 %v1376
          %3211 = vmatprep.subr.mxu0 %v1382
          %3212 = vmatpush1.msra.mxu0 %v1381
          %3213 = vmatprep.subr.mxu0 %v1387
          %3214 = vmatpush1.msra.mxu0 %v1386
          %3215 = vmatprep.subr.mxu0 %v1392
          %3216 = vmatpush1.msra.mxu0 %v1391
          %3217 = vmatprep.subr.mxu0 %v1397
          %3218 = vmatpush1.msra.mxu0 %v1396
          %3219 = vmatprep.subr.mxu0 %v1402
          %3220 = vmatpush1.msra.mxu0 %v1401
          %3221 = vmatprep.subr.mxu0 %v1407
          %3222 = vmatpush1.msra.mxu0 %v1406
          %3223 = vmatprep.subr.mxu0 %v1412
          %3224 = vmatpush1.msra.mxu0 %v1411
          %3225 = vmatprep.subr.mxu0 %v1417
          %3226 = vmatpush1.msra.mxu0 %v1416
          %3227 = vmatprep.subr.mxu0 %v1422
          %3228 = vmatpush1.msra.mxu0 %v1421
          %3229 = vmatprep.subr.mxu0 %v1427
          %3230 = vmatpush1.msra.mxu0 %v1426
          %3231 = vmatprep.subr.mxu0 %v1432
          %3232 = vmatpush1.msra.mxu0 %v1431
          %3233 = vmatprep.subr.mxu0 %v1437
          %3234 = vmatpush1.msra.mxu0 %v1436
          %3235 = vmatprep.subr.mxu0 %v1442
          %3236 = vmatpush1.msra.mxu0 %v1441
          %3237 = vmatprep.subr.mxu0 %v1447
          %3238 = vmatpush1.msra.mxu0 %v1446
          %3239 = vmatprep.subr.mxu0 %v1452
          %3240 = vmatpush1.msra.mxu0 %v1451
          %3241 = vmatprep.subr.mxu0 %v1457
          %3242 = vmatpush1.msra.mxu0 %v1456
          %3243 = vmatprep.subr.mxu0 %v1462
          %3244 = vmatpush1.msra.mxu0 %v1461
          %3245 = vmatprep.subr.mxu0 %v1467
          %3246 = vmatpush1.msra.mxu0 %v1466
          %3247 = vmatprep.mubr.f32.mxu0 %v2476
          %3248 = vmatmul.mubr.f32.gmra.mrb[0].mxu0 %v2474
          %v3249 = vpop.f32.mrb[0].mxu0
          %v3250 = vadd.f32 %v3179, %v3249
          %v3251 = vpop.f32.mrb[0].mxu0
          %v3252 = vadd.f32 %v3181, %v3251
          %3253 = vdwg.mxu0
          %3254 = vmatprep.subr.mxu0 %v1472
          %3255 = vmatpush1.msra.mxu0 %v1471
          %3256 = vmatprep.subr.mxu0 %v1477
          %3257 = vmatpush1.msra.mxu0 %v1476
          %3258 = vmatprep.subr.mxu0 %v1482
          %3259 = vmatpush1.msra.mxu0 %v1481
          %3260 = vmatprep.subr.mxu0 %v1487
          %3261 = vmatpush1.msra.mxu0 %v1486
          %3262 = vmatprep.subr.mxu0 %v1492
          %3263 = vmatpush1.msra.mxu0 %v1491
          %3264 = vmatprep.subr.mxu0 %v1497
          %3265 = vmatpush1.msra.mxu0 %v1496
          %3266 = vmatprep.subr.mxu0 %v1502
          %3267 = vmatpush1.msra.mxu0 %v1501
          %3268 = vmatprep.subr.mxu0 %v1507
          %3269 = vmatpush1.msra.mxu0 %v1506
          %3270 = vmatprep.subr.mxu0 %v1512
          %3271 = vmatpush1.msra.mxu0 %v1511
          %3272 = vmatprep.subr.mxu0 %v1517
          %3273 = vmatpush1.msra.mxu0 %v1516
          %3274 = vmatprep.subr.mxu0 %v1522
          %3275 = vmatpush1.msra.mxu0 %v1521
          %3276 = vmatprep.subr.mxu0 %v1527
          %3277 = vmatpush1.msra.mxu0 %v1526
          %3278 = vmatprep.subr.mxu0 %v1532
          %3279 = vmatpush1.msra.mxu0 %v1531
          %3280 = vmatprep.subr.mxu0 %v1537
          %3281 = vmatpush1.msra.mxu0 %v1536
          %3282 = vmatprep.subr.mxu0 %v1542
          %3283 = vmatpush1.msra.mxu0 %v1541
          %3284 = vmatprep.subr.mxu0 %v1547
          %3285 = vmatpush1.msra.mxu0 %v1546
          %3286 = vmatprep.subr.mxu0 %v1552
          %3287 = vmatpush1.msra.mxu0 %v1551
          %3288 = vmatprep.subr.mxu0 %v1557
          %3289 = vmatpush1.msra.mxu0 %v1556
          %3290 = vmatprep.subr.mxu0 %v1562
          %3291 = vmatpush1.msra.mxu0 %v1561
          %3292 = vmatprep.subr.mxu0 %v1567
          %3293 = vmatpush1.msra.mxu0 %v1566
          %3294 = vmatprep.subr.mxu0 %v1572
          %3295 = vmatpush1.msra.mxu0 %v1571
          %3296 = vmatprep.subr.mxu0 %v1577
          %3297 = vmatpush1.msra.mxu0 %v1576
          %3298 = vmatprep.subr.mxu0 %v1582
          %3299 = vmatpush1.msra.mxu0 %v1581
          %3300 = vmatprep.subr.mxu0 %v1587
          %3301 = vmatpush1.msra.mxu0 %v1586
          %3302 = vmatprep.subr.mxu0 %v1592
          %3303 = vmatpush1.msra.mxu0 %v1591
          %3304 = vmatprep.subr.mxu0 %v1597
          %3305 = vmatpush1.msra.mxu0 %v1596
          %3306 = vmatprep.subr.mxu0 %v1602
          %3307 = vmatpush1.msra.mxu0 %v1601
          %3308 = vmatprep.subr.mxu0 %v1607
          %3309 = vmatpush1.msra.mxu0 %v1606
          %3310 = vmatprep.subr.mxu0 %v1612
          %3311 = vmatpush1.msra.mxu0 %v1611
          %3312 = vmatprep.subr.mxu0 %v1617
          %3313 = vmatpush1.msra.mxu0 %v1616
          %3314 = vmatprep.subr.mxu0 %v1622
          %3315 = vmatpush1.msra.mxu0 %v1621
          %3316 = vmatprep.subr.mxu0 %v1627
          %3317 = vmatpush1.msra.mxu0 %v1626
          %3318 = vmatprep.mubr.f32.mxu0 %v2492
          %3319 = vmatmul.mubr.f32.gmra.mrb[0].mxu0 %v2484
          %v3320 = vpop.f32.mrb[0].mxu0
          %v3321 = vadd.f32 %v3250, %v3320
          %v3322 = vpop.f32.mrb[0].mxu0
          %v3323 = vadd.f32 %v3252, %v3322
          %3324 = vdwg.mxu0
          %3325 = vmatprep.subr.mxu0 %v1632
          %3326 = vmatpush1.msra.mxu0 %v1631
          %3327 = vmatprep.subr.mxu0 %v1637
          %3328 = vmatpush1.msra.mxu0 %v1636
          %3329 = vmatprep.subr.mxu0 %v1642
          %3330 = vmatpush1.msra.mxu0 %v1641
          %3331 = vmatprep.subr.mxu0 %v1647
          %3332 = vmatpush1.msra.mxu0 %v1646
          %3333 = vmatprep.subr.mxu0 %v1652
          %3334 = vmatpush1.msra.mxu0 %v1651
          %3335 = vmatprep.subr.mxu0 %v1657
          %3336 = vmatpush1.msra.mxu0 %v1656
          %3337 = vmatprep.subr.mxu0 %v1662
          %3338 = vmatpush1.msra.mxu0 %v1661
          %3339 = vmatprep.subr.mxu0 %v1667
          %3340 = vmatpush1.msra.mxu0 %v1666
          %3341 = vmatprep.subr.mxu0 %v1672
          %3342 = vmatpush1.msra.mxu0 %v1671
          %3343 = vmatprep.subr.mxu0 %v1677
          %3344 = vmatpush1.msra.mxu0 %v1676
          %3345 = vmatprep.subr.mxu0 %v1682
          %3346 = vmatpush1.msra.mxu0 %v1681
          %3347 = vmatprep.subr.mxu0 %v1687
          %3348 = vmatpush1.msra.mxu0 %v1686
          %3349 = vmatprep.subr.mxu0 %v1692
          %3350 = vmatpush1.msra.mxu0 %v1691
          %3351 = vmatprep.subr.mxu0 %v1697
          %3352 = vmatpush1.msra.mxu0 %v1696
          %3353 = vmatprep.subr.mxu0 %v1702
          %3354 = vmatpush1.msra.mxu0 %v1701
          %3355 = vmatprep.subr.mxu0 %v1707
          %3356 = vmatpush1.msra.mxu0 %v1706
          %3357 = vmatprep.subr.mxu0 %v1712
          %3358 = vmatpush1.msra.mxu0 %v1711
          %3359 = vmatprep.subr.mxu0 %v1717
          %3360 = vmatpush1.msra.mxu0 %v1716
          %3361 = vmatprep.subr.mxu0 %v1722
          %3362 = vmatpush1.msra.mxu0 %v1721
          %3363 = vmatprep.subr.mxu0 %v1727
          %3364 = vmatpush1.msra.mxu0 %v1726
          %3365 = vmatprep.subr.mxu0 %v1732
          %3366 = vmatpush1.msra.mxu0 %v1731
          %3367 = vmatprep.subr.mxu0 %v1737
          %3368 = vmatpush1.msra.mxu0 %v1736
          %3369 = vmatprep.subr.mxu0 %v1742
          %3370 = vmatpush1.msra.mxu0 %v1741
          %3371 = vmatprep.subr.mxu0 %v1747
          %3372 = vmatpush1.msra.mxu0 %v1746
          %3373 = vmatprep.subr.mxu0 %v1752
          %3374 = vmatpush1.msra.mxu0 %v1751
          %3375 = vmatprep.subr.mxu0 %v1757
          %3376 = vmatpush1.msra.mxu0 %v1756
          %3377 = vmatprep.subr.mxu0 %v1762
          %3378 = vmatpush1.msra.mxu0 %v1761
          %3379 = vmatprep.subr.mxu0 %v1767
          %3380 = vmatpush1.msra.mxu0 %v1766
          %3381 = vmatprep.subr.mxu0 %v1772
          %3382 = vmatpush1.msra.mxu0 %v1771
          %3383 = vmatprep.subr.mxu0 %v1777
          %3384 = vmatpush1.msra.mxu0 %v1776
          %3385 = vmatprep.subr.mxu0 %v1782
          %3386 = vmatpush1.msra.mxu0 %v1781
          %3387 = vmatprep.subr.mxu0 %v1787
          %3388 = vmatpush1.msra.mxu0 %v1786
          %3389 = vmatprep.mubr.f32.mxu0 %v2493
          %3390 = vmatmul.mubr.f32.gmra.mrb[0].mxu0 %v2491
          %v3391 = vpop.f32.mrb[0].mxu0
          %v3392 = vadd.f32 %v3321, %v3391
          %v3393 = vpop.f32.mrb[0].mxu0
          %v3394 = vadd.f32 %v3323, %v3393
          %3395 = vdwg.mxu0
          %3396 = vmatprep.subr.mxu0 %v1792
          %3397 = vmatpush1.msra.mxu0 %v1791
          %3398 = vmatprep.subr.mxu0 %v1797
          %3399 = vmatpush1.msra.mxu0 %v1796
          %3400 = vmatprep.subr.mxu0 %v1802
          %3401 = vmatpush1.msra.mxu0 %v1801
          %3402 = vmatprep.subr.mxu0 %v1807
          %3403 = vmatpush1.msra.mxu0 %v1806
          %3404 = vmatprep.subr.mxu0 %v1812
          %3405 = vmatpush1.msra.mxu0 %v1811
          %3406 = vmatprep.subr.mxu0 %v1817
          %3407 = vmatpush1.msra.mxu0 %v1816
          %3408 = vmatprep.subr.mxu0 %v1822
          %3409 = vmatpush1.msra.mxu0 %v1821
          %3410 = vmatprep.subr.mxu0 %v1827
          %3411 = vmatpush1.msra.mxu0 %v1826
          %3412 = vmatprep.subr.mxu0 %v1832
          %3413 = vmatpush1.msra.mxu0 %v1831
          %3414 = vmatprep.subr.mxu0 %v1837
          %3415 = vmatpush1.msra.mxu0 %v1836
          %3416 = vmatprep.subr.mxu0 %v1842
          %3417 = vmatpush1.msra.mxu0 %v1841
          %3418 = vmatprep.subr.mxu0 %v1847
          %3419 = vmatpush1.msra.mxu0 %v1846
          %3420 = vmatprep.subr.mxu0 %v1852
          %3421 = vmatpush1.msra.mxu0 %v1851
          %3422 = vmatprep.subr.mxu0 %v1857
          %3423 = vmatpush1.msra.mxu0 %v1856
          %3424 = vmatprep.subr.mxu0 %v1862
          %3425 = vmatpush1.msra.mxu0 %v1861
          %3426 = vmatprep.subr.mxu0 %v1867
          %3427 = vmatpush1.msra.mxu0 %v1866
          %3428 = vmatprep.subr.mxu0 %v1872
          %3429 = vmatpush1.msra.mxu0 %v1871
          %3430 = vmatprep.subr.mxu0 %v1877
          %3431 = vmatpush1.msra.mxu0 %v1876
          %3432 = vmatprep.subr.mxu0 %v1882
          %3433 = vmatpush1.msra.mxu0 %v1881
          %3434 = vmatprep.subr.mxu0 %v1887
          %3435 = vmatpush1.msra.mxu0 %v1886
          %3436 = vmatprep.subr.mxu0 %v1892
          %3437 = vmatpush1.msra.mxu0 %v1891
          %3438 = vmatprep.subr.mxu0 %v1897
          %3439 = vmatpush1.msra.mxu0 %v1896
          %3440 = vmatprep.subr.mxu0 %v1902
          %3441 = vmatpush1.msra.mxu0 %v1901
          %3442 = vmatprep.subr.mxu0 %v1907
          %3443 = vmatpush1.msra.mxu0 %v1906
          %3444 = vmatprep.subr.mxu0 %v1912
          %3445 = vmatpush1.msra.mxu0 %v1911
          %3446 = vmatprep.subr.mxu0 %v1917
          %3447 = vmatpush1.msra.mxu0 %v1916
          %3448 = vmatprep.subr.mxu0 %v1922
          %3449 = vmatpush1.msra.mxu0 %v1921
          %3450 = vmatprep.subr.mxu0 %v1927
          %3451 = vmatpush1.msra.mxu0 %v1926
          %3452 = vmatprep.subr.mxu0 %v1932
          %3453 = vmatpush1.msra.mxu0 %v1931
          %3454 = vmatprep.subr.mxu0 %v1937
          %3455 = vmatpush1.msra.mxu0 %v1936
          %3456 = vmatprep.subr.mxu0 %v1942
          %3457 = vmatpush1.msra.mxu0 %v1941
          %3458 = vmatprep.subr.mxu0 %v1947
          %3459 = vmatpush1.msra.mxu0 %v1946
          %3460 = vmatprep.mubr.f32.mxu0 %v2509
          %3461 = vmatmul.mubr.f32.gmra.mrb[0].mxu0 %v2501
          %v3462 = vpop.f32.mrb[0].mxu0
          %v3463 = vadd.f32 %v3392, %v3462
          %v3464 = vpop.f32.mrb[0].mxu0
          %v3465 = vadd.f32 %v3394, %v3464
          %3466 = vdwg.mxu0
          %3467 = vmatprep.subr.mxu0 %v1952
          %3468 = vmatpush1.msra.mxu0 %v1951
          %3469 = vmatprep.subr.mxu0 %v1957
          %3470 = vmatpush1.msra.mxu0 %v1956
          %3471 = vmatprep.subr.mxu0 %v1962
          %3472 = vmatpush1.msra.mxu0 %v1961
          %3473 = vmatprep.subr.mxu0 %v1967
          %3474 = vmatpush1.msra.mxu0 %v1966
          %3475 = vmatprep.subr.mxu0 %v1972
          %3476 = vmatpush1.msra.mxu0 %v1971
          %3477 = vmatprep.subr.mxu0 %v1977
          %3478 = vmatpush1.msra.mxu0 %v1976
          %3479 = vmatprep.subr.mxu0 %v1982
          %3480 = vmatpush1.msra.mxu0 %v1981
          %3481 = vmatprep.subr.mxu0 %v1987
          %3482 = vmatpush1.msra.mxu0 %v1986
          %3483 = vmatprep.subr.mxu0 %v1992
          %3484 = vmatpush1.msra.mxu0 %v1991
          %3485 = vmatprep.subr.mxu0 %v1997
          %3486 = vmatpush1.msra.mxu0 %v1996
          %3487 = vmatprep.subr.mxu0 %v2002
          %3488 = vmatpush1.msra.mxu0 %v2001
          %3489 = vmatprep.subr.mxu0 %v2007
          %3490 = vmatpush1.msra.mxu0 %v2006
          %3491 = vmatprep.subr.mxu0 %v2012
          %3492 = vmatpush1.msra.mxu0 %v2011
          %3493 = vmatprep.subr.mxu0 %v2017
          %3494 = vmatpush1.msra.mxu0 %v2016
          %3495 = vmatprep.subr.mxu0 %v2022
          %3496 = vmatpush1.msra.mxu0 %v2021
          %3497 = vmatprep.subr.mxu0 %v2027
          %3498 = vmatpush1.msra.mxu0 %v2026
          %3499 = vmatprep.subr.mxu0 %v2032
          %3500 = vmatpush1.msra.mxu0 %v2031
          %3501 = vmatprep.subr.mxu0 %v2037
          %3502 = vmatpush1.msra.mxu0 %v2036
          %3503 = vmatprep.subr.mxu0 %v2042
          %3504 = vmatpush1.msra.mxu0 %v2041
          %3505 = vmatprep.subr.mxu0 %v2047
          %3506 = vmatpush1.msra.mxu0 %v2046
          %3507 = vmatprep.subr.mxu0 %v2052
          %3508 = vmatpush1.msra.mxu0 %v2051
          %3509 = vmatprep.subr.mxu0 %v2057
          %3510 = vmatpush1.msra.mxu0 %v2056
          %3511 = vmatprep.subr.mxu0 %v2062
          %3512 = vmatpush1.msra.mxu0 %v2061
          %3513 = vmatprep.subr.mxu0 %v2067
          %3514 = vmatpush1.msra.mxu0 %v2066
          %3515 = vmatprep.subr.mxu0 %v2072
          %3516 = vmatpush1.msra.mxu0 %v2071
          %3517 = vmatprep.subr.mxu0 %v2077
          %3518 = vmatpush1.msra.mxu0 %v2076
          %3519 = vmatprep.subr.mxu0 %v2082
          %3520 = vmatpush1.msra.mxu0 %v2081
          %3521 = vmatprep.subr.mxu0 %v2087
          %3522 = vmatpush1.msra.mxu0 %v2086
          %3523 = vmatprep.subr.mxu0 %v2092
          %3524 = vmatpush1.msra.mxu0 %v2091
          %3525 = vmatprep.subr.mxu0 %v2097
          %3526 = vmatpush1.msra.mxu0 %v2096
          %3527 = vmatprep.subr.mxu0 %v2102
          %3528 = vmatpush1.msra.mxu0 %v2101
          %3529 = vmatprep.subr.mxu0 %v2107
          %3530 = vmatpush1.msra.mxu0 %v2106
          %3531 = vmatprep.mubr.f32.mxu0 %v2510
          %3532 = vmatmul.mubr.f32.gmra.mrb[0].mxu0 %v2508
          %v3533 = vpop.f32.mrb[0].mxu0
          %v3534 = vadd.f32 %v3463, %v3533
          %v3535 = vpop.f32.mrb[0].mxu0
          %v3536 = vadd.f32 %v3465, %v3535
          %3537 = vdwg.mxu0
          %3538 = vmatprep.subr.mxu0 %v2112
          %3539 = vmatpush1.msra.mxu0 %v2111
          %3540 = vmatprep.subr.mxu0 %v2117
          %3541 = vmatpush1.msra.mxu0 %v2116
          %3542 = vmatprep.subr.mxu0 %v2122
          %3543 = vmatpush1.msra.mxu0 %v2121
          %3544 = vmatprep.subr.mxu0 %v2127
          %3545 = vmatpush1.msra.mxu0 %v2126
          %3546 = vmatprep.subr.mxu0 %v2132
          %3547 = vmatpush1.msra.mxu0 %v2131
          %3548 = vmatprep.subr.mxu0 %v2137
          %3549 = vmatpush1.msra.mxu0 %v2136
          %3550 = vmatprep.subr.mxu0 %v2142
          %3551 = vmatpush1.msra.mxu0 %v2141
          %3552 = vmatprep.subr.mxu0 %v2147
          %3553 = vmatpush1.msra.mxu0 %v2146
          %3554 = vmatprep.subr.mxu0 %v2152
          %3555 = vmatpush1.msra.mxu0 %v2151
          %3556 = vmatprep.subr.mxu0 %v2157
          %3557 = vmatpush1.msra.mxu0 %v2156
          %3558 = vmatprep.subr.mxu0 %v2162
          %3559 = vmatpush1.msra.mxu0 %v2161
          %3560 = vmatprep.subr.mxu0 %v2167
          %3561 = vmatpush1.msra.mxu0 %v2166
          %3562 = vmatprep.subr.mxu0 %v2172
          %3563 = vmatpush1.msra.mxu0 %v2171
          %3564 = vmatprep.subr.mxu0 %v2177
          %3565 = vmatpush1.msra.mxu0 %v2176
          %3566 = vmatprep.subr.mxu0 %v2182
          %3567 = vmatpush1.msra.mxu0 %v2181
          %3568 = vmatprep.subr.mxu0 %v2187
          %3569 = vmatpush1.msra.mxu0 %v2186
          %3570 = vmatprep.subr.mxu0 %v2192
          %3571 = vmatpush1.msra.mxu0 %v2191
          %3572 = vmatprep.subr.mxu0 %v2197
          %3573 = vmatpush1.msra.mxu0 %v2196
          %3574 = vmatprep.subr.mxu0 %v2202
          %3575 = vmatpush1.msra.mxu0 %v2201
          %3576 = vmatprep.subr.mxu0 %v2207
          %3577 = vmatpush1.msra.mxu0 %v2206
          %3578 = vmatprep.subr.mxu0 %v2212
          %3579 = vmatpush1.msra.mxu0 %v2211
          %3580 = vmatprep.subr.mxu0 %v2217
          %3581 = vmatpush1.msra.mxu0 %v2216
          %3582 = vmatprep.subr.mxu0 %v2222
          %3583 = vmatpush1.msra.mxu0 %v2221
          %3584 = vmatprep.subr.mxu0 %v2227
          %3585 = vmatpush1.msra.mxu0 %v2226
          %3586 = vmatprep.subr.mxu0 %v2232
          %3587 = vmatpush1.msra.mxu0 %v2231
          %3588 = vmatprep.subr.mxu0 %v2237
          %3589 = vmatpush1.msra.mxu0 %v2236
          %3590 = vmatprep.subr.mxu0 %v2242
          %3591 = vmatpush1.msra.mxu0 %v2241
          %3592 = vmatprep.subr.mxu0 %v2247
          %3593 = vmatpush1.msra.mxu0 %v2246
          %3594 = vmatprep.subr.mxu0 %v2252
          %3595 = vmatpush1.msra.mxu0 %v2251
          %3596 = vmatprep.subr.mxu0 %v2257
          %3597 = vmatpush1.msra.mxu0 %v2256
          %3598 = vmatprep.subr.mxu0 %v2262
          %3599 = vmatpush1.msra.mxu0 %v2261
          %3600 = vmatprep.subr.mxu0 %v2267
          %3601 = vmatpush1.msra.mxu0 %v2266
          %3602 = vmatprep.mubr.f32.mxu0 %v2526
          %3603 = vmatmul.mubr.f32.gmra.mrb[0].mxu0 %v2518
          %v3604 = vpop.f32.mrb[0].mxu0
          %v3605 = vadd.f32 %v3534, %v3604
          %v3606 = vpop.f32.mrb[0].mxu0
          %v3607 = vadd.f32 %v3536, %v3606
          %3608 = vdwg.mxu0
          %3609 = vmatprep.subr.mxu0 %v2272
          %3610 = vmatpush1.msra.mxu0 %v2271
          %3611 = vmatprep.subr.mxu0 %v2277
          %3612 = vmatpush1.msra.mxu0 %v2276
          %3613 = vmatprep.subr.mxu0 %v2282
          %3614 = vmatpush1.msra.mxu0 %v2281
          %3615 = vmatprep.subr.mxu0 %v2287
          %3616 = vmatpush1.msra.mxu0 %v2286
          %3617 = vmatprep.subr.mxu0 %v2292
          %3618 = vmatpush1.msra.mxu0 %v2291
          %3619 = vmatprep.subr.mxu0 %v2297
          %3620 = vmatpush1.msra.mxu0 %v2296
          %3621 = vmatprep.subr.mxu0 %v2302
          %3622 = vmatpush1.msra.mxu0 %v2301
          %3623 = vmatprep.subr.mxu0 %v2307
          %3624 = vmatpush1.msra.mxu0 %v2306
          %3625 = vmatprep.subr.mxu0 %v2312
          %3626 = vmatpush1.msra.mxu0 %v2311
          %3627 = vmatprep.subr.mxu0 %v2317
          %3628 = vmatpush1.msra.mxu0 %v2316
          %3629 = vmatprep.subr.mxu0 %v2322
          %3630 = vmatpush1.msra.mxu0 %v2321
          %3631 = vmatprep.subr.mxu0 %v2327
          %3632 = vmatpush1.msra.mxu0 %v2326
          %3633 = vmatprep.subr.mxu0 %v2332
          %3634 = vmatpush1.msra.mxu0 %v2331
          %3635 = vmatprep.subr.mxu0 %v2337
          %3636 = vmatpush1.msra.mxu0 %v2336
          %3637 = vmatprep.subr.mxu0 %v2342
          %3638 = vmatpush1.msra.mxu0 %v2341
          %3639 = vmatprep.subr.mxu0 %v2347
          %3640 = vmatpush1.msra.mxu0 %v2346
          %3641 = vmatprep.subr.mxu0 %v2352
          %3642 = vmatpush1.msra.mxu0 %v2351
          %3643 = vmatprep.subr.mxu0 %v2357
          %3644 = vmatpush1.msra.mxu0 %v2356
          %3645 = vmatprep.subr.mxu0 %v2362
          %3646 = vmatpush1.msra.mxu0 %v2361
          %3647 = vmatprep.subr.mxu0 %v2367
          %3648 = vmatpush1.msra.mxu0 %v2366
          %3649 = vmatprep.subr.mxu0 %v2372
          %3650 = vmatpush1.msra.mxu0 %v2371
          %3651 = vmatprep.subr.mxu0 %v2377
          %3652 = vmatpush1.msra.mxu0 %v2376
          %3653 = vmatprep.subr.mxu0 %v2382
          %3654 = vmatpush1.msra.mxu0 %v2381
          %3655 = vmatprep.subr.mxu0 %v2387
          %3656 = vmatpush1.msra.mxu0 %v2386
          %3657 = vmatprep.subr.mxu0 %v2392
          %3658 = vmatpush1.msra.mxu0 %v2391
          %3659 = vmatprep.subr.mxu0 %v2397
          %3660 = vmatpush1.msra.mxu0 %v2396
          %3661 = vmatprep.subr.mxu0 %v2402
          %3662 = vmatpush1.msra.mxu0 %v2401
          %3663 = vmatprep.subr.mxu0 %v2407
          %3664 = vmatpush1.msra.mxu0 %v2406
          %3665 = vmatprep.subr.mxu0 %v2412
          %3666 = vmatpush1.msra.mxu0 %v2411
          %3667 = vmatprep.subr.mxu0 %v2417
          %3668 = vmatpush1.msra.mxu0 %v2416
          %3669 = vmatprep.subr.mxu0 %v2422
          %3670 = vmatpush1.msra.mxu0 %v2421
          %3671 = vmatprep.subr.mxu0 %v2427
          %3672 = vmatpush1.msra.mxu0 %v2426
          %3673 = vmatprep.mubr.f32.mxu0 %v2527
          %3674 = vmatmul.mubr.f32.gmra.mrb[0].mxu0 %v2525
          %v3675 = vpop.f32.mrb[0].mxu0
          %v3676 = vadd.f32 %v3605, %v3675
          %v3677 = vpop.f32.mrb[0].mxu0
          %v3678 = vadd.f32 %v3607, %v3677
          %3679 = vdwg.mxu0
          %3680 = vmatprep.subr.mxu0 0.0
          %3681 = vmatpush1.msra.mxu0 %v1153
          %3682 = vmatprep.subr.mxu0 0.0
          %3683 = vmatpush1.msra.mxu0 %v1158
          %3684 = vmatprep.subr.mxu0 0.0
          %3685 = vmatpush1.msra.mxu0 %v1163
          %3686 = vmatprep.subr.mxu0 0.0
          %3687 = vmatpush1.msra.mxu0 %v1168
          %3688 = vmatprep.subr.mxu0 0.0
          %3689 = vmatpush1.msra.mxu0 %v1173
          %3690 = vmatprep.subr.mxu0 0.0
          %3691 = vmatpush1.msra.mxu0 %v1178
          %3692 = vmatprep.subr.mxu0 0.0
          %3693 = vmatpush1.msra.mxu0 %v1183
          %3694 = vmatprep.subr.mxu0 0.0
          %3695 = vmatpush1.msra.mxu0 %v1188
          %3696 = vmatprep.subr.mxu0 0.0
          %3697 = vmatpush1.msra.mxu0 %v1193
          %3698 = vmatprep.subr.mxu0 0.0
          %3699 = vmatpush1.msra.mxu0 %v1198
          %3700 = vmatprep.subr.mxu0 0.0
          %3701 = vmatpush1.msra.mxu0 %v1203
          %3702 = vmatprep.subr.mxu0 0.0
          %3703 = vmatpush1.msra.mxu0 %v1208
          %3704 = vmatprep.subr.mxu0 0.0
          %3705 = vmatpush1.msra.mxu0 %v1213
          %3706 = vmatprep.subr.mxu0 0.0
          %3707 = vmatpush1.msra.mxu0 %v1218
          %3708 = vmatprep.subr.mxu0 0.0
          %3709 = vmatpush1.msra.mxu0 %v1223
          %3710 = vmatprep.subr.mxu0 0.0
          %3711 = vmatpush1.msra.mxu0 %v1228
          %3712 = vmatprep.subr.mxu0 0.0
          %3713 = vmatpush1.msra.mxu0 %v1233
          %3714 = vmatprep.subr.mxu0 0.0
          %3715 = vmatpush1.msra.mxu0 %v1238
          %3716 = vmatprep.subr.mxu0 0.0
          %3717 = vmatpush1.msra.mxu0 %v1243
          %3718 = vmatprep.subr.mxu0 0.0
          %3719 = vmatpush1.msra.mxu0 %v1248
          %3720 = vmatprep.subr.mxu0 0.0
          %3721 = vmatpush1.msra.mxu0 %v1253
          %3722 = vmatprep.subr.mxu0 0.0
          %3723 = vmatpush1.msra.mxu0 %v1258
          %3724 = vmatprep.subr.mxu0 0.0
          %3725 = vmatpush1.msra.mxu0 %v1263
          %3726 = vmatprep.subr.mxu0 0.0
          %3727 = vmatpush1.msra.mxu0 %v1268
          %3728 = vmatprep.subr.mxu0 0.0
          %3729 = vmatpush1.msra.mxu0 %v1273
          %3730 = vmatprep.subr.mxu0 0.0
          %3731 = vmatpush1.msra.mxu0 %v1278
          %3732 = vmatprep.subr.mxu0 0.0
          %3733 = vmatpush1.msra.mxu0 %v1283
          %3734 = vmatprep.subr.mxu0 0.0
          %3735 = vmatpush1.msra.mxu0 %v1288
          %3736 = vmatprep.subr.mxu0 0.0
          %3737 = vmatpush1.msra.mxu0 %v1293
          %3738 = vmatprep.subr.mxu0 0.0
          %3739 = vmatpush1.msra.mxu0 %v1298
          %3740 = vmatprep.subr.mxu0 0.0
          %3741 = vmatpush1.msra.mxu0 %v1303
          %3742 = vmatprep.subr.mxu0 0.0
          %3743 = vmatpush1.msra.mxu0 %v1308
          %3744 = vmatprep.mubr.f32.mxu0 %v2475
          %3745 = vmatmul.mubr.f32.gmra.mrb[0].mxu0 %v2467
          %v3746 = vpop.f32.mrb[0].mxu0
          %v3747 = vadd.f32 %v2450, %v3746
          %v3748 = vpop.f32.mrb[0].mxu0
          %3749 = vdwg.mxu0
          %3750 = vmatprep.subr.mxu0 0.0
          %3751 = vmatpush1.msra.mxu0 %v1313
          %3752 = vmatprep.subr.mxu0 0.0
          %3753 = vmatpush1.msra.mxu0 %v1318
          %3754 = vmatprep.subr.mxu0 0.0
          %3755 = vmatpush1.msra.mxu0 %v1323
          %3756 = vmatprep.subr.mxu0 0.0
          %3757 = vmatpush1.msra.mxu0 %v1328
          %3758 = vmatprep.subr.mxu0 0.0
          %3759 = vmatpush1.msra.mxu0 %v1333
          %3760 = vmatprep.subr.mxu0 0.0
          %3761 = vmatpush1.msra.mxu0 %v1338
          %3762 = vmatprep.subr.mxu0 0.0
          %3763 = vmatpush1.msra.mxu0 %v1343
          %3764 = vmatprep.subr.mxu0 0.0
          %3765 = vmatpush1.msra.mxu0 %v1348
          %3766 = vmatprep.subr.mxu0 0.0
          %3767 = vmatpush1.msra.mxu0 %v1353
          %3768 = vmatprep.subr.mxu0 0.0
          %3769 = vmatpush1.msra.mxu0 %v1358
          %3770 = vmatprep.subr.mxu0 0.0
          %3771 = vmatpush1.msra.mxu0 %v1363
          %3772 = vmatprep.subr.mxu0 0.0
          %3773 = vmatpush1.msra.mxu0 %v1368
          %3774 = vmatprep.subr.mxu0 0.0
          %3775 = vmatpush1.msra.mxu0 %v1373
          %3776 = vmatprep.subr.mxu0 0.0
          %3777 = vmatpush1.msra.mxu0 %v1378
          %3778 = vmatprep.subr.mxu0 0.0
          %3779 = vmatpush1.msra.mxu0 %v1383
          %3780 = vmatprep.subr.mxu0 0.0
          %3781 = vmatpush1.msra.mxu0 %v1388
          %3782 = vmatprep.subr.mxu0 0.0
          %3783 = vmatpush1.msra.mxu0 %v1393
          %3784 = vmatprep.subr.mxu0 0.0
          %3785 = vmatpush1.msra.mxu0 %v1398
          %3786 = vmatprep.subr.mxu0 0.0
          %3787 = vmatpush1.msra.mxu0 %v1403
          %3788 = vmatprep.subr.mxu0 0.0
          %3789 = vmatpush1.msra.mxu0 %v1408
          %3790 = vmatprep.subr.mxu0 0.0
          %3791 = vmatpush1.msra.mxu0 %v1413
          %3792 = vmatprep.subr.mxu0 0.0
          %3793 = vmatpush1.msra.mxu0 %v1418
          %3794 = vmatprep.subr.mxu0 0.0
          %3795 = vmatpush1.msra.mxu0 %v1423
          %3796 = vmatprep.subr.mxu0 0.0
          %3797 = vmatpush1.msra.mxu0 %v1428
          %3798 = vmatprep.subr.mxu0 0.0
          %3799 = vmatpush1.msra.mxu0 %v1433
          %3800 = vmatprep.subr.mxu0 0.0
          %3801 = vmatpush1.msra.mxu0 %v1438
          %3802 = vmatprep.subr.mxu0 0.0
          %3803 = vmatpush1.msra.mxu0 %v1443
          %3804 = vmatprep.subr.mxu0 0.0
          %3805 = vmatpush1.msra.mxu0 %v1448
          %3806 = vmatprep.subr.mxu0 0.0
          %3807 = vmatpush1.msra.mxu0 %v1453
          %3808 = vmatprep.subr.mxu0 0.0
          %3809 = vmatpush1.msra.mxu0 %v1458
          %3810 = vmatprep.subr.mxu0 0.0
          %3811 = vmatpush1.msra.mxu0 %v1463
          %3812 = vmatprep.subr.mxu0 0.0
          %3813 = vmatpush1.msra.mxu0 %v1468
          %3814 = vmatprep.mubr.f32.mxu0 %v2476
          %3815 = vmatmul.mubr.f32.gmra.mrb[0].mxu0 %v2474
          %v3816 = vpop.f32.mrb[0].mxu0
          %v3817 = vadd.f32 %v3747, %v3816
          %v3818 = vpop.f32.mrb[0].mxu0
          %3819 = vdwg.mxu0
          %3820 = vmatprep.subr.mxu0 0.0
          %3821 = vmatpush1.msra.mxu0 %v1473
          %3822 = vmatprep.subr.mxu0 0.0
          %3823 = vmatpush1.msra.mxu0 %v1478
          %3824 = vmatprep.subr.mxu0 0.0
          %3825 = vmatpush1.msra.mxu0 %v1483
          %3826 = vmatprep.subr.mxu0 0.0
          %3827 = vmatpush1.msra.mxu0 %v1488
          %3828 = vmatprep.subr.mxu0 0.0
          %3829 = vmatpush1.msra.mxu0 %v1493
          %3830 = vmatprep.subr.mxu0 0.0
          %3831 = vmatpush1.msra.mxu0 %v1498
          %3832 = vmatprep.subr.mxu0 0.0
          %3833 = vmatpush1.msra.mxu0 %v1503
          %3834 = vmatprep.subr.mxu0 0.0
          %3835 = vmatpush1.msra.mxu0 %v1508
          %3836 = vmatprep.subr.mxu0 0.0
          %3837 = vmatpush1.msra.mxu0 %v1513
          %3838 = vmatprep.subr.mxu0 0.0
          %3839 = vmatpush1.msra.mxu0 %v1518
          %3840 = vmatprep.subr.mxu0 0.0
          %3841 = vmatpush1.msra.mxu0 %v1523
          %3842 = vmatprep.subr.mxu0 0.0
          %3843 = vmatpush1.msra.mxu0 %v1528
          %3844 = vmatprep.subr.mxu0 0.0
          %3845 = vmatpush1.msra.mxu0 %v1533
          %3846 = vmatprep.subr.mxu0 0.0
          %3847 = vmatpush1.msra.mxu0 %v1538
          %3848 = vmatprep.subr.mxu0 0.0
          %3849 = vmatpush1.msra.mxu0 %v1543
          %3850 = vmatprep.subr.mxu0 0.0
          %3851 = vmatpush1.msra.mxu0 %v1548
          %3852 = vmatprep.subr.mxu0 0.0
          %3853 = vmatpush1.msra.mxu0 %v1553
          %3854 = vmatprep.subr.mxu0 0.0
          %3855 = vmatpush1.msra.mxu0 %v1558
          %3856 = vmatprep.subr.mxu0 0.0
          %3857 = vmatpush1.msra.mxu0 %v1563
          %3858 = vmatprep.subr.mxu0 0.0
          %3859 = vmatpush1.msra.mxu0 %v1568
          %3860 = vmatprep.subr.mxu0 0.0
          %3861 = vmatpush1.msra.mxu0 %v1573
          %3862 = vmatprep.subr.mxu0 0.0
          %3863 = vmatpush1.msra.mxu0 %v1578
          %3864 = vmatprep.subr.mxu0 0.0
          %3865 = vmatpush1.msra.mxu0 %v1583
          %3866 = vmatprep.subr.mxu0 0.0
          %3867 = vmatpush1.msra.mxu0 %v1588
          %3868 = vmatprep.subr.mxu0 0.0
          %3869 = vmatpush1.msra.mxu0 %v1593
          %3870 = vmatprep.subr.mxu0 0.0
          %3871 = vmatpush1.msra.mxu0 %v1598
          %3872 = vmatprep.subr.mxu0 0.0
          %3873 = vmatpush1.msra.mxu0 %v1603
          %3874 = vmatprep.subr.mxu0 0.0
          %3875 = vmatpush1.msra.mxu0 %v1608
          %3876 = vmatprep.subr.mxu0 0.0
          %3877 = vmatpush1.msra.mxu0 %v1613
          %3878 = vmatprep.subr.mxu0 0.0
          %3879 = vmatpush1.msra.mxu0 %v1618
          %3880 = vmatprep.subr.mxu0 0.0
          %3881 = vmatpush1.msra.mxu0 %v1623
          %3882 = vmatprep.subr.mxu0 0.0
          %3883 = vmatpush1.msra.mxu0 %v1628
          %3884 = vmatprep.mubr.f32.mxu0 %v2492
          %3885 = vmatmul.mubr.f32.gmra.mrb[0].mxu0 %v2484
          %v3886 = vpop.f32.mrb[0].mxu0
          %v3887 = vadd.f32 %v3817, %v3886
          %v3888 = vpop.f32.mrb[0].mxu0
          %3889 = vdwg.mxu0
          %3890 = vmatprep.subr.mxu0 0.0
          %3891 = vmatpush1.msra.mxu0 %v1633
          %3892 = vmatprep.subr.mxu0 0.0
          %3893 = vmatpush1.msra.mxu0 %v1638
          %3894 = vmatprep.subr.mxu0 0.0
          %3895 = vmatpush1.msra.mxu0 %v1643
          %3896 = vmatprep.subr.mxu0 0.0
          %3897 = vmatpush1.msra.mxu0 %v1648
          %3898 = vmatprep.subr.mxu0 0.0
          %3899 = vmatpush1.msra.mxu0 %v1653
          %3900 = vmatprep.subr.mxu0 0.0
          %3901 = vmatpush1.msra.mxu0 %v1658
          %3902 = vmatprep.subr.mxu0 0.0
          %3903 = vmatpush1.msra.mxu0 %v1663
          %3904 = vmatprep.subr.mxu0 0.0
          %3905 = vmatpush1.msra.mxu0 %v1668
          %3906 = vmatprep.subr.mxu0 0.0
          %3907 = vmatpush1.msra.mxu0 %v1673
          %3908 = vmatprep.subr.mxu0 0.0
          %3909 = vmatpush1.msra.mxu0 %v1678
          %3910 = vmatprep.subr.mxu0 0.0
          %3911 = vmatpush1.msra.mxu0 %v1683
          %3912 = vmatprep.subr.mxu0 0.0
          %3913 = vmatpush1.msra.mxu0 %v1688
          %3914 = vmatprep.subr.mxu0 0.0
          %3915 = vmatpush1.msra.mxu0 %v1693
          %3916 = vmatprep.subr.mxu0 0.0
          %3917 = vmatpush1.msra.mxu0 %v1698
          %3918 = vmatprep.subr.mxu0 0.0
          %3919 = vmatpush1.msra.mxu0 %v1703
          %3920 = vmatprep.subr.mxu0 0.0
          %3921 = vmatpush1.msra.mxu0 %v1708
          %3922 = vmatprep.subr.mxu0 0.0
          %3923 = vmatpush1.msra.mxu0 %v1713
          %3924 = vmatprep.subr.mxu0 0.0
          %3925 = vmatpush1.msra.mxu0 %v1718
          %3926 = vmatprep.subr.mxu0 0.0
          %3927 = vmatpush1.msra.mxu0 %v1723
          %3928 = vmatprep.subr.mxu0 0.0
          %3929 = vmatpush1.msra.mxu0 %v1728
          %3930 = vmatprep.subr.mxu0 0.0
          %3931 = vmatpush1.msra.mxu0 %v1733
          %3932 = vmatprep.subr.mxu0 0.0
          %3933 = vmatpush1.msra.mxu0 %v1738
          %3934 = vmatprep.subr.mxu0 0.0
          %3935 = vmatpush1.msra.mxu0 %v1743
          %3936 = vmatprep.subr.mxu0 0.0
          %3937 = vmatpush1.msra.mxu0 %v1748
          %3938 = vmatprep.subr.mxu0 0.0
          %3939 = vmatpush1.msra.mxu0 %v1753
          %3940 = vmatprep.subr.mxu0 0.0
          %3941 = vmatpush1.msra.mxu0 %v1758
          %3942 = vmatprep.subr.mxu0 0.0
          %3943 = vmatpush1.msra.mxu0 %v1763
          %3944 = vmatprep.subr.mxu0 0.0
          %3945 = vmatpush1.msra.mxu0 %v1768
          %3946 = vmatprep.subr.mxu0 0.0
          %3947 = vmatpush1.msra.mxu0 %v1773
          %3948 = vmatprep.subr.mxu0 0.0
          %3949 = vmatpush1.msra.mxu0 %v1778
          %3950 = vmatprep.subr.mxu0 0.0
          %3951 = vmatpush1.msra.mxu0 %v1783
          %3952 = vmatprep.subr.mxu0 0.0
          %3953 = vmatpush1.msra.mxu0 %v1788
          %3954 = vmatprep.mubr.f32.mxu0 %v2493
          %3955 = vmatmul.mubr.f32.gmra.mrb[0].mxu0 %v2491
          %v3956 = vpop.f32.mrb[0].mxu0
          %v3957 = vadd.f32 %v3887, %v3956
          %v3958 = vpop.f32.mrb[0].mxu0
          %3959 = vdwg.mxu0
          %3960 = vmatprep.subr.mxu0 0.0
          %3961 = vmatpush1.msra.mxu0 %v1793
          %3962 = vmatprep.subr.mxu0 0.0
          %3963 = vmatpush1.msra.mxu0 %v1798
          %3964 = vmatprep.subr.mxu0 0.0
          %3965 = vmatpush1.msra.mxu0 %v1803
          %3966 = vmatprep.subr.mxu0 0.0
          %3967 = vmatpush1.msra.mxu0 %v1808
          %3968 = vmatprep.subr.mxu0 0.0
          %3969 = vmatpush1.msra.mxu0 %v1813
          %3970 = vmatprep.subr.mxu0 0.0
          %3971 = vmatpush1.msra.mxu0 %v1818
          %3972 = vmatprep.subr.mxu0 0.0
          %3973 = vmatpush1.msra.mxu0 %v1823
          %3974 = vmatprep.subr.mxu0 0.0
          %3975 = vmatpush1.msra.mxu0 %v1828
          %3976 = vmatprep.subr.mxu0 0.0
          %3977 = vmatpush1.msra.mxu0 %v1833
          %3978 = vmatprep.subr.mxu0 0.0
          %3979 = vmatpush1.msra.mxu0 %v1838
          %3980 = vmatprep.subr.mxu0 0.0
          %3981 = vmatpush1.msra.mxu0 %v1843
          %3982 = vmatprep.subr.mxu0 0.0
          %3983 = vmatpush1.msra.mxu0 %v1848
          %3984 = vmatprep.subr.mxu0 0.0
          %3985 = vmatpush1.msra.mxu0 %v1853
          %3986 = vmatprep.subr.mxu0 0.0
          %3987 = vmatpush1.msra.mxu0 %v1858
          %3988 = vmatprep.subr.mxu0 0.0
          %3989 = vmatpush1.msra.mxu0 %v1863
          %3990 = vmatprep.subr.mxu0 0.0
          %3991 = vmatpush1.msra.mxu0 %v1868
          %3992 = vmatprep.subr.mxu0 0.0
          %3993 = vmatpush1.msra.mxu0 %v1873
          %3994 = vmatprep.subr.mxu0 0.0
          %3995 = vmatpush1.msra.mxu0 %v1878
          %3996 = vmatprep.subr.mxu0 0.0
          %3997 = vmatpush1.msra.mxu0 %v1883
          %3998 = vmatprep.subr.mxu0 0.0
          %3999 = vmatpush1.msra.mxu0 %v1888
          %4000 = vmatprep.subr.mxu0 0.0
          %4001 = vmatpush1.msra.mxu0 %v1893
          %4002 = vmatprep.subr.mxu0 0.0
          %4003 = vmatpush1.msra.mxu0 %v1898
          %4004 = vmatprep.subr.mxu0 0.0
          %4005 = vmatpush1.msra.mxu0 %v1903
          %4006 = vmatprep.subr.mxu0 0.0
          %4007 = vmatpush1.msra.mxu0 %v1908
          %4008 = vmatprep.subr.mxu0 0.0
          %4009 = vmatpush1.msra.mxu0 %v1913
          %4010 = vmatprep.subr.mxu0 0.0
          %4011 = vmatpush1.msra.mxu0 %v1918
          %4012 = vmatprep.subr.mxu0 0.0
          %4013 = vmatpush1.msra.mxu0 %v1923
          %4014 = vmatprep.subr.mxu0 0.0
          %4015 = vmatpush1.msra.mxu0 %v1928
          %4016 = vmatprep.subr.mxu0 0.0
          %4017 = vmatpush1.msra.mxu0 %v1933
          %4018 = vmatprep.subr.mxu0 0.0
          %4019 = vmatpush1.msra.mxu0 %v1938
          %4020 = vmatprep.subr.mxu0 0.0
          %4021 = vmatpush1.msra.mxu0 %v1943
          %4022 = vmatprep.subr.mxu0 0.0
          %4023 = vmatpush1.msra.mxu0 %v1948
          %4024 = vmatprep.mubr.f32.mxu0 %v2509
          %4025 = vmatmul.mubr.f32.gmra.mrb[0].mxu0 %v2501
          %v4026 = vpop.f32.mrb[0].mxu0
          %v4027 = vadd.f32 %v3957, %v4026
          %v4028 = vpop.f32.mrb[0].mxu0
          %4029 = vdwg.mxu0
          %4030 = vmatprep.subr.mxu0 0.0
          %4031 = vmatpush1.msra.mxu0 %v1953
          %4032 = vmatprep.subr.mxu0 0.0
          %4033 = vmatpush1.msra.mxu0 %v1958
          %4034 = vmatprep.subr.mxu0 0.0
          %4035 = vmatpush1.msra.mxu0 %v1963
          %4036 = vmatprep.subr.mxu0 0.0
          %4037 = vmatpush1.msra.mxu0 %v1968
          %4038 = vmatprep.subr.mxu0 0.0
          %4039 = vmatpush1.msra.mxu0 %v1973
          %4040 = vmatprep.subr.mxu0 0.0
          %4041 = vmatpush1.msra.mxu0 %v1978
          %4042 = vmatprep.subr.mxu0 0.0
          %4043 = vmatpush1.msra.mxu0 %v1983
          %4044 = vmatprep.subr.mxu0 0.0
          %4045 = vmatpush1.msra.mxu0 %v1988
          %4046 = vmatprep.subr.mxu0 0.0
          %4047 = vmatpush1.msra.mxu0 %v1993
          %4048 = vmatprep.subr.mxu0 0.0
          %4049 = vmatpush1.msra.mxu0 %v1998
          %4050 = vmatprep.subr.mxu0 0.0
          %4051 = vmatpush1.msra.mxu0 %v2003
          %4052 = vmatprep.subr.mxu0 0.0
          %4053 = vmatpush1.msra.mxu0 %v2008
          %4054 = vmatprep.subr.mxu0 0.0
          %4055 = vmatpush1.msra.mxu0 %v2013
          %4056 = vmatprep.subr.mxu0 0.0
          %4057 = vmatpush1.msra.mxu0 %v2018
          %4058 = vmatprep.subr.mxu0 0.0
          %4059 = vmatpush1.msra.mxu0 %v2023
          %4060 = vmatprep.subr.mxu0 0.0
          %4061 = vmatpush1.msra.mxu0 %v2028
          %4062 = vmatprep.subr.mxu0 0.0
          %4063 = vmatpush1.msra.mxu0 %v2033
          %4064 = vmatprep.subr.mxu0 0.0
          %4065 = vmatpush1.msra.mxu0 %v2038
          %4066 = vmatprep.subr.mxu0 0.0
          %4067 = vmatpush1.msra.mxu0 %v2043
          %4068 = vmatprep.subr.mxu0 0.0
          %4069 = vmatpush1.msra.mxu0 %v2048
          %4070 = vmatprep.subr.mxu0 0.0
          %4071 = vmatpush1.msra.mxu0 %v2053
          %4072 = vmatprep.subr.mxu0 0.0
          %4073 = vmatpush1.msra.mxu0 %v2058
          %4074 = vmatprep.subr.mxu0 0.0
          %4075 = vmatpush1.msra.mxu0 %v2063
          %4076 = vmatprep.subr.mxu0 0.0
          %4077 = vmatpush1.msra.mxu0 %v2068
          %4078 = vmatprep.subr.mxu0 0.0
          %4079 = vmatpush1.msra.mxu0 %v2073
          %4080 = vmatprep.subr.mxu0 0.0
          %4081 = vmatpush1.msra.mxu0 %v2078
          %4082 = vmatprep.subr.mxu0 0.0
          %4083 = vmatpush1.msra.mxu0 %v2083
          %4084 = vmatprep.subr.mxu0 0.0
          %4085 = vmatpush1.msra.mxu0 %v2088
          %4086 = vmatprep.subr.mxu0 0.0
          %4087 = vmatpush1.msra.mxu0 %v2093
          %4088 = vmatprep.subr.mxu0 0.0
          %4089 = vmatpush1.msra.mxu0 %v2098
          %4090 = vmatprep.subr.mxu0 0.0
          %4091 = vmatpush1.msra.mxu0 %v2103
          %4092 = vmatprep.subr.mxu0 0.0
          %4093 = vmatpush1.msra.mxu0 %v2108
          %4094 = vmatprep.mubr.f32.mxu0 %v2510
          %4095 = vmatmul.mubr.f32.gmra.mrb[0].mxu0 %v2508
          %v4096 = vpop.f32.mrb[0].mxu0
          %v4097 = vadd.f32 %v4027, %v4096
          %v4098 = vpop.f32.mrb[0].mxu0
          %4099 = vdwg.mxu0
          %4100 = vmatprep.subr.mxu0 0.0
          %4101 = vmatpush1.msra.mxu0 %v2113
          %4102 = vmatprep.subr.mxu0 0.0
          %4103 = vmatpush1.msra.mxu0 %v2118
          %4104 = vmatprep.subr.mxu0 0.0
          %4105 = vmatpush1.msra.mxu0 %v2123
          %4106 = vmatprep.subr.mxu0 0.0
          %4107 = vmatpush1.msra.mxu0 %v2128
          %4108 = vmatprep.subr.mxu0 0.0
          %4109 = vmatpush1.msra.mxu0 %v2133
          %4110 = vmatprep.subr.mxu0 0.0
          %4111 = vmatpush1.msra.mxu0 %v2138
          %4112 = vmatprep.subr.mxu0 0.0
          %4113 = vmatpush1.msra.mxu0 %v2143
          %4114 = vmatprep.subr.mxu0 0.0
          %4115 = vmatpush1.msra.mxu0 %v2148
          %4116 = vmatprep.subr.mxu0 0.0
          %4117 = vmatpush1.msra.mxu0 %v2153
          %4118 = vmatprep.subr.mxu0 0.0
          %4119 = vmatpush1.msra.mxu0 %v2158
          %4120 = vmatprep.subr.mxu0 0.0
          %4121 = vmatpush1.msra.mxu0 %v2163
          %4122 = vmatprep.subr.mxu0 0.0
          %4123 = vmatpush1.msra.mxu0 %v2168
          %4124 = vmatprep.subr.mxu0 0.0
          %4125 = vmatpush1.msra.mxu0 %v2173
          %4126 = vmatprep.subr.mxu0 0.0
          %4127 = vmatpush1.msra.mxu0 %v2178
          %4128 = vmatprep.subr.mxu0 0.0
          %4129 = vmatpush1.msra.mxu0 %v2183
          %4130 = vmatprep.subr.mxu0 0.0
          %4131 = vmatpush1.msra.mxu0 %v2188
          %4132 = vmatprep.subr.mxu0 0.0
          %4133 = vmatpush1.msra.mxu0 %v2193
          %4134 = vmatprep.subr.mxu0 0.0
          %4135 = vmatpush1.msra.mxu0 %v2198
          %4136 = vmatprep.subr.mxu0 0.0
          %4137 = vmatpush1.msra.mxu0 %v2203
          %4138 = vmatprep.subr.mxu0 0.0
          %4139 = vmatpush1.msra.mxu0 %v2208
          %4140 = vmatprep.subr.mxu0 0.0
          %4141 = vmatpush1.msra.mxu0 %v2213
          %4142 = vmatprep.subr.mxu0 0.0
          %4143 = vmatpush1.msra.mxu0 %v2218
          %4144 = vmatprep.subr.mxu0 0.0
          %4145 = vmatpush1.msra.mxu0 %v2223
          %4146 = vmatprep.subr.mxu0 0.0
          %4147 = vmatpush1.msra.mxu0 %v2228
          %4148 = vmatprep.subr.mxu0 0.0
          %4149 = vmatpush1.msra.mxu0 %v2233
          %4150 = vmatprep.subr.mxu0 0.0
          %4151 = vmatpush1.msra.mxu0 %v2238
          %4152 = vmatprep.subr.mxu0 0.0
          %4153 = vmatpush1.msra.mxu0 %v2243
          %4154 = vmatprep.subr.mxu0 0.0
          %4155 = vmatpush1.msra.mxu0 %v2248
          %4156 = vmatprep.subr.mxu0 0.0
          %4157 = vmatpush1.msra.mxu0 %v2253
          %4158 = vmatprep.subr.mxu0 0.0
          %4159 = vmatpush1.msra.mxu0 %v2258
          %4160 = vmatprep.subr.mxu0 0.0
          %4161 = vmatpush1.msra.mxu0 %v2263
          %4162 = vmatprep.subr.mxu0 0.0
          %4163 = vmatpush1.msra.mxu0 %v2268
          %4164 = vmatprep.mubr.f32.mxu0 %v2526
          %4165 = vmatmul.mubr.f32.gmra.mrb[0].mxu0 %v2518
          %v4166 = vpop.f32.mrb[0].mxu0
          %v4167 = vadd.f32 %v4097, %v4166
          %v4168 = vpop.f32.mrb[0].mxu0
          %4169 = vdwg.mxu0
          %4170 = vmatprep.subr.mxu0 0.0
          %4171 = vmatpush1.msra.mxu0 %v2273
          %4172 = vmatprep.subr.mxu0 0.0
          %4173 = vmatpush1.msra.mxu0 %v2278
          %4174 = vmatprep.subr.mxu0 0.0
          %4175 = vmatpush1.msra.mxu0 %v2283
          %4176 = vmatprep.subr.mxu0 0.0
          %4177 = vmatpush1.msra.mxu0 %v2288
          %4178 = vmatprep.subr.mxu0 0.0
          %4179 = vmatpush1.msra.mxu0 %v2293
          %4180 = vmatprep.subr.mxu0 0.0
          %4181 = vmatpush1.msra.mxu0 %v2298
          %4182 = vmatprep.subr.mxu0 0.0
          %4183 = vmatpush1.msra.mxu0 %v2303
          %4184 = vmatprep.subr.mxu0 0.0
          %4185 = vmatpush1.msra.mxu0 %v2308
          %4186 = vmatprep.subr.mxu0 0.0
          %4187 = vmatpush1.msra.mxu0 %v2313
          %4188 = vmatprep.subr.mxu0 0.0
          %4189 = vmatpush1.msra.mxu0 %v2318
          %4190 = vmatprep.subr.mxu0 0.0
          %4191 = vmatpush1.msra.mxu0 %v2323
          %4192 = vmatprep.subr.mxu0 0.0
          %4193 = vmatpush1.msra.mxu0 %v2328
          %4194 = vmatprep.subr.mxu0 0.0
          %4195 = vmatpush1.msra.mxu0 %v2333
          %4196 = vmatprep.subr.mxu0 0.0
          %4197 = vmatpush1.msra.mxu0 %v2338
          %4198 = vmatprep.subr.mxu0 0.0
          %4199 = vmatpush1.msra.mxu0 %v2343
          %4200 = vmatprep.subr.mxu0 0.0
          %4201 = vmatpush1.msra.mxu0 %v2348
          %4202 = vmatprep.subr.mxu0 0.0
          %4203 = vmatpush1.msra.mxu0 %v2353
          %4204 = vmatprep.subr.mxu0 0.0
          %4205 = vmatpush1.msra.mxu0 %v2358
          %4206 = vmatprep.subr.mxu0 0.0
          %4207 = vmatpush1.msra.mxu0 %v2363
          %4208 = vmatprep.subr.mxu0 0.0
          %4209 = vmatpush1.msra.mxu0 %v2368
          %4210 = vmatprep.subr.mxu0 0.0
          %4211 = vmatpush1.msra.mxu0 %v2373
          %4212 = vmatprep.subr.mxu0 0.0
          %4213 = vmatpush1.msra.mxu0 %v2378
          %4214 = vmatprep.subr.mxu0 0.0
          %4215 = vmatpush1.msra.mxu0 %v2383
          %4216 = vmatprep.subr.mxu0 0.0
          %4217 = vmatpush1.msra.mxu0 %v2388
          %4218 = vmatprep.subr.mxu0 0.0
          %4219 = vmatpush1.msra.mxu0 %v2393
          %4220 = vmatprep.subr.mxu0 0.0
          %4221 = vmatpush1.msra.mxu0 %v2398
          %4222 = vmatprep.subr.mxu0 0.0
          %4223 = vmatpush1.msra.mxu0 %v2403
          %4224 = vmatprep.subr.mxu0 0.0
          %4225 = vmatpush1.msra.mxu0 %v2408
          %4226 = vmatprep.subr.mxu0 0.0
          %4227 = vmatpush1.msra.mxu0 %v2413
          %4228 = vmatprep.subr.mxu0 0.0
          %4229 = vmatpush1.msra.mxu0 %v2418
          %4230 = vmatprep.subr.mxu0 0.0
          %4231 = vmatpush1.msra.mxu0 %v2423
          %4232 = vmatprep.subr.mxu0 0.0
          %4233 = vmatpush1.msra.mxu0 %v2428
          %4234 = vmatprep.mubr.f32.mxu0 %v2527
          %4235 = vmatmul.mubr.f32.gmra.mrb[0].mxu0 %v2525
          %v4236 = vpop.f32.mrb[0].mxu0
          %v4237 = vadd.f32 %v4167, %v4236
          %v4238 = vpop.f32.mrb[0].mxu0
          %4239 = vdwg.mxu0
          %vm4240 = vcmask 58368
          %4241 = vst.msk [vmem:[%s663] sm:$0x3] %vm4240, %v4237
          %v4242 = vld [vmem:[#allocation9] sm:$0xf]
          %v4243 = vld [vmem:[#allocation11] sm:$0xf]
          %vm4244 = vcmask 1041408
          %v4245 = vsel %vm4244, %v3108, 0.0
          %v4246 = vrot.slane %v4245, 4
          %v4247 = vadd.f32 %v4245, %v4246
          %v4248 = vrot.slane %v4247, 2
          %v4249 = vadd.f32 %v4247, %v4248
          %v4250 = vrot.slane %v4249, 1
          %v4251 = vadd.f32 %v4249, %v4250
          %v4252 = vsel %vm4244, %v3110, 0.0
          %v4253 = vrot.slane %v4252, 4
          %v4254 = vadd.f32 %v4252, %v4253
          %v4255 = vrot.slane %v4254, 2
          %v4256 = vadd.f32 %v4254, %v4255
          %v4257 = vrot.slane %v4256, 1
          %v4258 = vadd.f32 %v4256, %v4257
          %v4259 = vsel %vm4244, %v3676, 0.0
          %v4260 = vrot.slane %v4259, 4
          %v4261 = vadd.f32 %v4259, %v4260
          %v4262 = vrot.slane %v4261, 2
          %v4263 = vadd.f32 %v4261, %v4262
          %v4264 = vrot.slane %v4263, 1
          %v4265 = vadd.f32 %v4263, %v4264
          %v4266 = vsel %vm4244, %v3678, 0.0
          %v4267 = vrot.slane %v4266, 4
          %v4268 = vadd.f32 %v4266, %v4267
          %v4269 = vrot.slane %v4268, 2
          %v4270 = vadd.f32 %v4268, %v4269
          %v4271 = vrot.slane %v4270, 1
          %v4272 = vadd.f32 %v4270, %v4271
          %v4273 = vrcp.pop 2.0
          %v4274 = vmul.f32 %v4251, %v4273
          %v4275 = vmul.f32 %v4258, %v4273
          %v4276 = vmul.f32 %v4265, %v4273
          %v4277 = vmul.f32 %v4272, %v4273
          %v4278 = vsub.f32 %v3108, %v4274
          %v4279 = vsub.f32 %v3110, %v4275
          %v4280 = vsub.f32 %v3676, %v4276
          %v4281 = vsub.f32 %v3678, %v4277
          %v4282 = vmul.f32 %v4278, %v4278
          %v4283 = vmul.f32 %v4279, %v4279
          %v4284 = vmul.f32 %v4280, %v4280
          %v4285 = vmul.f32 %v4281, %v4281
          %v4286 = vsel %vm4244, %v4282, 0.0
          %v4287 = vrot.slane %v4286, 4
          %v4288 = vadd.f32 %v4286, %v4287
          %v4289 = vrot.slane %v4288, 2
          %v4290 = vadd.f32 %v4288, %v4289
          %v4291 = vrot.slane %v4290, 1
          %v4292 = vadd.f32 %v4290, %v4291
          %v4293 = vsel %vm4244, %v4283, 0.0
          %v4294 = vrot.slane %v4293, 4
          %v4295 = vadd.f32 %v4293, %v4294
          %v4296 = vrot.slane %v4295, 2
          %v4297 = vadd.f32 %v4295, %v4296
          %v4298 = vrot.slane %v4297, 1
          %v4299 = vadd.f32 %v4297, %v4298
          %v4300 = vsel %vm4244, %v4284, 0.0
          %v4301 = vrot.slane %v4300, 4
          %v4302 = vadd.f32 %v4300, %v4301
          %v4303 = vrot.slane %v4302, 2
          %v4304 = vadd.f32 %v4302, %v4303
          %v4305 = vrot.slane %v4304, 1
          %v4306 = vadd.f32 %v4304, %v4305
          %v4307 = vsel %vm4244, %v4285, 0.0
          %v4308 = vrot.slane %v4307, 4
          %v4309 = vadd.f32 %v4307, %v4308
          %v4310 = vrot.slane %v4309, 2
          %v4311 = vadd.f32 %v4309, %v4310
          %v4312 = vrot.slane %v4311, 1
          %v4313 = vadd.f32 %v4311, %v4312
          %v4314 = vmul.f32 %v4292, %v4273
          %v4315 = vmul.f32 %v4299, %v4273
          %v4316 = vmul.f32 %v4306, %v4273
          %v4317 = vmul.f32 %v4313, %v4273
          %v4318 = vadd.f32 %v4314, 1e-05
          %v4319 = vadd.f32 %v4315, 1e-05
          %v4320 = vadd.f32 %v4316, 1e-05
          %v4321 = vadd.f32 %v4317, 1e-05
          %v4322 = vrsqrt.pop %v4318
          %v4323 = vrsqrt.pop %v4319
          %v4324 = vrsqrt.pop %v4320
          %v4325 = vrsqrt.pop %v4321
          %v4326 = vmul.f32 %v4278, %v4322
          %v4327 = vmul.f32 %v4279, %v4323
          %v4328 = vmul.f32 %v4280, %v4324
          %v4329 = vmul.f32 %v4281, %v4325
          %v4331 = vlaneseq
          %v4332 = vshrl.u32 %v4331, 7
          %v4333 = vsub.s32 0, %v4332
          %v4334 = vrot.slane %v4242, %v4333
          %v4335 = vlaneseq
          %v4336 = vshrl.u32 %v4335, 7
          %v4337 = vsub.s32 1, %v4336
          %v4338 = vrot.slane %v4242, %v4337
          %v4339 = vlaneseq
          %v4340 = vshrl.u32 %v4339, 7
          %v4341 = vsub.s32 2, %v4340
          %v4342 = vrot.slane %v4242, %v4341
          %v4343 = vlaneseq
          %v4344 = vshrl.u32 %v4343, 7
          %v4345 = vsub.s32 3, %v4344
          %v4346 = vrot.slane %v4242, %v4345
          %v4351 = vmul.f32 %v4326, %v4334
          %v4352 = vmul.f32 %v4327, %v4338
          %v4353 = vmul.f32 %v4328, %v4342
          %v4354 = vmul.f32 %v4329, %v4346
          %v4356 = vlaneseq
          %v4357 = vshrl.u32 %v4356, 7
          %v4358 = vsub.s32 0, %v4357
          %v4359 = vrot.slane %v4243, %v4358
          %v4360 = vlaneseq
          %v4361 = vshrl.u32 %v4360, 7
          %v4362 = vsub.s32 1, %v4361
          %v4363 = vrot.slane %v4243, %v4362
          %v4364 = vlaneseq
          %v4365 = vshrl.u32 %v4364, 7
          %v4366 = vsub.s32 2, %v4365
          %v4367 = vrot.slane %v4243, %v4366
          %v4368 = vlaneseq
          %v4369 = vshrl.u32 %v4368, 7
          %v4370 = vsub.s32 3, %v4369
          %v4371 = vrot.slane %v4243, %v4370
          %v4376 = vadd.f32 %v4351, %v4359
          %v4377 = vadd.f32 %v4352, %v4363
          %v4378 = vadd.f32 %v4353, %v4367
          %v4379 = vadd.f32 %v4354, %v4371
          %v4380 = vmax.f32 %v4376, 0.0
          %v4381 = vmax.f32 %v4377, 0.0
          %v4382 = vmax.f32 %v4378, 0.0
          %v4383 = vmax.f32 %v4379, 0.0
          %v4384 = vld [vmem:[#allocation12] sm:$0xff]
          %v4385 = vld [vmem:[#allocation12 + $0x8] sm:$0xff]
          %v4386 = vld [vmem:[#allocation12 + $0x10] sm:$0xff]
          %v4387 = vld [vmem:[#allocation12 + $0x18] sm:$0xff]
          %v4388 = vld [vmem:[#allocation12 + $0x20] sm:$0xff]
          %v4389 = vld [vmem:[#allocation12 + $0x28] sm:$0xff]
          %v4390 = vld [vmem:[#allocation12 + $0x30] sm:$0xff]
          %v4391 = vld [vmem:[#allocation12 + $0x38] sm:$0xff]
          %v4392 = vld [vmem:[#allocation12 + $0x40] sm:$0xff]
          %v4393 = vld [vmem:[#allocation12 + $0x48] sm:$0xff]
          %v4394 = vld [vmem:[#allocation12 + $0x50] sm:$0xff]
          %v4395 = vld [vmem:[#allocation12 + $0x58] sm:$0xff]
          %v4396 = vld [vmem:[#allocation12 + $0x60] sm:$0xff]
          %v4397 = vld [vmem:[#allocation12 + $0x68] sm:$0xff]
          %v4398 = vld [vmem:[#allocation12 + $0x70] sm:$0xff]
          %v4399 = vld [vmem:[#allocation12 + $0x78] sm:$0xff]
          %v4400 = vld [vmem:[#allocation12 + $0x80] sm:$0xff]
          %v4401 = vld [vmem:[#allocation12 + $0x88] sm:$0xff]
          %v4402 = vld [vmem:[#allocation12 + $0x90] sm:$0xff]
          %v4403 = vld [vmem:[#allocation12 + $0x98] sm:$0xff]
          %v4404 = vld [vmem:[#allocation12 + $0xa0] sm:$0xff]
          %v4405 = vld [vmem:[#allocation12 + $0xa8] sm:$0xff]
          %v4406 = vld [vmem:[#allocation12 + $0xb0] sm:$0xff]
          %v4407 = vld [vmem:[#allocation12 + $0xb8] sm:$0xff]
          %v4408 = vld [vmem:[#allocation12 + $0xc0] sm:$0xff]
          %v4409 = vld [vmem:[#allocation12 + $0xc8] sm:$0xff]
          %v4410 = vld [vmem:[#allocation12 + $0xd0] sm:$0xff]
          %v4411 = vld [vmem:[#allocation12 + $0xd8] sm:$0xff]
          %v4412 = vld [vmem:[#allocation12 + $0xe0] sm:$0xff]
          %v4413 = vld [vmem:[#allocation12 + $0xe8] sm:$0xff]
          %v4414 = vld [vmem:[#allocation12 + $0xf0] sm:$0xff]
          %v4415 = vld [vmem:[#allocation12 + $0xf8] sm:$0xff]
          %v4416 = vld [vmem:[#allocation12 + $0x100] sm:$0xff]
          %v4417 = vld [vmem:[#allocation12 + $0x108] sm:$0xff]
          %v4418 = vld [vmem:[#allocation12 + $0x110] sm:$0xff]
          %v4419 = vld [vmem:[#allocation12 + $0x118] sm:$0xff]
          %v4420 = vld [vmem:[#allocation12 + $0x120] sm:$0xff]
          %v4421 = vld [vmem:[#allocation12 + $0x128] sm:$0xff]
          %v4422 = vld [vmem:[#allocation12 + $0x130] sm:$0xff]
          %v4423 = vld [vmem:[#allocation12 + $0x138] sm:$0xff]
          %v4424 = vld [vmem:[#allocation12 + $0x140] sm:$0xff]
          %v4425 = vld [vmem:[#allocation12 + $0x148] sm:$0xff]
          %v4426 = vld [vmem:[#allocation12 + $0x150] sm:$0xff]
          %v4427 = vld [vmem:[#allocation12 + $0x158] sm:$0xff]
          %v4428 = vld [vmem:[#allocation12 + $0x160] sm:$0xff]
          %v4429 = vld [vmem:[#allocation12 + $0x168] sm:$0xff]
          %v4430 = vld [vmem:[#allocation12 + $0x170] sm:$0xff]
          %v4431 = vld [vmem:[#allocation12 + $0x178] sm:$0xff]
          %v4432 = vld [vmem:[#allocation12 + $0x180] sm:$0xff]
          %v4433 = vld [vmem:[#allocation12 + $0x188] sm:$0xff]
          %v4434 = vld [vmem:[#allocation12 + $0x190] sm:$0xff]
          %v4435 = vld [vmem:[#allocation12 + $0x198] sm:$0xff]
          %v4436 = vld [vmem:[#allocation12 + $0x1a0] sm:$0xff]
          %v4437 = vld [vmem:[#allocation12 + $0x1a8] sm:$0xff]
          %v4438 = vld [vmem:[#allocation12 + $0x1b0] sm:$0xff]
          %v4439 = vld [vmem:[#allocation12 + $0x1b8] sm:$0xff]
          %v4440 = vld [vmem:[#allocation12 + $0x1c0] sm:$0xff]
          %v4441 = vld [vmem:[#allocation12 + $0x1c8] sm:$0xff]
          %v4442 = vld [vmem:[#allocation12 + $0x1d0] sm:$0xff]
          %v4443 = vld [vmem:[#allocation12 + $0x1d8] sm:$0xff]
          %v4444 = vld [vmem:[#allocation12 + $0x1e0] sm:$0xff]
          %v4445 = vld [vmem:[#allocation12 + $0x1e8] sm:$0xff]
          %v4446 = vld [vmem:[#allocation12 + $0x1f0] sm:$0xff]
          %v4447 = vld [vmem:[#allocation12 + $0x1f8] sm:$0xff]
          %v4448 = vld [vmem:[#allocation14] sm:$0x1]
          %v4450 = vlaneseq
          %v4451 = vshrl.u32 %v4450, 7
          %v4452 = vsub.s32 0, %v4451
          %v4453 = vrot.slane %v4448, %v4452
          %4455 = vmatprep.subr.mxu0 0.0
          %4456 = vmatpush1.msra.mxu0 %v4384
          %4457 = vmatprep.subr.mxu0 0.0
          %4458 = vmatpush1.msra.mxu0 %v4385
          %4459 = vmatprep.subr.mxu0 0.0
          %4460 = vmatpush1.msra.mxu0 %v4386
          %4461 = vmatprep.subr.mxu0 0.0
          %4462 = vmatpush1.msra.mxu0 %v4387
          %4463 = vmatprep.subr.mxu0 0.0
          %4464 = vmatpush1.msra.mxu0 %v4388
          %4465 = vmatprep.subr.mxu0 0.0
          %4466 = vmatpush1.msra.mxu0 %v4389
          %4467 = vmatprep.subr.mxu0 0.0
          %4468 = vmatpush1.msra.mxu0 %v4390
          %4469 = vmatprep.subr.mxu0 0.0
          %4470 = vmatpush1.msra.mxu0 %v4391
          %4471 = vmatprep.subr.mxu0 0.0
          %4472 = vmatpush1.msra.mxu0 %v4392
          %4473 = vmatprep.subr.mxu0 0.0
          %4474 = vmatpush1.msra.mxu0 %v4393
          %4475 = vmatprep.subr.mxu0 0.0
          %4476 = vmatpush1.msra.mxu0 %v4394
          %4477 = vmatprep.subr.mxu0 0.0
          %4478 = vmatpush1.msra.mxu0 %v4395
          %4479 = vmatprep.subr.mxu0 0.0
          %4480 = vmatpush1.msra.mxu0 %v4396
          %4481 = vmatprep.subr.mxu0 0.0
          %4482 = vmatpush1.msra.mxu0 %v4397
          %4483 = vmatprep.subr.mxu0 0.0
          %4484 = vmatpush1.msra.mxu0 %v4398
          %4485 = vmatprep.subr.mxu0 0.0
          %4486 = vmatpush1.msra.mxu0 %v4399
          %4487 = vmatprep.subr.mxu0 0.0
          %4488 = vmatpush1.msra.mxu0 %v4400
          %4489 = vmatprep.subr.mxu0 0.0
          %4490 = vmatpush1.msra.mxu0 %v4401
          %4491 = vmatprep.subr.mxu0 0.0
          %4492 = vmatpush1.msra.mxu0 %v4402
          %4493 = vmatprep.subr.mxu0 0.0
          %4494 = vmatpush1.msra.mxu0 %v4403
          %4495 = vmatprep.subr.mxu0 0.0
          %4496 = vmatpush1.msra.mxu0 %v4404
          %4497 = vmatprep.subr.mxu0 0.0
          %4498 = vmatpush1.msra.mxu0 %v4405
          %4499 = vmatprep.subr.mxu0 0.0
          %4500 = vmatpush1.msra.mxu0 %v4406
          %4501 = vmatprep.subr.mxu0 0.0
          %4502 = vmatpush1.msra.mxu0 %v4407
          %4503 = vmatprep.subr.mxu0 0.0
          %4504 = vmatpush1.msra.mxu0 %v4408
          %4505 = vmatprep.subr.mxu0 0.0
          %4506 = vmatpush1.msra.mxu0 %v4409
          %4507 = vmatprep.subr.mxu0 0.0
          %4508 = vmatpush1.msra.mxu0 %v4410
          %4509 = vmatprep.subr.mxu0 0.0
          %4510 = vmatpush1.msra.mxu0 %v4411
          %4511 = vmatprep.subr.mxu0 0.0
          %4512 = vmatpush1.msra.mxu0 %v4412
          %4513 = vmatprep.subr.mxu0 0.0
          %4514 = vmatpush1.msra.mxu0 %v4413
          %4515 = vmatprep.subr.mxu0 0.0
          %4516 = vmatpush1.msra.mxu0 %v4414
          %4517 = vmatprep.subr.mxu0 0.0
          %4518 = vmatpush1.msra.mxu0 %v4415
          %4519 = vmatprep.mubr.f32.mxu0 %v4381
          %4520 = vmatmul.mubr.f32.gmra.mrb[0].mxu0 %v4380
          %v4521 = vpop.f32.mrb[0].mxu0
          %v4522 = vadd.f32 %v4453, %v4521
          %v4523 = vpop.f32.mrb[0].mxu0
          %4524 = vdwg.mxu0
          %4525 = vmatprep.subr.mxu0 0.0
          %4526 = vmatpush1.msra.mxu0 %v4416
          %4527 = vmatprep.subr.mxu0 0.0
          %4528 = vmatpush1.msra.mxu0 %v4417
          %4529 = vmatprep.subr.mxu0 0.0
          %4530 = vmatpush1.msra.mxu0 %v4418
          %4531 = vmatprep.subr.mxu0 0.0
          %4532 = vmatpush1.msra.mxu0 %v4419
          %4533 = vmatprep.subr.mxu0 0.0
          %4534 = vmatpush1.msra.mxu0 %v4420
          %4535 = vmatprep.subr.mxu0 0.0
          %4536 = vmatpush1.msra.mxu0 %v4421
          %4537 = vmatprep.subr.mxu0 0.0
          %4538 = vmatpush1.msra.mxu0 %v4422
          %4539 = vmatprep.subr.mxu0 0.0
          %4540 = vmatpush1.msra.mxu0 %v4423
          %4541 = vmatprep.subr.mxu0 0.0
          %4542 = vmatpush1.msra.mxu0 %v4424
          %4543 = vmatprep.subr.mxu0 0.0
          %4544 = vmatpush1.msra.mxu0 %v4425
          %4545 = vmatprep.subr.mxu0 0.0
          %4546 = vmatpush1.msra.mxu0 %v4426
          %4547 = vmatprep.subr.mxu0 0.0
          %4548 = vmatpush1.msra.mxu0 %v4427
          %4549 = vmatprep.subr.mxu0 0.0
          %4550 = vmatpush1.msra.mxu0 %v4428
          %4551 = vmatprep.subr.mxu0 0.0
          %4552 = vmatpush1.msra.mxu0 %v4429
          %4553 = vmatprep.subr.mxu0 0.0
          %4554 = vmatpush1.msra.mxu0 %v4430
          %4555 = vmatprep.subr.mxu0 0.0
          %4556 = vmatpush1.msra.mxu0 %v4431
          %4557 = vmatprep.subr.mxu0 0.0
          %4558 = vmatpush1.msra.mxu0 %v4432
          %4559 = vmatprep.subr.mxu0 0.0
          %4560 = vmatpush1.msra.mxu0 %v4433
          %4561 = vmatprep.subr.mxu0 0.0
          %4562 = vmatpush1.msra.mxu0 %v4434
          %4563 = vmatprep.subr.mxu0 0.0
          %4564 = vmatpush1.msra.mxu0 %v4435
          %4565 = vmatprep.subr.mxu0 0.0
          %4566 = vmatpush1.msra.mxu0 %v4436
          %4567 = vmatprep.subr.mxu0 0.0
          %4568 = vmatpush1.msra.mxu0 %v4437
          %4569 = vmatprep.subr.mxu0 0.0
          %4570 = vmatpush1.msra.mxu0 %v4438
          %4571 = vmatprep.subr.mxu0 0.0
          %4572 = vmatpush1.msra.mxu0 %v4439
          %4573 = vmatprep.subr.mxu0 0.0
          %4574 = vmatpush1.msra.mxu0 %v4440
          %4575 = vmatprep.subr.mxu0 0.0
          %4576 = vmatpush1.msra.mxu0 %v4441
          %4577 = vmatprep.subr.mxu0 0.0
          %4578 = vmatpush1.msra.mxu0 %v4442
          %4579 = vmatprep.subr.mxu0 0.0
          %4580 = vmatpush1.msra.mxu0 %v4443
          %4581 = vmatprep.subr.mxu0 0.0
          %4582 = vmatpush1.msra.mxu0 %v4444
          %4583 = vmatprep.subr.mxu0 0.0
          %4584 = vmatpush1.msra.mxu0 %v4445
          %4585 = vmatprep.subr.mxu0 0.0
          %4586 = vmatpush1.msra.mxu0 %v4446
          %4587 = vmatprep.subr.mxu0 0.0
          %4588 = vmatpush1.msra.mxu0 %v4447
          %4589 = vmatprep.mubr.f32.mxu0 %v4383
          %4590 = vmatmul.mubr.f32.gmra.mrb[0].mxu0 %v4382
          %v4591 = vpop.f32.mrb[0].mxu0
          %v4592 = vadd.f32 %v4522, %v4591
          %v4593 = vpop.f32.mrb[0].mxu0
          %4594 = vdwg.mxu0
          %v4595 = vld [vmem:[#allocation15] sm:$0xff]
          %v4596 = vld [vmem:[#allocation15 + $0x8] sm:$0xff]
          %v4597 = vld [vmem:[#allocation15 + $0x10] sm:$0xff]
          %v4598 = vld [vmem:[#allocation15 + $0x18] sm:$0xff]
          %v4599 = vld [vmem:[#allocation15 + $0x20] sm:$0xff]
          %v4600 = vld [vmem:[#allocation15 + $0x28] sm:$0xff]
          %v4601 = vld [vmem:[#allocation15 + $0x30] sm:$0xff]
          %v4602 = vld [vmem:[#allocation15 + $0x38] sm:$0xff]
          %v4603 = vld [vmem:[#allocation15 + $0x40] sm:$0xff]
          %v4604 = vld [vmem:[#allocation15 + $0x48] sm:$0xff]
          %v4605 = vld [vmem:[#allocation15 + $0x50] sm:$0xff]
          %v4606 = vld [vmem:[#allocation15 + $0x58] sm:$0xff]
          %v4607 = vld [vmem:[#allocation15 + $0x60] sm:$0xff]
          %v4608 = vld [vmem:[#allocation15 + $0x68] sm:$0xff]
          %v4609 = vld [vmem:[#allocation15 + $0x70] sm:$0xff]
          %v4610 = vld [vmem:[#allocation15 + $0x78] sm:$0xff]
          %v4611 = vld [vmem:[#allocation15 + $0x80] sm:$0xff]
          %v4612 = vld [vmem:[#allocation15 + $0x88] sm:$0xff]
          %v4613 = vld [vmem:[#allocation15 + $0x90] sm:$0xff]
          %v4614 = vld [vmem:[#allocation15 + $0x98] sm:$0xff]
          %v4615 = vld [vmem:[#allocation15 + $0xa0] sm:$0xff]
          %v4616 = vld [vmem:[#allocation15 + $0xa8] sm:$0xff]
          %v4617 = vld [vmem:[#allocation15 + $0xb0] sm:$0xff]
          %v4618 = vld [vmem:[#allocation15 + $0xb8] sm:$0xff]
          %v4619 = vld [vmem:[#allocation15 + $0xc0] sm:$0xff]
          %v4620 = vld [vmem:[#allocation15 + $0xc8] sm:$0xff]
          %v4621 = vld [vmem:[#allocation15 + $0xd0] sm:$0xff]
          %v4622 = vld [vmem:[#allocation15 + $0xd8] sm:$0xff]
          %v4623 = vld [vmem:[#allocation15 + $0xe0] sm:$0xff]
          %v4624 = vld [vmem:[#allocation15 + $0xe8] sm:$0xff]
          %v4625 = vld [vmem:[#allocation15 + $0xf0] sm:$0xff]
          %v4626 = vld [vmem:[#allocation15 + $0xf8] sm:$0xff]
          %v4627 = vld [vmem:[#allocation15 + $0x100] sm:$0xff]
          %v4628 = vld [vmem:[#allocation15 + $0x108] sm:$0xff]
          %v4629 = vld [vmem:[#allocation15 + $0x110] sm:$0xff]
          %v4630 = vld [vmem:[#allocation15 + $0x118] sm:$0xff]
          %v4631 = vld [vmem:[#allocation15 + $0x120] sm:$0xff]
          %v4632 = vld [vmem:[#allocation15 + $0x128] sm:$0xff]
          %v4633 = vld [vmem:[#allocation15 + $0x130] sm:$0xff]
          %v4634 = vld [vmem:[#allocation15 + $0x138] sm:$0xff]
          %v4635 = vld [vmem:[#allocation15 + $0x140] sm:$0xff]
          %v4636 = vld [vmem:[#allocation15 + $0x148] sm:$0xff]
          %v4637 = vld [vmem:[#allocation15 + $0x150] sm:$0xff]
          %v4638 = vld [vmem:[#allocation15 + $0x158] sm:$0xff]
          %v4639 = vld [vmem:[#allocation15 + $0x160] sm:$0xff]
          %v4640 = vld [vmem:[#allocation15 + $0x168] sm:$0xff]
          %v4641 = vld [vmem:[#allocation15 + $0x170] sm:$0xff]
          %v4642 = vld [vmem:[#allocation15 + $0x178] sm:$0xff]
          %v4643 = vld [vmem:[#allocation15 + $0x180] sm:$0xff]
          %v4644 = vld [vmem:[#allocation15 + $0x188] sm:$0xff]
          %v4645 = vld [vmem:[#allocation15 + $0x190] sm:$0xff]
          %v4646 = vld [vmem:[#allocation15 + $0x198] sm:$0xff]
          %v4647 = vld [vmem:[#allocation15 + $0x1a0] sm:$0xff]
          %v4648 = vld [vmem:[#allocation15 + $0x1a8] sm:$0xff]
          %v4649 = vld [vmem:[#allocation15 + $0x1b0] sm:$0xff]
          %v4650 = vld [vmem:[#allocation15 + $0x1b8] sm:$0xff]
          %v4651 = vld [vmem:[#allocation15 + $0x1c0] sm:$0xff]
          %v4652 = vld [vmem:[#allocation15 + $0x1c8] sm:$0xff]
          %v4653 = vld [vmem:[#allocation15 + $0x1d0] sm:$0xff]
          %v4654 = vld [vmem:[#allocation15 + $0x1d8] sm:$0xff]
          %v4655 = vld [vmem:[#allocation15 + $0x1e0] sm:$0xff]
          %v4656 = vld [vmem:[#allocation15 + $0x1e8] sm:$0xff]
          %v4657 = vld [vmem:[#allocation15 + $0x1f0] sm:$0xff]
          %v4658 = vld [vmem:[#allocation15 + $0x1f8] sm:$0xff]
          %v4659 = vld [vmem:[#allocation17] sm:$0xf]
          %v4661 = vlaneseq
          %v4662 = vshrl.u32 %v4661, 7
          %v4663 = vsub.s32 0, %v4662
          %v4664 = vrot.slane %v4659, %v4663
          %v4665 = vlaneseq
          %v4666 = vshrl.u32 %v4665, 7
          %v4667 = vsub.s32 1, %v4666
          %v4668 = vrot.slane %v4659, %v4667
          %v4669 = vlaneseq
          %v4670 = vshrl.u32 %v4669, 7
          %v4671 = vsub.s32 2, %v4670
          %v4672 = vrot.slane %v4659, %v4671
          %v4673 = vlaneseq
          %v4674 = vshrl.u32 %v4673, 7
          %v4675 = vsub.s32 3, %v4674
          %v4676 = vrot.slane %v4659, %v4675
          %4681 = vmatprep.subr.mxu0 %v4596
          %4682 = vmatpush1.msra.mxu0 %v4595
          %4683 = vmatprep.subr.mxu0 %v4600
          %4684 = vmatpush1.msra.mxu0 %v4599
          %4685 = vmatprep.subr.mxu0 %v4604
          %4686 = vmatpush1.msra.mxu0 %v4603
          %4687 = vmatprep.subr.mxu0 %v4608
          %4688 = vmatpush1.msra.mxu0 %v4607
          %4689 = vmatprep.subr.mxu0 %v4612
          %4690 = vmatpush1.msra.mxu0 %v4611
          %4691 = vmatprep.subr.mxu0 %v4616
          %4692 = vmatpush1.msra.mxu0 %v4615
          %4693 = vmatprep.subr.mxu0 %v4620
          %4694 = vmatpush1.msra.mxu0 %v4619
          %4695 = vmatprep.subr.mxu0 %v4624
          %4696 = vmatpush1.msra.mxu0 %v4623
          %4697 = vmatprep.subr.mxu0 %v4628
          %4698 = vmatpush1.msra.mxu0 %v4627
          %4699 = vmatprep.subr.mxu0 %v4632
          %4700 = vmatpush1.msra.mxu0 %v4631
          %4701 = vmatprep.subr.mxu0 %v4636
          %4702 = vmatpush1.msra.mxu0 %v4635
          %4703 = vmatprep.subr.mxu0 %v4640
          %4704 = vmatpush1.msra.mxu0 %v4639
          %4705 = vmatprep.subr.mxu0 %v4644
          %4706 = vmatpush1.msra.mxu0 %v4643
          %4707 = vmatprep.subr.mxu0 %v4648
          %4708 = vmatpush1.msra.mxu0 %v4647
          %4709 = vmatprep.subr.mxu0 %v4652
          %4710 = vmatpush1.msra.mxu0 %v4651
          %4711 = vmatprep.subr.mxu0 %v4656
          %4712 = vmatpush1.msra.mxu0 %v4655
          %4713 = vmatprep.subr.mxu0 0.0
          %4714 = vmatpush1.msra.mxu0 0.0
          %4715 = vmatprep.subr.mxu0 0.0
          %4716 = vmatpush1.msra.mxu0 0.0
          %4717 = vmatprep.subr.mxu0 0.0
          %4718 = vmatpush1.msra.mxu0 0.0
          %4719 = vmatprep.subr.mxu0 0.0
          %4720 = vmatpush1.msra.mxu0 0.0
          %4721 = vmatprep.subr.mxu0 0.0
          %4722 = vmatpush1.msra.mxu0 0.0
          %4723 = vmatprep.subr.mxu0 0.0
          %4724 = vmatpush1.msra.mxu0 0.0
          %4725 = vmatprep.subr.mxu0 0.0
          %4726 = vmatpush1.msra.mxu0 0.0
          %4727 = vmatprep.subr.mxu0 0.0
          %4728 = vmatpush1.msra.mxu0 0.0
          %4729 = vmatprep.subr.mxu0 0.0
          %4730 = vmatpush1.msra.mxu0 0.0
          %4731 = vmatprep.subr.mxu0 0.0
          %4732 = vmatpush1.msra.mxu0 0.0
          %4733 = vmatprep.subr.mxu0 0.0
          %4734 = vmatpush1.msra.mxu0 0.0
          %4735 = vmatprep.subr.mxu0 0.0
          %4736 = vmatpush1.msra.mxu0 0.0
          %4737 = vmatprep.subr.mxu0 0.0
          %4738 = vmatpush1.msra.mxu0 0.0
          %4739 = vmatprep.subr.mxu0 0.0
          %4740 = vmatpush1.msra.mxu0 0.0
          %4741 = vmatprep.subr.mxu0 0.0
          %4742 = vmatpush1.msra.mxu0 0.0
          %4743 = vmatprep.subr.mxu0 0.0
          %4744 = vmatpush1.msra.mxu0 0.0
          %4745 = vmatprep.mubr.f32.mxu0 0.0
          %4746 = vmatmul.mubr.f32.gmra.mrb[0].mxu0 %v4592
          %v4747 = vpop.f32.mrb[0].mxu0
          %v4748 = vadd.f32 %v4664, %v4747
          %v4749 = vpop.f32.mrb[0].mxu0
          %v4750 = vadd.f32 %v4668, %v4749
          %4751 = vdwg.mxu0
          %4752 = vmatprep.subr.mxu0 %v4598
          %4753 = vmatpush1.msra.mxu0 %v4597
          %4754 = vmatprep.subr.mxu0 %v4602
          %4755 = vmatpush1.msra.mxu0 %v4601
          %4756 = vmatprep.subr.mxu0 %v4606
          %4757 = vmatpush1.msra.mxu0 %v4605
          %4758 = vmatprep.subr.mxu0 %v4610
          %4759 = vmatpush1.msra.mxu0 %v4609
          %4760 = vmatprep.subr.mxu0 %v4614
          %4761 = vmatpush1.msra.mxu0 %v4613
          %4762 = vmatprep.subr.mxu0 %v4618
          %4763 = vmatpush1.msra.mxu0 %v4617
          %4764 = vmatprep.subr.mxu0 %v4622
          %4765 = vmatpush1.msra.mxu0 %v4621
          %4766 = vmatprep.subr.mxu0 %v4626
          %4767 = vmatpush1.msra.mxu0 %v4625
          %4768 = vmatprep.subr.mxu0 %v4630
          %4769 = vmatpush1.msra.mxu0 %v4629
          %4770 = vmatprep.subr.mxu0 %v4634
          %4771 = vmatpush1.msra.mxu0 %v4633
          %4772 = vmatprep.subr.mxu0 %v4638
          %4773 = vmatpush1.msra.mxu0 %v4637
          %4774 = vmatprep.subr.mxu0 %v4642
          %4775 = vmatpush1.msra.mxu0 %v4641
          %4776 = vmatprep.subr.mxu0 %v4646
          %4777 = vmatpush1.msra.mxu0 %v4645
          %4778 = vmatprep.subr.mxu0 %v4650
          %4779 = vmatpush1.msra.mxu0 %v4649
          %4780 = vmatprep.subr.mxu0 %v4654
          %4781 = vmatpush1.msra.mxu0 %v4653
          %4782 = vmatprep.subr.mxu0 %v4658
          %4783 = vmatpush1.msra.mxu0 %v4657
          %4784 = vmatprep.subr.mxu0 0.0
          %4785 = vmatpush1.msra.mxu0 0.0
          %4786 = vmatprep.subr.mxu0 0.0
          %4787 = vmatpush1.msra.mxu0 0.0
          %4788 = vmatprep.subr.mxu0 0.0
          %4789 = vmatpush1.msra.mxu0 0.0
          %4790 = vmatprep.subr.mxu0 0.0
          %4791 = vmatpush1.msra.mxu0 0.0
          %4792 = vmatprep.subr.mxu0 0.0
          %4793 = vmatpush1.msra.mxu0 0.0
          %4794 = vmatprep.subr.mxu0 0.0
          %4795 = vmatpush1.msra.mxu0 0.0
          %4796 = vmatprep.subr.mxu0 0.0
          %4797 = vmatpush1.msra.mxu0 0.0
          %4798 = vmatprep.subr.mxu0 0.0
          %4799 = vmatpush1.msra.mxu0 0.0
          %4800 = vmatprep.subr.mxu0 0.0
          %4801 = vmatpush1.msra.mxu0 0.0
          %4802 = vmatprep.subr.mxu0 0.0
          %4803 = vmatpush1.msra.mxu0 0.0
          %4804 = vmatprep.subr.mxu0 0.0
          %4805 = vmatpush1.msra.mxu0 0.0
          %4806 = vmatprep.subr.mxu0 0.0
          %4807 = vmatpush1.msra.mxu0 0.0
          %4808 = vmatprep.subr.mxu0 0.0
          %4809 = vmatpush1.msra.mxu0 0.0
          %4810 = vmatprep.subr.mxu0 0.0
          %4811 = vmatpush1.msra.mxu0 0.0
          %4812 = vmatprep.subr.mxu0 0.0
          %4813 = vmatpush1.msra.mxu0 0.0
          %4814 = vmatprep.subr.mxu0 0.0
          %4815 = vmatpush1.msra.mxu0 0.0
          %4816 = vmatprep.mubr.f32.mxu0 0.0
          %4817 = vmatmul.mubr.f32.gmra.mrb[0].mxu0 %v4592
          %v4818 = vpop.f32.mrb[0].mxu0
          %v4819 = vadd.f32 %v4672, %v4818
          %v4820 = vpop.f32.mrb[0].mxu0
          %v4821 = vadd.f32 %v4676, %v4820
          %4822 = vdwg.mxu0
          %v4823 = vld [vmem:[#allocation18] sm:$0xf]
          %v4824 = vld [vmem:[#allocation20] sm:$0xf]
          %v4825 = vsel %vm4244, %v4748, 0.0
          %v4826 = vrot.slane %v4825, 4
          %v4827 = vadd.f32 %v4825, %v4826
          %v4828 = vrot.slane %v4827, 2
          %v4829 = vadd.f32 %v4827, %v4828
          %v4830 = vrot.slane %v4829, 1
          %v4831 = vadd.f32 %v4829, %v4830
          %v4832 = vsel %vm4244, %v4750, 0.0
          %v4833 = vrot.slane %v4832, 4
          %v4834 = vadd.f32 %v4832, %v4833
          %v4835 = vrot.slane %v4834, 2
          %v4836 = vadd.f32 %v4834, %v4835
          %v4837 = vrot.slane %v4836, 1
          %v4838 = vadd.f32 %v4836, %v4837
          %v4839 = vsel %vm4244, %v4819, 0.0
          %v4840 = vrot.slane %v4839, 4
          %v4841 = vadd.f32 %v4839, %v4840
          %v4842 = vrot.slane %v4841, 2
          %v4843 = vadd.f32 %v4841, %v4842
          %v4844 = vrot.slane %v4843, 1
          %v4845 = vadd.f32 %v4843, %v4844
          %v4846 = vsel %vm4244, %v4821, 0.0
          %v4847 = vrot.slane %v4846, 4
          %v4848 = vadd.f32 %v4846, %v4847
          %v4849 = vrot.slane %v4848, 2
          %v4850 = vadd.f32 %v4848, %v4849
          %v4851 = vrot.slane %v4850, 1
          %v4852 = vadd.f32 %v4850, %v4851
          %v4853 = vmul.f32 %v4831, %v4273
          %v4854 = vmul.f32 %v4838, %v4273
          %v4855 = vmul.f32 %v4845, %v4273
          %v4856 = vmul.f32 %v4852, %v4273
          %v4857 = vsub.f32 %v4748, %v4853
          %v4858 = vsub.f32 %v4750, %v4854
          %v4859 = vsub.f32 %v4819, %v4855
          %v4860 = vsub.f32 %v4821, %v4856
          %v4861 = vmul.f32 %v4857, %v4857
          %v4862 = vmul.f32 %v4858, %v4858
          %v4863 = vmul.f32 %v4859, %v4859
          %v4864 = vmul.f32 %v4860, %v4860
          %v4865 = vsel %vm4244, %v4861, 0.0
          %v4866 = vrot.slane %v4865, 4
          %v4867 = vadd.f32 %v4865, %v4866
          %v4868 = vrot.slane %v4867, 2
          %v4869 = vadd.f32 %v4867, %v4868
          %v4870 = vrot.slane %v4869, 1
          %v4871 = vadd.f32 %v4869, %v4870
          %v4872 = vsel %vm4244, %v4862, 0.0
          %v4873 = vrot.slane %v4872, 4
          %v4874 = vadd.f32 %v4872, %v4873
          %v4875 = vrot.slane %v4874, 2
          %v4876 = vadd.f32 %v4874, %v4875
          %v4877 = vrot.slane %v4876, 1
          %v4878 = vadd.f32 %v4876, %v4877
          %v4879 = vsel %vm4244, %v4863, 0.0
          %v4880 = vrot.slane %v4879, 4
          %v4881 = vadd.f32 %v4879, %v4880
          %v4882 = vrot.slane %v4881, 2
          %v4883 = vadd.f32 %v4881, %v4882
          %v4884 = vrot.slane %v4883, 1
          %v4885 = vadd.f32 %v4883, %v4884
          %v4886 = vsel %vm4244, %v4864, 0.0
          %v4887 = vrot.slane %v4886, 4
          %v4888 = vadd.f32 %v4886, %v4887
          %v4889 = vrot.slane %v4888, 2
          %v4890 = vadd.f32 %v4888, %v4889
          %v4891 = vrot.slane %v4890, 1
          %v4892 = vadd.f32 %v4890, %v4891
          %v4893 = vmul.f32 %v4871, %v4273
          %v4894 = vmul.f32 %v4878, %v4273
          %v4895 = vmul.f32 %v4885, %v4273
          %v4896 = vmul.f32 %v4892, %v4273
          %v4897 = vadd.f32 %v4893, 1e-05
          %v4898 = vadd.f32 %v4894, 1e-05
          %v4899 = vadd.f32 %v4895, 1e-05
          %v4900 = vadd.f32 %v4896, 1e-05
          %v4901 = vrsqrt.pop %v4897
          %v4902 = vrsqrt.pop %v4898
          %v4903 = vrsqrt.pop %v4899
          %v4904 = vrsqrt.pop %v4900
          %v4905 = vmul.f32 %v4857, %v4901
          %v4906 = vmul.f32 %v4858, %v4902
          %v4907 = vmul.f32 %v4859, %v4903
          %v4908 = vmul.f32 %v4860, %v4904
          %v4910 = vlaneseq
          %v4911 = vshrl.u32 %v4910, 7
          %v4912 = vsub.s32 0, %v4911
          %v4913 = vrot.slane %v4823, %v4912
          %v4914 = vlaneseq
          %v4915 = vshrl.u32 %v4914, 7
          %v4916 = vsub.s32 1, %v4915
          %v4917 = vrot.slane %v4823, %v4916
          %v4918 = vlaneseq
          %v4919 = vshrl.u32 %v4918, 7
          %v4920 = vsub.s32 2, %v4919
          %v4921 = vrot.slane %v4823, %v4920
          %v4922 = vlaneseq
          %v4923 = vshrl.u32 %v4922, 7
          %v4924 = vsub.s32 3, %v4923
          %v4925 = vrot.slane %v4823, %v4924
          %v4930 = vmul.f32 %v4905, %v4913
          %v4931 = vmul.f32 %v4906, %v4917
          %v4932 = vmul.f32 %v4907, %v4921
          %v4933 = vmul.f32 %v4908, %v4925
          %v4935 = vlaneseq
          %v4936 = vshrl.u32 %v4935, 7
          %v4937 = vsub.s32 0, %v4936
          %v4938 = vrot.slane %v4824, %v4937
          %v4939 = vlaneseq
          %v4940 = vshrl.u32 %v4939, 7
          %v4941 = vsub.s32 1, %v4940
          %v4942 = vrot.slane %v4824, %v4941
          %v4943 = vlaneseq
          %v4944 = vshrl.u32 %v4943, 7
          %v4945 = vsub.s32 2, %v4944
          %v4946 = vrot.slane %v4824, %v4945
          %v4947 = vlaneseq
          %v4948 = vshrl.u32 %v4947, 7
          %v4949 = vsub.s32 3, %v4948
          %v4950 = vrot.slane %v4824, %v4949
          %v4955 = vadd.f32 %v4930, %v4938
          %v4956 = vadd.f32 %v4931, %v4942
          %v4957 = vadd.f32 %v4932, %v4946
          %v4958 = vadd.f32 %v4933, %v4950
          %v4959 = vmax.f32 %v4955, 0.0
          %v4960 = vmax.f32 %v4956, 0.0
          %v4961 = vmax.f32 %v4957, 0.0
          %v4962 = vmax.f32 %v4958, 0.0
          %v4963 = vld [vmem:[#allocation21] sm:$0xff]
          %v4964 = vld [vmem:[#allocation21 + $0x8] sm:$0xff]
          %v4965 = vld [vmem:[#allocation21 + $0x10] sm:$0xff]
          %v4966 = vld [vmem:[#allocation21 + $0x18] sm:$0xff]
          %v4967 = vld [vmem:[#allocation21 + $0x20] sm:$0xff]
          %v4968 = vld [vmem:[#allocation21 + $0x28] sm:$0xff]
          %v4969 = vld [vmem:[#allocation21 + $0x30] sm:$0xff]
          %v4970 = vld [vmem:[#allocation21 + $0x38] sm:$0xff]
          %v4971 = vld [vmem:[#allocation21 + $0x40] sm:$0xff]
          %v4972 = vld [vmem:[#allocation21 + $0x48] sm:$0xff]
          %v4973 = vld [vmem:[#allocation21 + $0x50] sm:$0xff]
          %v4974 = vld [vmem:[#allocation21 + $0x58] sm:$0xff]
          %v4975 = vld [vmem:[#allocation21 + $0x60] sm:$0xff]
          %v4976 = vld [vmem:[#allocation21 + $0x68] sm:$0xff]
          %v4977 = vld [vmem:[#allocation21 + $0x70] sm:$0xff]
          %v4978 = vld [vmem:[#allocation21 + $0x78] sm:$0xff]
          %v4979 = vld [vmem:[#allocation21 + $0x80] sm:$0xff]
          %v4980 = vld [vmem:[#allocation21 + $0x88] sm:$0xff]
          %v4981 = vld [vmem:[#allocation21 + $0x90] sm:$0xff]
          %v4982 = vld [vmem:[#allocation21 + $0x98] sm:$0xff]
          %v4983 = vld [vmem:[#allocation21 + $0xa0] sm:$0xff]
          %v4984 = vld [vmem:[#allocation21 + $0xa8] sm:$0xff]
          %v4985 = vld [vmem:[#allocation21 + $0xb0] sm:$0xff]
          %v4986 = vld [vmem:[#allocation21 + $0xb8] sm:$0xff]
          %v4987 = vld [vmem:[#allocation21 + $0xc0] sm:$0xff]
          %v4988 = vld [vmem:[#allocation21 + $0xc8] sm:$0xff]
          %v4989 = vld [vmem:[#allocation21 + $0xd0] sm:$0xff]
          %v4990 = vld [vmem:[#allocation21 + $0xd8] sm:$0xff]
          %v4991 = vld [vmem:[#allocation21 + $0xe0] sm:$0xff]
          %v4992 = vld [vmem:[#allocation21 + $0xe8] sm:$0xff]
          %v4993 = vld [vmem:[#allocation21 + $0xf0] sm:$0xff]
          %v4994 = vld [vmem:[#allocation21 + $0xf8] sm:$0xff]
          %v4995 = vld [vmem:[#allocation21 + $0x100] sm:$0xff]
          %v4996 = vld [vmem:[#allocation21 + $0x108] sm:$0xff]
          %v4997 = vld [vmem:[#allocation21 + $0x110] sm:$0xff]
          %v4998 = vld [vmem:[#allocation21 + $0x118] sm:$0xff]
          %v4999 = vld [vmem:[#allocation21 + $0x120] sm:$0xff]
          %v5000 = vld [vmem:[#allocation21 + $0x128] sm:$0xff]
          %v5001 = vld [vmem:[#allocation21 + $0x130] sm:$0xff]
          %v5002 = vld [vmem:[#allocation21 + $0x138] sm:$0xff]
          %v5003 = vld [vmem:[#allocation21 + $0x140] sm:$0xff]
          %v5004 = vld [vmem:[#allocation21 + $0x148] sm:$0xff]
          %v5005 = vld [vmem:[#allocation21 + $0x150] sm:$0xff]
          %v5006 = vld [vmem:[#allocation21 + $0x158] sm:$0xff]
          %v5007 = vld [vmem:[#allocation21 + $0x160] sm:$0xff]
          %v5008 = vld [vmem:[#allocation21 + $0x168] sm:$0xff]
          %v5009 = vld [vmem:[#allocation21 + $0x170] sm:$0xff]
          %v5010 = vld [vmem:[#allocation21 + $0x178] sm:$0xff]
          %v5011 = vld [vmem:[#allocation21 + $0x180] sm:$0xff]
          %v5012 = vld [vmem:[#allocation21 + $0x188] sm:$0xff]
          %v5013 = vld [vmem:[#allocation21 + $0x190] sm:$0xff]
          %v5014 = vld [vmem:[#allocation21 + $0x198] sm:$0xff]
          %v5015 = vld [vmem:[#allocation21 + $0x1a0] sm:$0xff]
          %v5016 = vld [vmem:[#allocation21 + $0x1a8] sm:$0xff]
          %v5017 = vld [vmem:[#allocation21 + $0x1b0] sm:$0xff]
          %v5018 = vld [vmem:[#allocation21 + $0x1b8] sm:$0xff]
          %v5019 = vld [vmem:[#allocation21 + $0x1c0] sm:$0xff]
          %v5020 = vld [vmem:[#allocation21 + $0x1c8] sm:$0xff]
          %v5021 = vld [vmem:[#allocation21 + $0x1d0] sm:$0xff]
          %v5022 = vld [vmem:[#allocation21 + $0x1d8] sm:$0xff]
          %v5023 = vld [vmem:[#allocation21 + $0x1e0] sm:$0xff]
          %v5024 = vld [vmem:[#allocation21 + $0x1e8] sm:$0xff]
          %v5025 = vld [vmem:[#allocation21 + $0x1f0] sm:$0xff]
          %v5026 = vld [vmem:[#allocation21 + $0x1f8] sm:$0xff]
          %v5027 = vld [vmem:[#allocation23] sm:$0x1]
          %v5029 = vlaneseq
          %v5030 = vshrl.u32 %v5029, 7
          %v5031 = vsub.s32 0, %v5030
          %v5032 = vrot.slane %v5027, %v5031
          %5034 = vmatprep.subr.mxu0 0.0
          %5035 = vmatpush1.msra.mxu0 %v4963
          %5036 = vmatprep.subr.mxu0 0.0
          %5037 = vmatpush1.msra.mxu0 %v4964
          %5038 = vmatprep.subr.mxu0 0.0
          %5039 = vmatpush1.msra.mxu0 %v4965
          %5040 = vmatprep.subr.mxu0 0.0
          %5041 = vmatpush1.msra.mxu0 %v4966
          %5042 = vmatprep.subr.mxu0 0.0
          %5043 = vmatpush1.msra.mxu0 %v4967
          %5044 = vmatprep.subr.mxu0 0.0
          %5045 = vmatpush1.msra.mxu0 %v4968
          %5046 = vmatprep.subr.mxu0 0.0
          %5047 = vmatpush1.msra.mxu0 %v4969
          %5048 = vmatprep.subr.mxu0 0.0
          %5049 = vmatpush1.msra.mxu0 %v4970
          %5050 = vmatprep.subr.mxu0 0.0
          %5051 = vmatpush1.msra.mxu0 %v4971
          %5052 = vmatprep.subr.mxu0 0.0
          %5053 = vmatpush1.msra.mxu0 %v4972
          %5054 = vmatprep.subr.mxu0 0.0
          %5055 = vmatpush1.msra.mxu0 %v4973
          %5056 = vmatprep.subr.mxu0 0.0
          %5057 = vmatpush1.msra.mxu0 %v4974
          %5058 = vmatprep.subr.mxu0 0.0
          %5059 = vmatpush1.msra.mxu0 %v4975
          %5060 = vmatprep.subr.mxu0 0.0
          %5061 = vmatpush1.msra.mxu0 %v4976
          %5062 = vmatprep.subr.mxu0 0.0
          %5063 = vmatpush1.msra.mxu0 %v4977
          %5064 = vmatprep.subr.mxu0 0.0
          %5065 = vmatpush1.msra.mxu0 %v4978
          %5066 = vmatprep.subr.mxu0 0.0
          %5067 = vmatpush1.msra.mxu0 %v4979
          %5068 = vmatprep.subr.mxu0 0.0
          %5069 = vmatpush1.msra.mxu0 %v4980
          %5070 = vmatprep.subr.mxu0 0.0
          %5071 = vmatpush1.msra.mxu0 %v4981
          %5072 = vmatprep.subr.mxu0 0.0
          %5073 = vmatpush1.msra.mxu0 %v4982
          %5074 = vmatprep.subr.mxu0 0.0
          %5075 = vmatpush1.msra.mxu0 %v4983
          %5076 = vmatprep.subr.mxu0 0.0
          %5077 = vmatpush1.msra.mxu0 %v4984
          %5078 = vmatprep.subr.mxu0 0.0
          %5079 = vmatpush1.msra.mxu0 %v4985
          %5080 = vmatprep.subr.mxu0 0.0
          %5081 = vmatpush1.msra.mxu0 %v4986
          %5082 = vmatprep.subr.mxu0 0.0
          %5083 = vmatpush1.msra.mxu0 %v4987
          %5084 = vmatprep.subr.mxu0 0.0
          %5085 = vmatpush1.msra.mxu0 %v4988
          %5086 = vmatprep.subr.mxu0 0.0
          %5087 = vmatpush1.msra.mxu0 %v4989
          %5088 = vmatprep.subr.mxu0 0.0
          %5089 = vmatpush1.msra.mxu0 %v4990
          %5090 = vmatprep.subr.mxu0 0.0
          %5091 = vmatpush1.msra.mxu0 %v4991
          %5092 = vmatprep.subr.mxu0 0.0
          %5093 = vmatpush1.msra.mxu0 %v4992
          %5094 = vmatprep.subr.mxu0 0.0
          %5095 = vmatpush1.msra.mxu0 %v4993
          %5096 = vmatprep.subr.mxu0 0.0
          %5097 = vmatpush1.msra.mxu0 %v4994
          %5098 = vmatprep.mubr.f32.mxu0 %v4960
          %5099 = vmatmul.mubr.f32.gmra.mrb[0].mxu0 %v4959
          %v5100 = vpop.f32.mrb[0].mxu0
          %v5101 = vadd.f32 %v5032, %v5100
          %v5102 = vpop.f32.mrb[0].mxu0
          %5103 = vdwg.mxu0
          %5104 = vmatprep.subr.mxu0 0.0
          %5105 = vmatpush1.msra.mxu0 %v4995
          %5106 = vmatprep.subr.mxu0 0.0
          %5107 = vmatpush1.msra.mxu0 %v4996
          %5108 = vmatprep.subr.mxu0 0.0
          %5109 = vmatpush1.msra.mxu0 %v4997
          %5110 = vmatprep.subr.mxu0 0.0
          %5111 = vmatpush1.msra.mxu0 %v4998
          %5112 = vmatprep.subr.mxu0 0.0
          %5113 = vmatpush1.msra.mxu0 %v4999
          %5114 = vmatprep.subr.mxu0 0.0
          %5115 = vmatpush1.msra.mxu0 %v5000
          %5116 = vmatprep.subr.mxu0 0.0
          %5117 = vmatpush1.msra.mxu0 %v5001
          %5118 = vmatprep.subr.mxu0 0.0
          %5119 = vmatpush1.msra.mxu0 %v5002
          %5120 = vmatprep.subr.mxu0 0.0
          %5121 = vmatpush1.msra.mxu0 %v5003
          %5122 = vmatprep.subr.mxu0 0.0
          %5123 = vmatpush1.msra.mxu0 %v5004
          %5124 = vmatprep.subr.mxu0 0.0
          %5125 = vmatpush1.msra.mxu0 %v5005
          %5126 = vmatprep.subr.mxu0 0.0
          %5127 = vmatpush1.msra.mxu0 %v5006
          %5128 = vmatprep.subr.mxu0 0.0
          %5129 = vmatpush1.msra.mxu0 %v5007
          %5130 = vmatprep.subr.mxu0 0.0
          %5131 = vmatpush1.msra.mxu0 %v5008
          %5132 = vmatprep.subr.mxu0 0.0
          %5133 = vmatpush1.msra.mxu0 %v5009
          %5134 = vmatprep.subr.mxu0 0.0
          %5135 = vmatpush1.msra.mxu0 %v5010
          %5136 = vmatprep.subr.mxu0 0.0
          %5137 = vmatpush1.msra.mxu0 %v5011
          %5138 = vmatprep.subr.mxu0 0.0
          %5139 = vmatpush1.msra.mxu0 %v5012
          %5140 = vmatprep.subr.mxu0 0.0
          %5141 = vmatpush1.msra.mxu0 %v5013
          %5142 = vmatprep.subr.mxu0 0.0
          %5143 = vmatpush1.msra.mxu0 %v5014
          %5144 = vmatprep.subr.mxu0 0.0
          %5145 = vmatpush1.msra.mxu0 %v5015
          %5146 = vmatprep.subr.mxu0 0.0
          %5147 = vmatpush1.msra.mxu0 %v5016
          %5148 = vmatprep.subr.mxu0 0.0
          %5149 = vmatpush1.msra.mxu0 %v5017
          %5150 = vmatprep.subr.mxu0 0.0
          %5151 = vmatpush1.msra.mxu0 %v5018
          %5152 = vmatprep.subr.mxu0 0.0
          %5153 = vmatpush1.msra.mxu0 %v5019
          %5154 = vmatprep.subr.mxu0 0.0
          %5155 = vmatpush1.msra.mxu0 %v5020
          %5156 = vmatprep.subr.mxu0 0.0
          %5157 = vmatpush1.msra.mxu0 %v5021
          %5158 = vmatprep.subr.mxu0 0.0
          %5159 = vmatpush1.msra.mxu0 %v5022
          %5160 = vmatprep.subr.mxu0 0.0
          %5161 = vmatpush1.msra.mxu0 %v5023
          %5162 = vmatprep.subr.mxu0 0.0
          %5163 = vmatpush1.msra.mxu0 %v5024
          %5164 = vmatprep.subr.mxu0 0.0
          %5165 = vmatpush1.msra.mxu0 %v5025
          %5166 = vmatprep.subr.mxu0 0.0
          %5167 = vmatpush1.msra.mxu0 %v5026
          %5168 = vmatprep.mubr.f32.mxu0 %v4962
          %5169 = vmatmul.mubr.f32.gmra.mrb[0].mxu0 %v4961
          %v5170 = vpop.f32.mrb[0].mxu0
          %v5171 = vadd.f32 %v5101, %v5170
          %v5172 = vpop.f32.mrb[0].mxu0
          %5173 = vdwg.mxu0
          %5174 = vst [vmem:[%s670] sm:$0x3] %v5171
        $region132: #{tpu_custom_call.1} parent=71 // pred_fallthru
          _
        %s5175 = sand.u32 %s341, 1
        %s5176 = scalar_lea.sflag [#allocation5], %s5175
        %s5177 = sand.u32 %s341, 1
        %s5178 = smul.addr %s5177, 2
        %s5179 = scalar_lea.vmem [#allocation24], %s5178
        %s5180 = sand.u32 %s367, 1
        %s5181 = scalar_lea.sflag [#allocation26], %s5180
        %s5182 = sand.u32 %s367, 1
        %s5183 = smul.addr %s5182, 2
        %s5184 = scalar_lea.vmem [#allocation25], %s5183
        // Predicated region
        $region133: #{tpu_custom_call.1} parent=71 // pred_check
          %p5185 = pneg %p351
        $region134: #{tpu_custom_call.1} parent=71 // pred_check_branch
          %5187 = sbr.rel (%p5185) target = $region136
        $region135: #{tpu_custom_call.1} parent=71 // pred_region
          %s5189 = ssub.s32 32, 32
          %5190 = vsyncadd %s5176, %s5189
          %s5191 = smul.addr %s45, 32
          %s5192 = scalar_lea.hbm %s13, %s5191
          %s5194 = sshll.u32 %s5179, 4
          %s5195 = int_to_ptr.vmem [resolvable:$true] %s5194
          %5197 = dma.vmem_to_hbm [thread:$0]  %s5195, 32, %s5192, %s5176
        $region136: #{tpu_custom_call.1} parent=71 // pred_fallthru
          _
        // Predicated region
        $region137: #{tpu_custom_call.1} parent=71 // pred_check
          %p5198 = pneg %p377
        $region138: #{tpu_custom_call.1} parent=71 // pred_check_branch
          %5200 = sbr.rel (%p5198) target = $region140
        $region139: #{tpu_custom_call.1} parent=71 // pred_region
          %s5202 = ssub.s32 32, 32
          %5203 = vsyncadd %s5181, %s5202
          %s5204 = smul.addr %s45, 32
          %s5205 = scalar_lea.hbm %s14, %s5204
          %s5207 = sshll.u32 %s5184, 4
          %s5208 = int_to_ptr.vmem [resolvable:$true] %s5207
          %5210 = dma.vmem_to_hbm [thread:$0]  %s5208, 32, %s5205, %s5181
        $region140: #{tpu_custom_call.1} parent=71 // pred_fallthru
          _
      $region72: #{tpu_custom_call.1} parent=5 // pred_fallthru
        _
      %p5211 = scmp.le.s32.totalorder 2, %s36
      // Predicated region
      $region141: #{tpu_custom_call.1} parent=5 // pred_check
        %p5212 = pneg %p5211
      $region142: #{tpu_custom_call.1} parent=5 // pred_check_branch
        %5214 = sbr.rel (%p5212) target = $region144
      $region143: #{tpu_custom_call.1} parent=5 // pred_region
        %s5215 = ssub.s32 %s36, 2
        // Predicated region
        $region145: #{tpu_custom_call.1} parent=143 // pred_check
          %p5216 = pneg %p357
        $region146: #{tpu_custom_call.1} parent=143 // pred_check_branch
          %5218 = sbr.rel (%p5216) target = $region148
        $region147: #{tpu_custom_call.1} parent=143 // pred_region
          %s5219 = sand.u32 %s342, 1
          %s5220 = scalar_lea.sflag [#allocation5], %s5219
          %s5221 = sand.u32 %s342, 1
          %s5222 = smul.addr %s5221, 2
          %s5223 = scalar_lea.vmem [#allocation24], %s5222
          %5224 = dma.done %s5220, 32
        $region148: #{tpu_custom_call.1} parent=143 // pred_fallthru
          _
        // Predicated region
        $region149: #{tpu_custom_call.1} parent=143 // pred_check
          %p5225 = pneg %p383
        $region150: #{tpu_custom_call.1} parent=143 // pred_check_branch
          %5227 = sbr.rel (%p5225) target = $region152
        $region151: #{tpu_custom_call.1} parent=143 // pred_region
          %s5228 = sand.u32 %s368, 1
          %s5229 = scalar_lea.sflag [#allocation26], %s5228
          %s5230 = sand.u32 %s368, 1
          %s5231 = smul.addr %s5230, 2
          %s5232 = scalar_lea.vmem [#allocation25], %s5231
          %5233 = dma.done %s5229, 32
        $region152: #{tpu_custom_call.1} parent=143 // pred_fallthru
          _
      $region144: #{tpu_custom_call.1} parent=5 // pred_fallthru
        _
    $region6: #{tpu_custom_call.1} parent=1 // loop_footer
      %s40 = sadd.s32 1, %s36
    $region7: #{tpu_custom_call.1} parent=1 // loop_footer_branch
      %35 = sbr.rel target = $region3
    $region8: #{tpu_custom_call.1} parent=1 // loop_exit
      _
    %5234 = vsyncpa [#allocation4], 1
    %s5235 = scalar_lea.sflag [#allocation4], 1
    %5236 = vsyncpa %s5235, 1
    %5237 = vsyncpa [#allocation7], 1
    %5238 = vsyncpa [#allocation10], 1
    %5239 = vsyncpa [#allocation13], 1
    %5240 = vsyncpa [#allocation16], 1
    %5241 = vsyncpa [#allocation19], 1
    %5242 = vsyncpa [#allocation22], 1
    %5243 = vsyncpa [#allocation5], 1
    %s5244 = scalar_lea.sflag [#allocation5], 1
    %5245 = vsyncpa %s5244, 1
    %5246 = vsyncpa [#allocation26], 1
    %s5247 = scalar_lea.sflag [#allocation26], 1
    %5248 = vsyncpa %s5247, 1

</llo_original>
